<compile_context>
chip_gen: v7x
topology: tpu7x:2x2x1
jax: 0.10.0
libtpu: 0.0.40
codegen_flags: <defaults>
</compile_context>

<pallas_src>
import functools

import jax
import jax.numpy as jnp
from jax import lax
from jax.experimental import pallas as pl
from jax.experimental.pallas import tpu as pltpu


# ---------------------------------------------------------------------------
# Fused Pallas kernel
# ---------------------------------------------------------------------------

def _fused_attention_kernel(x_ref, wqkv_ref, wproj_ref, bproj_ref,
                            o_ref, w_ref, *, nc, num_heads):
    """One batch element per grid step; all heads batched inside the kernel.

    x_ref:     (1, N, C)    input tokens (f32)
    wqkv_ref:  (C, 3C)      qkv weight, transposed, bf16, qk-scale folded into q cols
    wproj_ref: (C, C)       proj weight, transposed, bf16
    bproj_ref: (1, C)       proj bias (f32)
    o_ref:     (1, N, C)    attention output (after output projection), f32
    w_ref:     (1, H, N, N) split-softmax attention weights, f32
    """
    N, C = x_ref.shape[1], x_ref.shape[2]
    H = num_heads
    D = C // H

    # ---- fused qkv projection: bf16 MXU operands, f32 accumulation ----
    x = x_ref[0].astype(jnp.bfloat16)                               # (N, C)
    qkv = jnp.dot(x, wqkv_ref[...],
                  preferred_element_type=jnp.float32)               # (N, 3C) f32
    qkv_b = qkv.astype(jnp.bfloat16)                                 # single cast

    # per-head views: (N, H, D); no per-head Python loop, no explicit k.T
    q3 = qkv_b[:, 0 * C:1 * C].reshape(N, H, D)                      # scale folded in
    k3 = qkv_b[:, 1 * C:2 * C].reshape(N, H, D)
    v3 = qkv_b[:, 2 * C:3 * C].reshape(N, H, D)

    # batched scores for all heads: contract D, batch over H
    s = jnp.einsum("nhd,mhd->hnm", q3, k3,
                   preferred_element_type=jnp.float32)               # (H, N, N)

    # ---- split softmax over column groups [0, nc) and [nc, N) ----
    # single exp pass, head-invariant masks computed once.
    if 0 < nc < N:
        col = lax.broadcasted_iota(jnp.int32, (1, N, N), 2)
        is_cls = col < nc
        m_cls = jnp.max(jnp.where(is_cls, s, -jnp.inf), axis=-1, keepdims=True)
        m_pat = jnp.max(jnp.where(is_cls, -jnp.inf, s), axis=-1, keepdims=True)
        m = jnp.where(is_cls, m_cls, m_pat)
        e = jnp.exp(s - m)
        d_cls = jnp.sum(jnp.where(is_cls, e, 0.0), axis=-1, keepdims=True)
        d_pat = jnp.sum(jnp.where(is_cls, 0.0, e), axis=-1, keepdims=True)
        denom = jnp.where(is_cls, d_cls, d_pat)
    else:
        # degenerate split (nc <= 0 or nc >= N): one column group is empty,
        # torch.split/softmax/cat semantics reduce to a plain softmax.
        m = jnp.max(s, axis=-1, keepdims=True)
        e = jnp.exp(s - m)
        denom = jnp.sum(e, axis=-1, keepdims=True)

    attn = e / denom                                                 # exact softmax

    # single store of all heads' weights (no per-head masked stores)
    w_ref[0] = attn

    # ---- weighted values, all heads batched; result lands directly in
    #      the merged (N, H, D) layout (no concatenate) ----
    out = jnp.einsum("hnm,mhd->nhd", attn.astype(jnp.bfloat16), v3,
                     preferred_element_type=jnp.float32)             # (N, H, D)
    merged = out.reshape(N, C)

    # ---- output projection (+ bias), lane-dense (N, C) store ----
    o_ref[0] = (jnp.dot(merged.astype(jnp.bfloat16), wproj_ref[...],
                        preferred_element_type=jnp.float32)
                + bproj_ref[...])


# ---------------------------------------------------------------------------
# Parameter preparation (one-time weight transform) and wrapper
# ---------------------------------------------------------------------------

def prepare_params(w_qkv, w_proj, b_proj, *, dim, num_heads, qk_scale=None):
    """nn.Linear weights are (out, in); store transposes for y = x @ W^T,
    fold the qk scale into the q-columns of the qkv weight, and pre-cast the
    matmul weights to bf16 (one-time transform, not a per-call wrapper op)."""
    D = dim // num_heads
    scale = float(qk_scale) if qk_scale is not None else D ** (-0.5)
    w_qkv_t = jnp.asarray(w_qkv, jnp.float32).T                      # (C, 3C)
    w_qkv_t = w_qkv_t.at[:, :dim].multiply(scale)                    # fold scale into q
    return {
        "w_qkv_t": w_qkv_t.astype(jnp.bfloat16),
        "w_proj_t": jnp.asarray(w_proj, jnp.float32).T.astype(jnp.bfloat16),
        "b_proj": jnp.asarray(b_proj, jnp.float32).reshape(1, dim),
    }


def attention_forward(x, params, *, num_heads, num_classes):
    """Pallas equivalent of Attention.forward. x: (B, N, C) -> (out, weights)."""
    B, N, C = x.shape
    H = num_heads

    kernel = functools.partial(_fused_attention_kernel,
                               nc=num_classes, num_heads=H)

    out, weights = pl.pallas_call(
        kernel,
        grid=(B,),
        in_specs=[
            pl.BlockSpec((1, N, C), lambda b: (b, 0, 0)),            # x
            pl.BlockSpec((C, 3 * C), lambda b: (0, 0)),              # w_qkv_t (bf16)
            pl.BlockSpec((C, C), lambda b: (0, 0)),                  # w_proj_t (bf16)
            pl.BlockSpec((1, C), lambda b: (0, 0)),                  # b_proj
        ],
        out_specs=(
            pl.BlockSpec((1, N, C), lambda b: (b, 0, 0)),            # out
            pl.BlockSpec((1, H, N, N), lambda b: (b, 0, 0, 0)),      # weights
        ),
        out_shape=(jax.ShapeDtypeStruct((B, N, C), jnp.float32),
                   jax.ShapeDtypeStruct((B, H, N, N), jnp.float32)),
        compiler_params=pltpu.CompilerParams(
            dimension_semantics=("parallel",)),                      # v7x: B -> 2 TCs
    )(x, params["w_qkv_t"], params["w_proj_t"], params["b_proj"])

    # attn_drop / proj_drop are p=0.0 -> identity
    return out, weights


# ---------------------------------------------------------------------------
# Pure-JAX f32 reference (mirrors the PyTorch module, for sanity check only)
# ---------------------------------------------------------------------------

def attention_reference(x, w_qkv, w_proj, b_proj, *, num_heads, num_classes,
                        qk_scale=None):
    B, N, C = x.shape
    H = num_heads
    D = C // H
    scale = qk_scale if qk_scale is not None else D ** (-0.5)
    qkv = x @ w_qkv.T                                                # (B, N, 3C)
    qkv = qkv.reshape(B, N, 3, H, D).transpose(2, 0, 3, 1, 4)
    q, k, v = qkv[0], qkv[1], qkv[2]
    s = jnp.einsum("bhnd,bhmd->bhnm", q, k) * scale
    a_cls = jax.nn.softmax(s[..., :num_classes], axis=-1)
    a_pat = jax.nn.softmax(s[..., num_classes:], axis=-1)
    attn = jnp.concatenate([a_cls, a_pat], axis=-1)
    out = jnp.einsum("bhnm,bhmd->bhnd", attn, v)
    out = out.transpose(0, 2, 1, 3).reshape(B, N, C)
    out = out @ w_proj.T + b_proj
    return out, attn


# ---------------------------------------------------------------------------
# Main
# ---------------------------------------------------------------------------

if __name__ == "__main__":
    # Small shapes consistent with the module: dim divisible by num_heads=6,
    # N > num_classes=20.
    B, N, C = 2, 32, 48
    NUM_HEADS = 6
    NUM_CLASSES = 20

    key = jax.random.PRNGKey(0)
    k_x, k_qkv, k_proj, k_bias = jax.random.split(key, 4)

    x = jax.random.normal(k_x, (B, N, C), dtype=jnp.float32)

    # nn.Linear-style raw parameters (weight shape = (out_features, in_features))
    w_qkv = jax.random.normal(k_qkv, (3 * C, C), jnp.float32) * 0.02
    w_proj = jax.random.normal(k_proj, (C, C), jnp.float32) * 0.02
    b_proj = jax.random.normal(k_bias, (C,), jnp.float32) * 0.02

    params = prepare_params(w_qkv, w_proj, b_proj, dim=C, num_heads=NUM_HEADS)

    out, weights = attention_forward(
        x, params, num_heads=NUM_HEADS, num_classes=NUM_CLASSES)
    jax.block_until_ready((out, weights))

    assert out.shape == (B, N, C)
    assert weights.shape == (B, NUM_HEADS, N, N)

    # sanity check vs the pure-JAX f32 reference (loose tol: bf16 MXU operands)
    ref_out, ref_w = attention_reference(
        x, w_qkv, w_proj, b_proj, num_heads=NUM_HEADS, num_classes=NUM_CLASSES)
    assert bool(jnp.allclose(out, ref_out, atol=2e-2, rtol=2e-2)), \
        float(jnp.max(jnp.abs(out - ref_out)))
    assert bool(jnp.allclose(weights, ref_w, atol=2e-2, rtol=2e-2)), \
        float(jnp.max(jnp.abs(weights - ref_w)))
    # exact softmax normalizer -> each split group sums to 1
    assert bool(jnp.allclose(weights[..., :NUM_CLASSES].sum(-1), 1.0, atol=1e-5))
    assert bool(jnp.allclose(weights[..., NUM_CLASSES:].sum(-1), 1.0, atol=1e-5))

    print("KERNEL_OK")
</pallas_src>

<mosaic_0001>
module attributes {stable_mosaic.version = 11 : i64} {
  func.func @_fused_attention_kernel(%arg0: i32, %arg1: memref<1x32x48xf32, #tpu.memory_space<vmem>>, %arg2: memref<48x144xbf16, #tpu.memory_space<vmem>>, %arg3: memref<48x48xbf16, #tpu.memory_space<vmem>>, %arg4: memref<1x48xf32, #tpu.memory_space<vmem>>, %arg5: memref<1x32x48xf32, #tpu.memory_space<vmem>>, %arg6: memref<1x6x32x32xf32, #tpu.memory_space<vmem>>) attributes {dimension_semantics = [#tpu.dimension_semantics<parallel>], iteration_bounds = array<i64: 2>, scalar_prefetch = 0 : i64, scratch_operands = 0 : i64, tpu.core_type = #tpu.core_type<tc>, window_params = [{transform_indices = @transform_0, window_bounds = array<i64: 1, 32, 48>}, {pipeline_mode = #tpu.pipeline_mode<synchronous>, transform_indices = @transform_1, window_bounds = array<i64: 48, 144>}, {pipeline_mode = #tpu.pipeline_mode<synchronous>, transform_indices = @transform_2, window_bounds = array<i64: 48, 48>}, {pipeline_mode = #tpu.pipeline_mode<synchronous>, transform_indices = @transform_3, window_bounds = array<i64: 1, 48>}, {transform_indices = @transform_4, window_bounds = array<i64: 1, 32, 48>}, {transform_indices = @transform_5, window_bounds = array<i64: 1, 6, 32, 32>}]} {
    %c0 = arith.constant 0 : index
    %c0_0 = arith.constant 0 : index
    %c0_1 = arith.constant 0 : index
    %0 = vector.load %arg1[%c0, %c0_0, %c0_1] : memref<1x32x48xf32, #tpu.memory_space<vmem>>, vector<1x32x48xf32>
    %1 = vector.shape_cast %0 : vector<1x32x48xf32> to vector<32x48xf32>
    %2 = arith.truncf %1 : vector<32x48xf32> to vector<32x48xbf16>
    %c0_2 = arith.constant 0 : index
    %c0_3 = arith.constant 0 : index
    %3 = vector.load %arg2[%c0_2, %c0_3] : memref<48x144xbf16, #tpu.memory_space<vmem>>, vector<48x144xbf16>
    %cst = arith.constant dense<0.000000e+00> : vector<32x144xf32>
    %4 = tpu.matmul %2, %3, %cst {dimension_numbers = #tpu.dot_dimension_numbers<[1], [0], [0], [1], [0, 0, 1, 1], [], []>} : vector<32x48xbf16>, vector<48x144xbf16>, vector<32x144xf32> -> vector<32x144xf32>
    %5 = arith.truncf %4 : vector<32x144xf32> to vector<32x144xbf16>
    %6 = vector.extract_strided_slice %5 {offsets = [0, 0], sizes = [32, 48], strides = [1, 1]} : vector<32x144xbf16> to vector<32x48xbf16>
    %7 = vector.shape_cast %6 : vector<32x48xbf16> to vector<32x6x8xbf16>
    %8 = vector.extract_strided_slice %5 {offsets = [0, 48], sizes = [32, 48], strides = [1, 1]} : vector<32x144xbf16> to vector<32x48xbf16>
    %9 = vector.shape_cast %8 : vector<32x48xbf16> to vector<32x6x8xbf16>
    %10 = vector.extract_strided_slice %5 {offsets = [0, 96], sizes = [32, 48], strides = [1, 1]} : vector<32x144xbf16> to vector<32x48xbf16>
    %11 = vector.shape_cast %10 : vector<32x48xbf16> to vector<32x6x8xbf16>
    "tpu.trace_start"() <{level = 10 : i32, message = "nhd,mhd->hnm"}> : () -> ()
    %cst_4 = arith.constant dense<0.000000e+00> : vector<6x32x32xf32>
    %12 = tpu.matmul %7, %9, %cst_4 {dimension_numbers = #tpu.dot_dimension_numbers<[2], [2], [0], [0], [0, 1, 0, 0, 1, 0], [1], [1]>} : vector<32x6x8xbf16>, vector<32x6x8xbf16>, vector<6x32x32xf32> -> vector<6x32x32xf32>
    "tpu.trace_stop"() : () -> ()
    %13 = tpu.iota {dimensions = array<i32: 2>} : vector<1x32x32xi32>
    %c20_i32 = arith.constant 20 : i32
    %14 = vector.broadcast %c20_i32 : i32 to vector<1x32x32xi32>
    %15 = arith.cmpi slt, %13, %14 : vector<1x32x32xi32>
    %cst_5 = arith.constant 0xFF800000 : f32
    %16 = vector.shape_cast %15 : vector<1x32x32xi1> to vector<1x32x32xi1>
    %17 = vector.broadcast %16 : vector<1x32x32xi1> to vector<6x32x32xi1>
    %18 = vector.broadcast %cst_5 : f32 to vector<6x32x32xf32>
    %19 = arith.select %17, %12, %18 : vector<6x32x32xi1>, vector<6x32x32xf32>
    %cst_6 = arith.constant dense<0xFF800000> : vector<6x32xf32>
    %20 = vector.multi_reduction <maximumf>, %19, %cst_6 [2] : vector<6x32x32xf32> to vector<6x32xf32>
    %21 = vector.shape_cast %20 : vector<6x32xf32> to vector<6x32x1xf32>
    %cst_7 = arith.constant 0xFF800000 : f32
    %22 = vector.shape_cast %15 : vector<1x32x32xi1> to vector<1x32x32xi1>
    %23 = vector.broadcast %22 : vector<1x32x32xi1> to vector<6x32x32xi1>
    %24 = vector.broadcast %cst_7 : f32 to vector<6x32x32xf32>
    %25 = arith.select %23, %24, %12 : vector<6x32x32xi1>, vector<6x32x32xf32>
    %cst_8 = arith.constant dense<0xFF800000> : vector<6x32xf32>
    %26 = vector.multi_reduction <maximumf>, %25, %cst_8 [2] : vector<6x32x32xf32> to vector<6x32xf32>
    %27 = vector.shape_cast %26 : vector<6x32xf32> to vector<6x32x1xf32>
    %28 = vector.shape_cast %15 : vector<1x32x32xi1> to vector<1x32x32xi1>
    %29 = vector.broadcast %28 : vector<1x32x32xi1> to vector<6x32x32xi1>
    %30 = vector.shape_cast %21 : vector<6x32x1xf32> to vector<6x32x1xf32>
    %31 = vector.broadcast %30 : vector<6x32x1xf32> to vector<6x32x32xf32>
    %32 = vector.shape_cast %27 : vector<6x32x1xf32> to vector<6x32x1xf32>
    %33 = vector.broadcast %32 : vector<6x32x1xf32> to vector<6x32x32xf32>
    %34 = arith.select %29, %31, %33 : vector<6x32x32xi1>, vector<6x32x32xf32>
    %35 = arith.subf %12, %34 : vector<6x32x32xf32>
    %36 = math.exp %35 : vector<6x32x32xf32>
    %cst_9 = arith.constant 0.000000e+00 : f32
    %37 = vector.shape_cast %15 : vector<1x32x32xi1> to vector<1x32x32xi1>
    %38 = vector.broadcast %37 : vector<1x32x32xi1> to vector<6x32x32xi1>
    %39 = vector.broadcast %cst_9 : f32 to vector<6x32x32xf32>
    %40 = arith.select %38, %36, %39 : vector<6x32x32xi1>, vector<6x32x32xf32>
    %cst_10 = arith.constant dense<0.000000e+00> : vector<6x32xf32>
    %41 = vector.multi_reduction <add>, %40, %cst_10 [2] : vector<6x32x32xf32> to vector<6x32xf32>
    %42 = vector.shape_cast %41 : vector<6x32xf32> to vector<6x32x1xf32>
    %cst_11 = arith.constant 0.000000e+00 : f32
    %43 = vector.shape_cast %15 : vector<1x32x32xi1> to vector<1x32x32xi1>
    %44 = vector.broadcast %43 : vector<1x32x32xi1> to vector<6x32x32xi1>
    %45 = vector.broadcast %cst_11 : f32 to vector<6x32x32xf32>
    %46 = arith.select %44, %45, %36 : vector<6x32x32xi1>, vector<6x32x32xf32>
    %cst_12 = arith.constant dense<0.000000e+00> : vector<6x32xf32>
    %47 = vector.multi_reduction <add>, %46, %cst_12 [2] : vector<6x32x32xf32> to vector<6x32xf32>
    %48 = vector.shape_cast %47 : vector<6x32xf32> to vector<6x32x1xf32>
    %49 = vector.shape_cast %15 : vector<1x32x32xi1> to vector<1x32x32xi1>
    %50 = vector.broadcast %49 : vector<1x32x32xi1> to vector<6x32x32xi1>
    %51 = vector.shape_cast %42 : vector<6x32x1xf32> to vector<6x32x1xf32>
    %52 = vector.broadcast %51 : vector<6x32x1xf32> to vector<6x32x32xf32>
    %53 = vector.shape_cast %48 : vector<6x32x1xf32> to vector<6x32x1xf32>
    %54 = vector.broadcast %53 : vector<6x32x1xf32> to vector<6x32x32xf32>
    %55 = arith.select %50, %52, %54 : vector<6x32x32xi1>, vector<6x32x32xf32>
    %56 = arith.divf %36, %55 : vector<6x32x32xf32>
    %c0_13 = arith.constant 0 : index
    %c0_14 = arith.constant 0 : index
    %c0_15 = arith.constant 0 : index
    %c0_16 = arith.constant 0 : index
    %57 = vector.load %arg6[%c0_13, %c0_14, %c0_15, %c0_16] : memref<1x6x32x32xf32, #tpu.memory_space<vmem>>, vector<1x6x32x32xf32>
    %58 = vector.shape_cast %57 : vector<1x6x32x32xf32> to vector<6x32x32xf32>
    %59 = vector.shape_cast %56 : vector<6x32x32xf32> to vector<1x6x32x32xf32>
    tpu.vector_store %arg6[%c0_13, %c0_14, %c0_15, %c0_16], %59 {strides = array<i32>} : memref<1x6x32x32xf32, #tpu.memory_space<vmem>>, vector<1x6x32x32xf32>,
    %60 = arith.truncf %56 : vector<6x32x32xf32> to vector<6x32x32xbf16>
    "tpu.trace_start"() <{level = 10 : i32, message = "hnm,mhd->nhd"}> : () -> ()
    %cst_17 = arith.constant dense<0.000000e+00> : vector<6x8x32xf32>
    %61 = tpu.matmul %11, %60, %cst_17 {dimension_numbers = #tpu.dot_dimension_numbers<[0], [2], [2], [1], [0, 1, 0, 2, 1, 1], [1], [0]>} : vector<32x6x8xbf16>, vector<6x32x32xbf16>, vector<6x8x32xf32> -> vector<6x8x32xf32>
    %62 = tpu.transpose %61, [2, 0, 1] : vector<6x8x32xf32> -> vector<32x6x8xf32>
    "tpu.trace_stop"() : () -> ()
    %63 = vector.shape_cast %62 : vector<32x6x8xf32> to vector<32x48xf32>
    %64 = arith.truncf %63 : vector<32x48xf32> to vector<32x48xbf16>
    %c0_18 = arith.constant 0 : index
    %c0_19 = arith.constant 0 : index
    %65 = vector.load %arg3[%c0_18, %c0_19] : memref<48x48xbf16, #tpu.memory_space<vmem>>, vector<48x48xbf16>
    %cst_20 = arith.constant dense<0.000000e+00> : vector<32x48xf32>
    %66 = tpu.matmul %64, %65, %cst_20 {dimension_numbers = #tpu.dot_dimension_numbers<[1], [0], [0], [1], [0, 0, 1, 1], [], []>} : vector<32x48xbf16>, vector<48x48xbf16>, vector<32x48xf32> -> vector<32x48xf32>
    %c0_21 = arith.constant 0 : index
    %c0_22 = arith.constant 0 : index
    %67 = vector.load %arg4[%c0_21, %c0_22] : memref<1x48xf32, #tpu.memory_space<vmem>>, vector<1x48xf32>
    %68 = vector.broadcast %67 : vector<1x48xf32> to vector<32x48xf32>
    %69 = arith.addf %66, %68 : vector<32x48xf32>
    %c0_23 = arith.constant 0 : index
    %c0_24 = arith.constant 0 : index
    %c0_25 = arith.constant 0 : index
    %70 = vector.load %arg5[%c0_23, %c0_24, %c0_25] : memref<1x32x48xf32, #tpu.memory_space<vmem>>, vector<1x32x48xf32>
    %71 = vector.shape_cast %70 : vector<1x32x48xf32> to vector<32x48xf32>
    %72 = vector.shape_cast %69 : vector<32x48xf32> to vector<1x32x48xf32>
    tpu.vector_store %arg5[%c0_23, %c0_24, %c0_25], %72 {strides = array<i32>} : memref<1x32x48xf32, #tpu.memory_space<vmem>>, vector<1x32x48xf32>,
    return
  }
  func.func @transform_0(%arg0: i32) -> (i32, i32, i32) {
    %c0_i32 = arith.constant 0 : i32
    %c0_i32_0 = arith.constant 0 : i32
    %c0_i32_1 = arith.constant 0 : i32
    return %arg0, %c0_i32, %c0_i32_0 : i32, i32, i32
  }
  func.func @transform_1(%arg0: i32) -> (i32, i32) {
    %c0_i32 = arith.constant 0 : i32
    %c0_i32_0 = arith.constant 0 : i32
    %c0_i32_1 = arith.constant 0 : i32
    return %c0_i32, %c0_i32_0 : i32, i32
  }
  func.func @transform_2(%arg0: i32) -> (i32, i32) {
    %c0_i32 = arith.constant 0 : i32
    %c0_i32_0 = arith.constant 0 : i32
    %c0_i32_1 = arith.constant 0 : i32
    return %c0_i32, %c0_i32_0 : i32, i32
  }
  func.func @transform_3(%arg0: i32) -> (i32, i32) {
    %c0_i32 = arith.constant 0 : i32
    %c0_i32_0 = arith.constant 0 : i32
    %c0_i32_1 = arith.constant 0 : i32
    return %c0_i32, %c0_i32_0 : i32, i32
  }
  func.func @transform_4(%arg0: i32) -> (i32, i32, i32) {
    %c0_i32 = arith.constant 0 : i32
    %c0_i32_0 = arith.constant 0 : i32
    %c0_i32_1 = arith.constant 0 : i32
    return %arg0, %c0_i32, %c0_i32_0 : i32, i32, i32
  }
  func.func @transform_5(%arg0: i32) -> (i32, i32, i32, i32) {
    %c0_i32 = arith.constant 0 : i32
    %c0_i32_0 = arith.constant 0 : i32
    %c0_i32_1 = arith.constant 0 : i32
    %c0_i32_2 = arith.constant 0 : i32
    return %arg0, %c0_i32, %c0_i32_0, %c0_i32_1 : i32, i32, i32, i32
  }
}

</mosaic_0001>

<llo_original>
// kernel: tpu_custom_call.1
$region0: #{tpu_custom_call.1}
  #allocation0 [shape = 'u32[]', space=smem, size = 0x4, offset = 0x4, fixed_abs, tag = 'smem constant byte address 0x4 - core index']
  #allocation1 [shape = 'u32[144,128]{1,0:T(1,128)}', space=vmem, size = 0x12000, scoped, tag = 'internal scratch']
  %s0 = inlined_call_operand.hbm [shape: f32[2,32,48], index: 0, kind: input, shape index: {}]
  %s1 = inlined_call_operand.hbm [shape: bf16[48,144], index: 1, kind: input, shape index: {}]
  %s2 = inlined_call_operand.hbm [shape: bf16[48,48], index: 2, kind: input, shape index: {}]
  %s3 = inlined_call_operand.vmem [shape: f32[1,48], index: 3, kind: input, shape index: {}]
  %s4 = inlined_call_operand.hbm [shape: f32[2,32,48], index: 4, kind: output, shape index: {0}]
  %s5 = inlined_call_operand.hbm [shape: f32[2,6,32,32], index: 5, kind: output, shape index: {1}]
  %6 = xla_tuple %s4, %s5
  %s7 = sld [smem:[#allocation0]]
  $region69: #{tpu_custom_call.1} parent=0
    _
  %s9 = ssub.s32 1, %s7
  %s10 = scalar_select 0, %s9, %s7
  $region1: #{tpu_custom_call.1} parent=0
    #allocation2 [shape = 'u8[32768]{0}', space=vmem, size = 0x8000, scoped, tag = 'input window, operand 0']
    #allocation3 [shape = 's32[2]{0}', space=sflag, size = 0x8, scoped, tag = 'scoped memory for tpu_custom_call.1']
    #allocation4 [shape = 's32[2]{0}', space=sflag, size = 0x8, scoped, tag = 'scoped memory for tpu_custom_call.1']
    #allocation5 [shape = 'u8[24576]{0}', space=vmem, size = 0x6000, scoped, tag = 'input window, operand 1, single buffered']
    #allocation6 [shape = 's32[1]{0}', space=sflag, size = 0x4, scoped, tag = 'scoped memory for tpu_custom_call.1']
    #allocation7 [shape = 'u8[12288]{0}', space=vmem, size = 0x3000, scoped, tag = 'input window, operand 2, single buffered']
    #allocation8 [shape = 'u8[32768]{0}', space=vmem, size = 0x8000, scoped, tag = 'output window, operand 0']
    #allocation9 [shape = 'u8[196608]{0}', space=vmem, size = 0x30000, scoped, tag = 'output window, operand 1']
    #allocation10 [shape = 's32[2]{0}', space=sflag, size = 0x8, scoped, tag = 'scoped memory for tpu_custom_call.1']
    %11 = vsyncpa [#allocation3], 0
    %s12 = scalar_lea.sflag [#allocation3], 1
    %13 = vsyncpa %s12, 0
    %14 = vsyncpa [#allocation6], 0
    %15 = vsyncpa [#allocation4], 0
    %s16 = scalar_lea.sflag [#allocation4], 1
    %17 = vsyncpa %s16, 0
    %18 = vsyncpa [#allocation10], 0
    %s19 = scalar_lea.sflag [#allocation10], 1
    %20 = vsyncpa %s19, 0
    loop: start=0, step=1, limit=4
    $region2: #{tpu_custom_call.1} parent=1 // loop_pre_header
      _
    $region3: #{tpu_custom_call.1} parent=1 // loop_header
      %s22 = sphi 0, %s26
      %p23 = scmp.ge.s32.totalorder %s22, 4
      %s32 = sphi 0, %s34
      %s35 = sphi 0, %s32
      %s36 = sphi 0, %s35
      %s52 = sphi 0, %s36
      %s56 = sphi 0, %s56
      %s58 = sphi 0, %s56
      %s59 = sphi 0, %s58
      %s73 = sphi 0, %s59
      %s77 = sphi 0, %s77
      %s79 = sphi 0, %s77
      %s80 = sphi 0, %s79
      %s94 = sphi 0, %s80
      %s98 = sphi 0, %s98
      %s100 = sphi 0, %s98
      %s101 = sphi 0, %s100
      %s115 = sphi 0, %s101
      %s121 = sphi 0, %s123
      %s124 = sphi 0, %s121
      %s125 = sphi 0, %s124
      %s141 = sphi 0, %s125
      %s147 = sphi 0, %s149
      %s150 = sphi 0, %s147
      %s151 = sphi 0, %s150
      %s167 = sphi 0, %s151
    $region4: #{tpu_custom_call.1} parent=1 // loop_header_branch
      %25 = sbr.rel (%p23) target = $region8
    $region5: #{tpu_custom_call.1} parent=1 // loop_body
      %s27 = ssub.s32 %s22, 1
      %s28 = ssub.s32 %s22, 2
      %s29 = sadd.s32 %s22, 1
      %s30 = ssub.s32 %s22, %s29
      %p31 = scmp.eq.s32.totalorder %s30, 0
      %s33 = sadd.s32 %s32, 1
      %s34 = scalar_select %p31, %s32, %s33
      %p37 = pneg %p31
      %p38 = scmp.eq.s32.totalorder %s22, 1
      %p39 = por %p37, %p38
      %p40 = scmp.ne.s32.totalorder %s32, %s35
      %p41 = scmp.eq.s32.totalorder %s22, 0
      %p42 = por %p40, %p41
      %p43 = scmp.ne.s32.totalorder %s32, %s35
      %p44 = scmp.eq.s32.totalorder %s27, 1
      %p45 = por %p43, %p44
      %p46 = scmp.ne.s32.totalorder %s35, %s36
      %p47 = scmp.eq.s32.totalorder %s27, 0
      %p48 = por %p46, %p47
      %p49 = scmp.ne.s32.totalorder %s35, %s36
      %p50 = scmp.eq.s32.totalorder %s28, 1
      %p51 = por %p49, %p50
      %p53 = scmp.ne.s32.totalorder %s36, %s52
      %p54 = scmp.eq.s32.totalorder %s28, 0
      %p55 = por %p53, %p54
      %s57 = sadd.s32 %s56, 1
      %p60 = scmp.eq.s32.totalorder %s22, 1
      %p61 = scmp.ne.s32.totalorder %s56, %s58
      %p62 = scmp.eq.s32.totalorder %s22, 0
      %p63 = por %p61, %p62
      %p64 = scmp.ne.s32.totalorder %s56, %s58
      %p65 = scmp.eq.s32.totalorder %s27, 1
      %p66 = por %p64, %p65
      %p67 = scmp.ne.s32.totalorder %s58, %s59
      %p68 = scmp.eq.s32.totalorder %s27, 0
      %p69 = por %p67, %p68
      %p70 = scmp.ne.s32.totalorder %s58, %s59
      %p71 = scmp.eq.s32.totalorder %s28, 1
      %p72 = por %p70, %p71
      %p74 = scmp.ne.s32.totalorder %s59, %s73
      %p75 = scmp.eq.s32.totalorder %s28, 0
      %p76 = por %p74, %p75
      %s78 = sadd.s32 %s77, 1
      %p81 = scmp.eq.s32.totalorder %s22, 1
      %p82 = scmp.ne.s32.totalorder %s77, %s79
      %p83 = scmp.eq.s32.totalorder %s22, 0
      %p84 = por %p82, %p83
      %p85 = scmp.ne.s32.totalorder %s77, %s79
      %p86 = scmp.eq.s32.totalorder %s27, 1
      %p87 = por %p85, %p86
      %p88 = scmp.ne.s32.totalorder %s79, %s80
      %p89 = scmp.eq.s32.totalorder %s27, 0
      %p90 = por %p88, %p89
      %p91 = scmp.ne.s32.totalorder %s79, %s80
      %p92 = scmp.eq.s32.totalorder %s28, 1
      %p93 = por %p91, %p92
      %p95 = scmp.ne.s32.totalorder %s80, %s94
      %p96 = scmp.eq.s32.totalorder %s28, 0
      %p97 = por %p95, %p96
      %s99 = sadd.s32 %s98, 1
      %p102 = scmp.eq.s32.totalorder %s22, 1
      %p103 = scmp.ne.s32.totalorder %s98, %s100
      %p104 = scmp.eq.s32.totalorder %s22, 0
      %p105 = por %p103, %p104
      %p106 = scmp.ne.s32.totalorder %s98, %s100
      %p107 = scmp.eq.s32.totalorder %s27, 1
      %p108 = por %p106, %p107
      %p109 = scmp.ne.s32.totalorder %s100, %s101
      %p110 = scmp.eq.s32.totalorder %s27, 0
      %p111 = por %p109, %p110
      %p112 = scmp.ne.s32.totalorder %s100, %s101
      %p113 = scmp.eq.s32.totalorder %s28, 1
      %p114 = por %p112, %p113
      %p116 = scmp.ne.s32.totalorder %s101, %s115
      %p117 = scmp.eq.s32.totalorder %s28, 0
      %p118 = por %p116, %p117
      %s119 = ssub.s32 %s22, %s29
      %p120 = scmp.eq.s32.totalorder %s119, 0
      %s122 = sadd.s32 %s121, 1
      %s123 = scalar_select %p120, %s121, %s122
      %p126 = pneg %p120
      %p127 = scmp.eq.s32.totalorder %s22, 1
      %p128 = por %p126, %p127
      %p129 = scmp.ne.s32.totalorder %s121, %s124
      %p130 = scmp.eq.s32.totalorder %s22, 0
      %p131 = por %p129, %p130
      %p132 = scmp.ne.s32.totalorder %s121, %s124
      %p133 = scmp.eq.s32.totalorder %s27, 1
      %p134 = por %p132, %p133
      %p135 = scmp.ne.s32.totalorder %s124, %s125
      %p136 = scmp.eq.s32.totalorder %s27, 0
      %p137 = por %p135, %p136
      %p138 = scmp.ne.s32.totalorder %s124, %s125
      %p139 = scmp.eq.s32.totalorder %s28, 1
      %p140 = por %p138, %p139
      %p142 = scmp.ne.s32.totalorder %s125, %s141
      %p143 = scmp.eq.s32.totalorder %s28, 0
      %p144 = por %p142, %p143
      %s145 = ssub.s32 %s22, %s29
      %p146 = scmp.eq.s32.totalorder %s145, 0
      %s148 = sadd.s32 %s147, 1
      %s149 = scalar_select %p146, %s147, %s148
      %p152 = pneg %p146
      %p153 = scmp.eq.s32.totalorder %s22, 1
      %p154 = por %p152, %p153
      %p155 = scmp.ne.s32.totalorder %s147, %s150
      %p156 = scmp.eq.s32.totalorder %s22, 0
      %p157 = por %p155, %p156
      %p158 = scmp.ne.s32.totalorder %s147, %s150
      %p159 = scmp.eq.s32.totalorder %s27, 1
      %p160 = por %p158, %p159
      %p161 = scmp.ne.s32.totalorder %s150, %s151
      %p162 = scmp.eq.s32.totalorder %s27, 0
      %p163 = por %p161, %p162
      %p164 = scmp.ne.s32.totalorder %s150, %s151
      %p165 = scmp.eq.s32.totalorder %s28, 1
      %p166 = por %p164, %p165
      %p168 = scmp.ne.s32.totalorder %s151, %s167
      %p169 = scmp.eq.s32.totalorder %s28, 0
      %p170 = por %p168, %p169
      %p171 = scmp.le.s32.totalorder 1, %s22
      %p172 = scmp.lt.s32.totalorder %s22, 3
      %p173 = pnand %p171, %p172
      %p174 = pneg %p173
      // Predicated region
      $region9: #{tpu_custom_call.1} parent=5 // pred_check
        _
      $region10: #{tpu_custom_call.1} parent=5 // pred_check_branch
        %176 = sbr.rel (%p173) target = $region12
      $region11: #{tpu_custom_call.1} parent=5 // pred_region
        %s177 = ssub.s32 %s22, 1
        // Predicated region
        $region13: #{tpu_custom_call.1} parent=11 // pred_check
          %p178 = pneg %p69
        $region14: #{tpu_custom_call.1} parent=11 // pred_check_branch
          %180 = sbr.rel (%p178) target = $region16
        $region15: #{tpu_custom_call.1} parent=11 // pred_region
          %s182 = ssub.s32 768, 768
          %183 = vsyncadd [#allocation6], %s182
          %s184 = sshll.u32 [#allocation5], 4
          %s185 = int_to_ptr.vmem [resolvable:$true] %s184
          %190 = dma.hbm_to_vmem [thread:$0]  %s1, 768, %s185, [#allocation6], 128, 128, 8
        $region16: #{tpu_custom_call.1} parent=11 // pred_fallthru
          _
        // Predicated region
        $region17: #{tpu_custom_call.1} parent=11 // pred_check
          %p191 = pneg %p90
        $region18: #{tpu_custom_call.1} parent=11 // pred_check_branch
          %193 = sbr.rel (%p191) target = $region20
        $region19: #{tpu_custom_call.1} parent=11 // pred_region
          %s195 = ssub.s32 384, 384
          %196 = vsyncadd [#allocation6], %s195
          %s197 = sshll.u32 [#allocation7], 4
          %s198 = int_to_ptr.vmem [resolvable:$true] %s197
          %203 = dma.hbm_to_vmem [thread:$0]  %s2, 384, %s198, [#allocation6], 64, 64, 4
        $region20: #{tpu_custom_call.1} parent=11 // pred_fallthru
          _
        // Predicated region
        $region21: #{tpu_custom_call.1} parent=11 // pred_check
          %p204 = pneg %p111
        $region22: #{tpu_custom_call.1} parent=11 // pred_check_branch
          %206 = sbr.rel (%p204) target = $region24
        $region23: #{tpu_custom_call.1} parent=11 // pred_region
          _
        $region24: #{tpu_custom_call.1} parent=11 // pred_fallthru
          _
      $region12: #{tpu_custom_call.1} parent=5 // pred_fallthru
        _
      %p207 = scmp.lt.s32.totalorder %s22, 2
      // Predicated region
      $region25: #{tpu_custom_call.1} parent=5 // pred_check
        %p208 = pneg %p207
      $region26: #{tpu_custom_call.1} parent=5 // pred_check_branch
        %210 = sbr.rel (%p208) target = $region28
      $region27: #{tpu_custom_call.1} parent=5 // pred_region
        // Predicated region
        $region29: #{tpu_custom_call.1} parent=27 // pred_check
          %p211 = pneg %p42
        $region30: #{tpu_custom_call.1} parent=27 // pred_check_branch
          %213 = sbr.rel (%p211) target = $region32
        $region31: #{tpu_custom_call.1} parent=27 // pred_region
          %s214 = sand.u32 %s32, 1
          %s215 = scalar_lea.sflag [#allocation3], %s214
          %s216 = sand.u32 %s32, 1
          %s217 = smul.addr %s216, 32
          %s218 = scalar_lea.vmem [#allocation2], %s217
          %s220 = ssub.s32 512, 512
          %221 = vsyncadd %s215, %s220
          %s222 = smul.addr %s22, 4
          %s223 = smul.addr %s222, 128
          %s224 = scalar_lea.hbm %s0, %s223
          %s225 = sshll.u32 %s218, 4
          %s226 = int_to_ptr.vmem [resolvable:$true] %s225
          %231 = dma.hbm_to_vmem [thread:$0]  %s224, 512, %s226, %s215, 128, 128, 8
        $region32: #{tpu_custom_call.1} parent=27 // pred_fallthru
          _
      $region28: #{tpu_custom_call.1} parent=5 // pred_fallthru
        _
      %p232 = scmp.le.s32.totalorder 1, %s22
      %p233 = scmp.lt.s32.totalorder %s22, 3
      %p234 = pnand %p232, %p233
      %p235 = pneg %p234
      // Predicated region
      $region33: #{tpu_custom_call.1} parent=5 // pred_check
        _
      $region34: #{tpu_custom_call.1} parent=5 // pred_check_branch
        %237 = sbr.rel (%p234) target = $region36
      $region35: #{tpu_custom_call.1} parent=5 // pred_region
        %s238 = ssub.s32 %s22, 1
        %s239 = sand.u32 %s35, 1
        %s240 = scalar_lea.sflag [#allocation3], %s239
        %s241 = sand.u32 %s35, 1
        %s242 = smul.addr %s241, 32
        %s243 = scalar_lea.vmem [#allocation2], %s242
        // Predicated region
        $region37: #{tpu_custom_call.1} parent=35 // pred_check
          %p244 = pneg %p48
        $region38: #{tpu_custom_call.1} parent=35 // pred_check_branch
          %246 = sbr.rel (%p244) target = $region40
        $region39: #{tpu_custom_call.1} parent=35 // pred_region
          %247 = dma.done %s240, 512
        $region40: #{tpu_custom_call.1} parent=35 // pred_fallthru
          _
        // Predicated region
        $region41: #{tpu_custom_call.1} parent=35 // pred_check
          %p248 = pneg %p69
        $region42: #{tpu_custom_call.1} parent=35 // pred_check_branch
          %250 = sbr.rel (%p248) target = $region44
        $region43: #{tpu_custom_call.1} parent=35 // pred_region
          %251 = dma.done [#allocation6], 768
        $region44: #{tpu_custom_call.1} parent=35 // pred_fallthru
          _
        // Predicated region
        $region45: #{tpu_custom_call.1} parent=35 // pred_check
          %p252 = pneg %p90
        $region46: #{tpu_custom_call.1} parent=35 // pred_check_branch
          %254 = sbr.rel (%p252) target = $region48
        $region47: #{tpu_custom_call.1} parent=35 // pred_region
          %255 = dma.done [#allocation6], 384
        $region48: #{tpu_custom_call.1} parent=35 // pred_fallthru
          _
        %s256 = sand.u32 %s35, 1
        %s257 = scalar_lea.sflag [#allocation3], %s256
        %s258 = sand.u32 %s35, 1
        %s259 = smul.addr %s258, 32
        %s260 = scalar_lea.vmem [#allocation2], %s259
        %p261 = pneg %p48
        %p262 = pneg %p45
        %p263 = pneg %p69
        %p264 = pneg %p66
        %p265 = pneg %p90
        %p266 = pneg %p87
        %p267 = pneg %p111
        %p268 = pneg %p108
        %p269 = pneg %p137
        %p270 = pneg %p134
        %s271 = sand.u32 %s124, 1
        %s272 = scalar_lea.sflag [#allocation4], %s271
        %s273 = sand.u32 %s124, 1
        %s274 = smul.addr %s273, 32
        %s275 = scalar_lea.vmem [#allocation8], %s274
        %p276 = pneg %p163
        %p277 = pneg %p160
        %s278 = sand.u32 %s150, 1
        %s279 = scalar_lea.sflag [#allocation10], %s278
        %s280 = sand.u32 %s150, 1
        %s281 = smul.addr %s280, 192
        %s282 = scalar_lea.vmem [#allocation9], %s281
        %v284 = vld [vmem:[%s243] sm:$0xff]
        %v285 = vld [vmem:[%s243 + $0x8] sm:$0xff]
        %v286 = vld [vmem:[%s243 + $0x10] sm:$0xff]
        %v287 = vld [vmem:[%s243 + $0x18] sm:$0xff]
        %v288 = vpack.c.bf16 %v285, %v284
        %v289 = vpack.c.bf16 %v287, %v286
        %v290 = vld [vmem:[#allocation5] sm:$0xff]
        %v291 = vld [vmem:[#allocation5 + $0x8] sm:$0xff]
        %v292 = vld [vmem:[#allocation5 + $0x10] sm:$0xff]
        %v293 = vld [vmem:[#allocation5 + $0x18] sm:$0xff]
        %v294 = vld [vmem:[#allocation5 + $0x20] sm:$0xff]
        %v295 = vld [vmem:[#allocation5 + $0x28] sm:$0xff]
        %v302 = vunpack.c.l.b16 %v290
        %v303 = vunpack.c.h.b16 %v290
        %v304 = vunpack.c.l.b16 %v291
        %v305 = vunpack.c.h.b16 %v291
        %v306 = vunpack.c.l.b16 %v292
        %v307 = vunpack.c.h.b16 %v292
        %v308 = vunpack.c.l.b16 %v293
        %v309 = vunpack.c.h.b16 %v293
        %v310 = vunpack.c.l.b16 %v294
        %v311 = vunpack.c.h.b16 %v294
        %v312 = vunpack.c.l.b16 %v295
        %v313 = vunpack.c.h.b16 %v295
        %v314 = vpack.c.b16 %v304, %v302
        %v315 = vpack.c.b16 %v305, %v303
        %v316 = vpack.c.b16 %v308, %v306
        %v317 = vpack.c.b16 %v309, %v307
        %v318 = vpack.c.b16 %v312, %v310
        %v319 = vpack.c.b16 %v313, %v311
        %vm326 = vcmask 392192
        %v328 = vsel %vm326, %v288, 0
        %v331 = vsel %vm326, %v289, 0
        %333 = vmatprep.subr.bf16.mxu0 %v315
        %334 = vmatpush1.bf16.msra.mxu0 %v314
        %335 = vmatprep.subr.bf16.mxu0 %v317
        %336 = vmatpush1.bf16.msra.mxu0 %v316
        %337 = vmatprep.subr.bf16.mxu0 %v319
        %338 = vmatpush1.bf16.msra.mxu0 %v318
        %339 = vmatprep.subr.bf16.mxu0 0
        %340 = vmatpush1.bf16.msra.mxu0 0
        %341 = vmatprep.subr.bf16.mxu0 0
        %342 = vmatpush1.bf16.msra.mxu0 0
        %343 = vmatprep.subr.bf16.mxu0 0
        %344 = vmatpush1.bf16.msra.mxu0 0
        %345 = vmatprep.subr.bf16.mxu0 0
        %346 = vmatpush1.bf16.msra.mxu0 0
        %347 = vmatprep.subr.bf16.mxu0 0
        %348 = vmatpush1.bf16.msra.mxu0 0
        %349 = vmatprep.subr.bf16.mxu0 0
        %350 = vmatpush1.bf16.msra.mxu0 0
        %351 = vmatprep.subr.bf16.mxu0 0
        %352 = vmatpush1.bf16.msra.mxu0 0
        %353 = vmatprep.subr.bf16.mxu0 0
        %354 = vmatpush1.bf16.msra.mxu0 0
        %355 = vmatprep.subr.bf16.mxu0 0
        %356 = vmatpush1.bf16.msra.mxu0 0
        %357 = vmatprep.subr.bf16.mxu0 0
        %358 = vmatpush1.bf16.msra.mxu0 0
        %359 = vmatprep.subr.bf16.mxu0 0
        %360 = vmatpush1.bf16.msra.mxu0 0
        %361 = vmatprep.subr.bf16.mxu0 0
        %362 = vmatpush1.bf16.msra.mxu0 0
        %363 = vmatprep.subr.bf16.mxu0 0
        %364 = vmatpush1.bf16.msra.mxu0 0
        %365 = vmatprep.mubr.bf16.mxu0 0
        %366 = vmatmul.mubr.bf16.gmra.mrb[0].mxu0 %v328
        %v367 = vpop.f32.mrb[0].mxu0
        %v368 = vadd.f32 0.0, %v367
        %v369 = vpop.f32.mrb[0].mxu0
        %v370 = vadd.f32 0.0, %v369
        %v371 = vpop.f32.mrb[0].mxu0
        %v372 = vadd.f32 0.0, %v371
        %v373 = vpop.f32.mrb[0].mxu0
        %v374 = vadd.f32 0.0, %v373
        %375 = vmatprep.mubr.bf16.mxu0 0
        %376 = vmatmul.mubr.bf16.gmra.mrb[0].mxu0 %v331
        %v377 = vpop.f32.mrb[0].mxu0
        %v378 = vadd.f32 0.0, %v377
        %v379 = vpop.f32.mrb[0].mxu0
        %v380 = vadd.f32 0.0, %v379
        %v381 = vpop.f32.mrb[0].mxu0
        %v382 = vadd.f32 0.0, %v381
        %v383 = vpop.f32.mrb[0].mxu0
        %v384 = vadd.f32 0.0, %v383
        %385 = vdwg.mxu0
        %v386 = vpack.c.bf16 %v372, %v368
        %v387 = vpack.c.bf16 %v374, %v370
        %v388 = vpack.c.bf16 %v382, %v378
        %v389 = vpack.c.bf16 %v384, %v380
        %392 = vrot.lane.b32.xlu0 %v386, 120
        %v393 = vpop.permute.xlu0 %392
        %394 = vrot.lane.b32.xlu0 %v388, 120
        %v395 = vpop.permute.xlu0 %394
        %396 = vrot.lane.b32.xlu0 %v386, 112
        %v397 = vpop.permute.xlu0 %396
        %398 = vrot.lane.b32.xlu0 %v388, 112
        %v399 = vpop.permute.xlu0 %398
        %400 = vrot.lane.b32.xlu0 %v386, 104
        %v401 = vpop.permute.xlu0 %400
        %402 = vrot.lane.b32.xlu0 %v388, 104
        %v403 = vpop.permute.xlu0 %402
        %404 = vrot.lane.b32.xlu0 %v386, 96
        %v405 = vpop.permute.xlu0 %404
        %406 = vrot.lane.b32.xlu0 %v388, 96
        %v407 = vpop.permute.xlu0 %406
        %408 = vrot.lane.b32.xlu0 %v386, 88
        %v409 = vpop.permute.xlu0 %408
        %410 = vrot.lane.b32.xlu0 %v388, 88
        %v411 = vpop.permute.xlu0 %410
        %414 = vrot.lane.b32.xlu0 %v387, 96
        %v415 = vpop.permute.xlu0 %414
        %416 = vrot.lane.b32.xlu0 %v389, 96
        %v417 = vpop.permute.xlu0 %416
        %418 = vrot.lane.b32.xlu0 %v387, 88
        %v419 = vpop.permute.xlu0 %418
        %420 = vrot.lane.b32.xlu0 %v389, 88
        %v421 = vpop.permute.xlu0 %420
        %422 = vrot.lane.b32.xlu0 %v386, 80
        %v423 = vpop.permute.xlu0 %422
        %424 = vrot.lane.b32.xlu0 %v388, 80
        %v425 = vpop.permute.xlu0 %424
        %426 = vrot.lane.b32.xlu0 %v393, 80
        %v427 = vpop.permute.xlu0 %426
        %428 = vrot.lane.b32.xlu0 %v395, 80
        %v429 = vpop.permute.xlu0 %428
        %430 = vrot.lane.b32.xlu0 %v397, 80
        %v431 = vpop.permute.xlu0 %430
        %432 = vrot.lane.b32.xlu0 %v399, 80
        %v433 = vpop.permute.xlu0 %432
        %434 = vrot.lane.b32.xlu0 %v401, 80
        %v435 = vpop.permute.xlu0 %434
        %436 = vrot.lane.b32.xlu0 %v403, 80
        %v437 = vpop.permute.xlu0 %436
        %438 = vrot.lane.b32.xlu0 %v405, 80
        %v439 = vpop.permute.xlu0 %438
        %440 = vrot.lane.b32.xlu0 %v407, 80
        %v441 = vpop.permute.xlu0 %440
        %442 = vrot.lane.b32.xlu0 %v409, 80
        %v443 = vpop.permute.xlu0 %442
        %444 = vrot.lane.b32.xlu0 %v411, 80
        %v445 = vpop.permute.xlu0 %444
        %458 = vxpose.xlu0.c.b16.start [1/8] %v423, 128
        %459 = vxpose.xlu0.c.b16.cont [2/8] %v425, 128
        %460 = vxpose.xlu0.c.b16.cont [3/8] 0, 128
        %461 = vxpose.xlu0.c.b16.cont [4/8] 0, 128
        %462 = vxpose.xlu0.c.b16.cont [5/8] 0, 128
        %463 = vxpose.xlu0.c.b16.cont [6/8] 0, 128
        %464 = vxpose.xlu0.c.b16.cont [7/8] 0, 128
        %465 = vxpose.xlu0.c.b16.end [8/8] 0, 128
        %v466 = vpop.trf.xlu0
        %v467 = vpop.trf.xlu0
        %v468 = vpop.trf.xlu0
        %v469 = vpop.trf.xlu0
        %v470 = vpop.trf.xlu0
        %v471 = vpop.trf.xlu0
        %v472 = vpop.trf.xlu0
        %v473 = vpop.trf.xlu0
        %474 = vxpose.xlu0.c.b16.start [1/8] %v427, 128
        %475 = vxpose.xlu0.c.b16.cont [2/8] %v429, 128
        %476 = vxpose.xlu0.c.b16.cont [3/8] 0, 128
        %477 = vxpose.xlu0.c.b16.cont [4/8] 0, 128
        %478 = vxpose.xlu0.c.b16.cont [5/8] 0, 128
        %479 = vxpose.xlu0.c.b16.cont [6/8] 0, 128
        %480 = vxpose.xlu0.c.b16.cont [7/8] 0, 128
        %481 = vxpose.xlu0.c.b16.end [8/8] 0, 128
        %v482 = vpop.trf.xlu0
        %v483 = vpop.trf.xlu0
        %v484 = vpop.trf.xlu0
        %v485 = vpop.trf.xlu0
        %v486 = vpop.trf.xlu0
        %v487 = vpop.trf.xlu0
        %v488 = vpop.trf.xlu0
        %v489 = vpop.trf.xlu0
        %490 = vxpose.xlu0.c.b16.start [1/8] %v431, 128
        %491 = vxpose.xlu0.c.b16.cont [2/8] %v433, 128
        %492 = vxpose.xlu0.c.b16.cont [3/8] 0, 128
        %493 = vxpose.xlu0.c.b16.cont [4/8] 0, 128
        %494 = vxpose.xlu0.c.b16.cont [5/8] 0, 128
        %495 = vxpose.xlu0.c.b16.cont [6/8] 0, 128
        %496 = vxpose.xlu0.c.b16.cont [7/8] 0, 128
        %497 = vxpose.xlu0.c.b16.end [8/8] 0, 128
        %v498 = vpop.trf.xlu0
        %v499 = vpop.trf.xlu0
        %v500 = vpop.trf.xlu0
        %v501 = vpop.trf.xlu0
        %v502 = vpop.trf.xlu0
        %v503 = vpop.trf.xlu0
        %v504 = vpop.trf.xlu0
        %v505 = vpop.trf.xlu0
        %506 = vxpose.xlu0.c.b16.start [1/8] %v435, 128
        %507 = vxpose.xlu0.c.b16.cont [2/8] %v437, 128
        %508 = vxpose.xlu0.c.b16.cont [3/8] 0, 128
        %509 = vxpose.xlu0.c.b16.cont [4/8] 0, 128
        %510 = vxpose.xlu0.c.b16.cont [5/8] 0, 128
        %511 = vxpose.xlu0.c.b16.cont [6/8] 0, 128
        %512 = vxpose.xlu0.c.b16.cont [7/8] 0, 128
        %513 = vxpose.xlu0.c.b16.end [8/8] 0, 128
        %v514 = vpop.trf.xlu0
        %v515 = vpop.trf.xlu0
        %v516 = vpop.trf.xlu0
        %v517 = vpop.trf.xlu0
        %v518 = vpop.trf.xlu0
        %v519 = vpop.trf.xlu0
        %v520 = vpop.trf.xlu0
        %v521 = vpop.trf.xlu0
        %522 = vxpose.xlu0.c.b16.start [1/8] %v439, 128
        %523 = vxpose.xlu0.c.b16.cont [2/8] %v441, 128
        %524 = vxpose.xlu0.c.b16.cont [3/8] 0, 128
        %525 = vxpose.xlu0.c.b16.cont [4/8] 0, 128
        %526 = vxpose.xlu0.c.b16.cont [5/8] 0, 128
        %527 = vxpose.xlu0.c.b16.cont [6/8] 0, 128
        %528 = vxpose.xlu0.c.b16.cont [7/8] 0, 128
        %529 = vxpose.xlu0.c.b16.end [8/8] 0, 128
        %v530 = vpop.trf.xlu0
        %v531 = vpop.trf.xlu0
        %v532 = vpop.trf.xlu0
        %v533 = vpop.trf.xlu0
        %v534 = vpop.trf.xlu0
        %v535 = vpop.trf.xlu0
        %v536 = vpop.trf.xlu0
        %v537 = vpop.trf.xlu0
        %538 = vxpose.xlu0.c.b16.start [1/8] %v443, 128
        %539 = vxpose.xlu0.c.b16.cont [2/8] %v445, 128
        %540 = vxpose.xlu0.c.b16.cont [3/8] 0, 128
        %541 = vxpose.xlu0.c.b16.cont [4/8] 0, 128
        %542 = vxpose.xlu0.c.b16.cont [5/8] 0, 128
        %543 = vxpose.xlu0.c.b16.cont [6/8] 0, 128
        %544 = vxpose.xlu0.c.b16.cont [7/8] 0, 128
        %545 = vxpose.xlu0.c.b16.end [8/8] 0, 128
        %v546 = vpop.trf.xlu0
        %v547 = vpop.trf.xlu0
        %v548 = vpop.trf.xlu0
        %v549 = vpop.trf.xlu0
        %v550 = vpop.trf.xlu0
        %v551 = vpop.trf.xlu0
        %v552 = vpop.trf.xlu0
        %v553 = vpop.trf.xlu0
        %vm554 = vcmask 64512
        %v556 = vsel %vm554, %v386, 0
        %v559 = vsel %vm554, %v388, 0
        %vm561 = vcmask 1043456
        %v563 = vsel %vm561, %v466, 0
        %565 = vmatprep.subr.bf16.mxu0 0
        %566 = vmatpush1.bf16.msra.mxu0 %v563
        %567 = vmatprep.subr.bf16.mxu0 0
        %568 = vmatpush1.bf16.msra.mxu0 0
        %569 = vmatprep.subr.bf16.mxu0 0
        %570 = vmatpush1.bf16.msra.mxu0 0
        %571 = vmatprep.subr.bf16.mxu0 0
        %572 = vmatpush1.bf16.msra.mxu0 0
        %573 = vmatprep.subr.bf16.mxu0 0
        %574 = vmatpush1.bf16.msra.mxu0 0
        %575 = vmatprep.subr.bf16.mxu0 0
        %576 = vmatpush1.bf16.msra.mxu0 0
        %577 = vmatprep.subr.bf16.mxu0 0
        %578 = vmatpush1.bf16.msra.mxu0 0
        %579 = vmatprep.subr.bf16.mxu0 0
        %580 = vmatpush1.bf16.msra.mxu0 0
        %581 = vmatprep.subr.bf16.mxu0 0
        %582 = vmatpush1.bf16.msra.mxu0 0
        %583 = vmatprep.subr.bf16.mxu0 0
        %584 = vmatpush1.bf16.msra.mxu0 0
        %585 = vmatprep.subr.bf16.mxu0 0
        %586 = vmatpush1.bf16.msra.mxu0 0
        %587 = vmatprep.subr.bf16.mxu0 0
        %588 = vmatpush1.bf16.msra.mxu0 0
        %589 = vmatprep.subr.bf16.mxu0 0
        %590 = vmatpush1.bf16.msra.mxu0 0
        %591 = vmatprep.subr.bf16.mxu0 0
        %592 = vmatpush1.bf16.msra.mxu0 0
        %593 = vmatprep.subr.bf16.mxu0 0
        %594 = vmatpush1.bf16.msra.mxu0 0
        %595 = vmatprep.subr.bf16.mxu0 0
        %596 = vmatpush1.bf16.msra.mxu0 0
        %597 = vmatprep.mubr.bf16.mxu0 0
        %598 = vmatmul.mubr.bf16.gmra.mrb[0].mxu0 %v556
        %v599 = vpop.f32.mrb[0].mxu0
        %v600 = vadd.f32 0.0, %v599
        %v601 = vpop.f32.mrb[0].mxu0
        %v602 = vpop.f32.mrb[0].mxu0
        %v603 = vadd.f32 0.0, %v602
        %v604 = vpop.f32.mrb[0].mxu0
        %605 = vmatprep.mubr.bf16.mxu0 0
        %606 = vmatmul.mubr.bf16.gmra.mrb[0].mxu0 %v559
        %v607 = vpop.f32.mrb[0].mxu0
        %v608 = vadd.f32 0.0, %v607
        %v609 = vpop.f32.mrb[0].mxu0
        %v610 = vpop.f32.mrb[0].mxu0
        %v611 = vadd.f32 0.0, %v610
        %v612 = vpop.f32.mrb[0].mxu0
        %613 = vdwg.mxu0
        %v615 = vsel %vm554, %v393, 0
        %v618 = vsel %vm554, %v395, 0
        %v621 = vsel %vm561, %v482, 0
        %623 = vmatprep.subr.bf16.mxu0 0
        %624 = vmatpush1.bf16.msra.mxu0 %v621
        %625 = vmatprep.subr.bf16.mxu0 0
        %626 = vmatpush1.bf16.msra.mxu0 0
        %627 = vmatprep.subr.bf16.mxu0 0
        %628 = vmatpush1.bf16.msra.mxu0 0
        %629 = vmatprep.subr.bf16.mxu0 0
        %630 = vmatpush1.bf16.msra.mxu0 0
        %631 = vmatprep.subr.bf16.mxu0 0
        %632 = vmatpush1.bf16.msra.mxu0 0
        %633 = vmatprep.subr.bf16.mxu0 0
        %634 = vmatpush1.bf16.msra.mxu0 0
        %635 = vmatprep.subr.bf16.mxu0 0
        %636 = vmatpush1.bf16.msra.mxu0 0
        %637 = vmatprep.subr.bf16.mxu0 0
        %638 = vmatpush1.bf16.msra.mxu0 0
        %639 = vmatprep.subr.bf16.mxu0 0
        %640 = vmatpush1.bf16.msra.mxu0 0
        %641 = vmatprep.subr.bf16.mxu0 0
        %642 = vmatpush1.bf16.msra.mxu0 0
        %643 = vmatprep.subr.bf16.mxu0 0
        %644 = vmatpush1.bf16.msra.mxu0 0
        %645 = vmatprep.subr.bf16.mxu0 0
        %646 = vmatpush1.bf16.msra.mxu0 0
        %647 = vmatprep.subr.bf16.mxu0 0
        %648 = vmatpush1.bf16.msra.mxu0 0
        %649 = vmatprep.subr.bf16.mxu0 0
        %650 = vmatpush1.bf16.msra.mxu0 0
        %651 = vmatprep.subr.bf16.mxu0 0
        %652 = vmatpush1.bf16.msra.mxu0 0
        %653 = vmatprep.subr.bf16.mxu0 0
        %654 = vmatpush1.bf16.msra.mxu0 0
        %655 = vmatprep.mubr.bf16.mxu0 0
        %656 = vmatmul.mubr.bf16.gmra.mrb[0].mxu0 %v615
        %v657 = vpop.f32.mrb[0].mxu0
        %v658 = vadd.f32 0.0, %v657
        %v659 = vpop.f32.mrb[0].mxu0
        %v660 = vpop.f32.mrb[0].mxu0
        %v661 = vadd.f32 0.0, %v660
        %v662 = vpop.f32.mrb[0].mxu0
        %663 = vmatprep.mubr.bf16.mxu0 0
        %664 = vmatmul.mubr.bf16.gmra.mrb[0].mxu0 %v618
        %v665 = vpop.f32.mrb[0].mxu0
        %v666 = vadd.f32 0.0, %v665
        %v667 = vpop.f32.mrb[0].mxu0
        %v668 = vpop.f32.mrb[0].mxu0
        %v669 = vadd.f32 0.0, %v668
        %v670 = vpop.f32.mrb[0].mxu0
        %671 = vdwg.mxu0
        %v673 = vsel %vm554, %v397, 0
        %v676 = vsel %vm554, %v399, 0
        %v679 = vsel %vm561, %v498, 0
        %681 = vmatprep.subr.bf16.mxu0 0
        %682 = vmatpush1.bf16.msra.mxu0 %v679
        %683 = vmatprep.subr.bf16.mxu0 0
        %684 = vmatpush1.bf16.msra.mxu0 0
        %685 = vmatprep.subr.bf16.mxu0 0
        %686 = vmatpush1.bf16.msra.mxu0 0
        %687 = vmatprep.subr.bf16.mxu0 0
        %688 = vmatpush1.bf16.msra.mxu0 0
        %689 = vmatprep.subr.bf16.mxu0 0
        %690 = vmatpush1.bf16.msra.mxu0 0
        %691 = vmatprep.subr.bf16.mxu0 0
        %692 = vmatpush1.bf16.msra.mxu0 0
        %693 = vmatprep.subr.bf16.mxu0 0
        %694 = vmatpush1.bf16.msra.mxu0 0
        %695 = vmatprep.subr.bf16.mxu0 0
        %696 = vmatpush1.bf16.msra.mxu0 0
        %697 = vmatprep.subr.bf16.mxu0 0
        %698 = vmatpush1.bf16.msra.mxu0 0
        %699 = vmatprep.subr.bf16.mxu0 0
        %700 = vmatpush1.bf16.msra.mxu0 0
        %701 = vmatprep.subr.bf16.mxu0 0
        %702 = vmatpush1.bf16.msra.mxu0 0
        %703 = vmatprep.subr.bf16.mxu0 0
        %704 = vmatpush1.bf16.msra.mxu0 0
        %705 = vmatprep.subr.bf16.mxu0 0
        %706 = vmatpush1.bf16.msra.mxu0 0
        %707 = vmatprep.subr.bf16.mxu0 0
        %708 = vmatpush1.bf16.msra.mxu0 0
        %709 = vmatprep.subr.bf16.mxu0 0
        %710 = vmatpush1.bf16.msra.mxu0 0
        %711 = vmatprep.subr.bf16.mxu0 0
        %712 = vmatpush1.bf16.msra.mxu0 0
        %713 = vmatprep.mubr.bf16.mxu0 0
        %714 = vmatmul.mubr.bf16.gmra.mrb[0].mxu0 %v673
        %v715 = vpop.f32.mrb[0].mxu0
        %v716 = vadd.f32 0.0, %v715
        %v717 = vpop.f32.mrb[0].mxu0
        %v718 = vpop.f32.mrb[0].mxu0
        %v719 = vadd.f32 0.0, %v718
        %v720 = vpop.f32.mrb[0].mxu0
        %721 = vmatprep.mubr.bf16.mxu0 0
        %722 = vmatmul.mubr.bf16.gmra.mrb[0].mxu0 %v676
        %v723 = vpop.f32.mrb[0].mxu0
        %v724 = vadd.f32 0.0, %v723
        %v725 = vpop.f32.mrb[0].mxu0
        %v726 = vpop.f32.mrb[0].mxu0
        %v727 = vadd.f32 0.0, %v726
        %v728 = vpop.f32.mrb[0].mxu0
        %729 = vdwg.mxu0
        %v731 = vsel %vm554, %v401, 0
        %v734 = vsel %vm554, %v403, 0
        %v737 = vsel %vm561, %v514, 0
        %739 = vmatprep.subr.bf16.mxu0 0
        %740 = vmatpush1.bf16.msra.mxu0 %v737
        %741 = vmatprep.subr.bf16.mxu0 0
        %742 = vmatpush1.bf16.msra.mxu0 0
        %743 = vmatprep.subr.bf16.mxu0 0
        %744 = vmatpush1.bf16.msra.mxu0 0
        %745 = vmatprep.subr.bf16.mxu0 0
        %746 = vmatpush1.bf16.msra.mxu0 0
        %747 = vmatprep.subr.bf16.mxu0 0
        %748 = vmatpush1.bf16.msra.mxu0 0
        %749 = vmatprep.subr.bf16.mxu0 0
        %750 = vmatpush1.bf16.msra.mxu0 0
        %751 = vmatprep.subr.bf16.mxu0 0
        %752 = vmatpush1.bf16.msra.mxu0 0
        %753 = vmatprep.subr.bf16.mxu0 0
        %754 = vmatpush1.bf16.msra.mxu0 0
        %755 = vmatprep.subr.bf16.mxu0 0
        %756 = vmatpush1.bf16.msra.mxu0 0
        %757 = vmatprep.subr.bf16.mxu0 0
        %758 = vmatpush1.bf16.msra.mxu0 0
        %759 = vmatprep.subr.bf16.mxu0 0
        %760 = vmatpush1.bf16.msra.mxu0 0
        %761 = vmatprep.subr.bf16.mxu0 0
        %762 = vmatpush1.bf16.msra.mxu0 0
        %763 = vmatprep.subr.bf16.mxu0 0
        %764 = vmatpush1.bf16.msra.mxu0 0
        %765 = vmatprep.subr.bf16.mxu0 0
        %766 = vmatpush1.bf16.msra.mxu0 0
        %767 = vmatprep.subr.bf16.mxu0 0
        %768 = vmatpush1.bf16.msra.mxu0 0
        %769 = vmatprep.subr.bf16.mxu0 0
        %770 = vmatpush1.bf16.msra.mxu0 0
        %771 = vmatprep.mubr.bf16.mxu0 0
        %772 = vmatmul.mubr.bf16.gmra.mrb[0].mxu0 %v731
        %v773 = vpop.f32.mrb[0].mxu0
        %v774 = vadd.f32 0.0, %v773
        %v775 = vpop.f32.mrb[0].mxu0
        %v776 = vpop.f32.mrb[0].mxu0
        %v777 = vadd.f32 0.0, %v776
        %v778 = vpop.f32.mrb[0].mxu0
        %779 = vmatprep.mubr.bf16.mxu0 0
        %780 = vmatmul.mubr.bf16.gmra.mrb[0].mxu0 %v734
        %v781 = vpop.f32.mrb[0].mxu0
        %v782 = vadd.f32 0.0, %v781
        %v783 = vpop.f32.mrb[0].mxu0
        %v784 = vpop.f32.mrb[0].mxu0
        %v785 = vadd.f32 0.0, %v784
        %v786 = vpop.f32.mrb[0].mxu0
        %787 = vdwg.mxu0
        %v789 = vsel %vm554, %v405, 0
        %v792 = vsel %vm554, %v407, 0
        %v795 = vsel %vm561, %v530, 0
        %797 = vmatprep.subr.bf16.mxu0 0
        %798 = vmatpush1.bf16.msra.mxu0 %v795
        %799 = vmatprep.subr.bf16.mxu0 0
        %800 = vmatpush1.bf16.msra.mxu0 0
        %801 = vmatprep.subr.bf16.mxu0 0
        %802 = vmatpush1.bf16.msra.mxu0 0
        %803 = vmatprep.subr.bf16.mxu0 0
        %804 = vmatpush1.bf16.msra.mxu0 0
        %805 = vmatprep.subr.bf16.mxu0 0
        %806 = vmatpush1.bf16.msra.mxu0 0
        %807 = vmatprep.subr.bf16.mxu0 0
        %808 = vmatpush1.bf16.msra.mxu0 0
        %809 = vmatprep.subr.bf16.mxu0 0
        %810 = vmatpush1.bf16.msra.mxu0 0
        %811 = vmatprep.subr.bf16.mxu0 0
        %812 = vmatpush1.bf16.msra.mxu0 0
        %813 = vmatprep.subr.bf16.mxu0 0
        %814 = vmatpush1.bf16.msra.mxu0 0
        %815 = vmatprep.subr.bf16.mxu0 0
        %816 = vmatpush1.bf16.msra.mxu0 0
        %817 = vmatprep.subr.bf16.mxu0 0
        %818 = vmatpush1.bf16.msra.mxu0 0
        %819 = vmatprep.subr.bf16.mxu0 0
        %820 = vmatpush1.bf16.msra.mxu0 0
        %821 = vmatprep.subr.bf16.mxu0 0
        %822 = vmatpush1.bf16.msra.mxu0 0
        %823 = vmatprep.subr.bf16.mxu0 0
        %824 = vmatpush1.bf16.msra.mxu0 0
        %825 = vmatprep.subr.bf16.mxu0 0
        %826 = vmatpush1.bf16.msra.mxu0 0
        %827 = vmatprep.subr.bf16.mxu0 0
        %828 = vmatpush1.bf16.msra.mxu0 0
        %829 = vmatprep.mubr.bf16.mxu0 0
        %830 = vmatmul.mubr.bf16.gmra.mrb[0].mxu0 %v789
        %v831 = vpop.f32.mrb[0].mxu0
        %v832 = vadd.f32 0.0, %v831
        %v833 = vpop.f32.mrb[0].mxu0
        %v834 = vpop.f32.mrb[0].mxu0
        %v835 = vadd.f32 0.0, %v834
        %v836 = vpop.f32.mrb[0].mxu0
        %837 = vmatprep.mubr.bf16.mxu0 0
        %838 = vmatmul.mubr.bf16.gmra.mrb[0].mxu0 %v792
        %v839 = vpop.f32.mrb[0].mxu0
        %v840 = vadd.f32 0.0, %v839
        %v841 = vpop.f32.mrb[0].mxu0
        %v842 = vpop.f32.mrb[0].mxu0
        %v843 = vadd.f32 0.0, %v842
        %v844 = vpop.f32.mrb[0].mxu0
        %845 = vdwg.mxu0
        %v847 = vsel %vm554, %v409, 0
        %v850 = vsel %vm554, %v411, 0
        %v853 = vsel %vm561, %v546, 0
        %855 = vmatprep.subr.bf16.mxu0 0
        %856 = vmatpush1.bf16.msra.mxu0 %v853
        %857 = vmatprep.subr.bf16.mxu0 0
        %858 = vmatpush1.bf16.msra.mxu0 0
        %859 = vmatprep.subr.bf16.mxu0 0
        %860 = vmatpush1.bf16.msra.mxu0 0
        %861 = vmatprep.subr.bf16.mxu0 0
        %862 = vmatpush1.bf16.msra.mxu0 0
        %863 = vmatprep.subr.bf16.mxu0 0
        %864 = vmatpush1.bf16.msra.mxu0 0
        %865 = vmatprep.subr.bf16.mxu0 0
        %866 = vmatpush1.bf16.msra.mxu0 0
        %867 = vmatprep.subr.bf16.mxu0 0
        %868 = vmatpush1.bf16.msra.mxu0 0
        %869 = vmatprep.subr.bf16.mxu0 0
        %870 = vmatpush1.bf16.msra.mxu0 0
        %871 = vmatprep.subr.bf16.mxu0 0
        %872 = vmatpush1.bf16.msra.mxu0 0
        %873 = vmatprep.subr.bf16.mxu0 0
        %874 = vmatpush1.bf16.msra.mxu0 0
        %875 = vmatprep.subr.bf16.mxu0 0
        %876 = vmatpush1.bf16.msra.mxu0 0
        %877 = vmatprep.subr.bf16.mxu0 0
        %878 = vmatpush1.bf16.msra.mxu0 0
        %879 = vmatprep.subr.bf16.mxu0 0
        %880 = vmatpush1.bf16.msra.mxu0 0
        %881 = vmatprep.subr.bf16.mxu0 0
        %882 = vmatpush1.bf16.msra.mxu0 0
        %883 = vmatprep.subr.bf16.mxu0 0
        %884 = vmatpush1.bf16.msra.mxu0 0
        %885 = vmatprep.subr.bf16.mxu0 0
        %886 = vmatpush1.bf16.msra.mxu0 0
        %887 = vmatprep.mubr.bf16.mxu0 0
        %888 = vmatmul.mubr.bf16.gmra.mrb[0].mxu0 %v847
        %v889 = vpop.f32.mrb[0].mxu0
        %v890 = vadd.f32 0.0, %v889
        %v891 = vpop.f32.mrb[0].mxu0
        %v892 = vpop.f32.mrb[0].mxu0
        %v893 = vadd.f32 0.0, %v892
        %v894 = vpop.f32.mrb[0].mxu0
        %895 = vmatprep.mubr.bf16.mxu0 0
        %896 = vmatmul.mubr.bf16.gmra.mrb[0].mxu0 %v850
        %v897 = vpop.f32.mrb[0].mxu0
        %v898 = vadd.f32 0.0, %v897
        %v899 = vpop.f32.mrb[0].mxu0
        %v900 = vpop.f32.mrb[0].mxu0
        %v901 = vadd.f32 0.0, %v900
        %v902 = vpop.f32.mrb[0].mxu0
        %903 = vdwg.mxu0
        %v904 = vlaneseq
        %v905 = vand.u32 %v904, 127
        %vm906 = vcmp.lt.s32.totalorder %v905, 20
        %v907 = vsel %vm906, 1, 0
        %vm908 = vcmp.eq.s32.totalorder %v907, 1
        %v909 = vsel %vm908, %v600, -inf
        %v910 = vsel %vm908, %v603, -inf
        %v911 = vsel %vm908, %v608, -inf
        %v912 = vsel %vm908, %v611, -inf
        %v913 = vsel %vm908, %v658, -inf
        %v914 = vsel %vm908, %v661, -inf
        %v915 = vsel %vm908, %v666, -inf
        %v916 = vsel %vm908, %v669, -inf
        %v917 = vsel %vm908, %v716, -inf
        %v918 = vsel %vm908, %v719, -inf
        %v919 = vsel %vm908, %v724, -inf
        %v920 = vsel %vm908, %v727, -inf
        %v921 = vsel %vm908, %v774, -inf
        %v922 = vsel %vm908, %v777, -inf
        %v923 = vsel %vm908, %v782, -inf
        %v924 = vsel %vm908, %v785, -inf
        %v925 = vsel %vm908, %v832, -inf
        %v926 = vsel %vm908, %v835, -inf
        %v927 = vsel %vm908, %v840, -inf
        %v928 = vsel %vm908, %v843, -inf
        %v929 = vsel %vm908, %v890, -inf
        %v930 = vsel %vm908, %v893, -inf
        %v931 = vsel %vm908, %v898, -inf
        %v932 = vsel %vm908, %v901, -inf
        %vm933 = vcmask 261120
        %v934 = vsel %vm933, %v909, -inf
        %935 = vmax.xlane.f32.xlu0 %v934
        %v936 = vpop.xlane.xlu0 %935
        %v937 = vsel %vm933, %v910, -inf
        %938 = vmax.xlane.f32.xlu0 %v937
        %v939 = vpop.xlane.xlu0 %938
        %v940 = vsel %vm933, %v911, -inf
        %941 = vmax.xlane.f32.xlu0 %v940
        %v942 = vpop.xlane.xlu0 %941
        %v943 = vsel %vm933, %v912, -inf
        %944 = vmax.xlane.f32.xlu0 %v943
        %v945 = vpop.xlane.xlu0 %944
        %v946 = vsel %vm933, %v913, -inf
        %947 = vmax.xlane.f32.xlu0 %v946
        %v948 = vpop.xlane.xlu0 %947
        %v949 = vsel %vm933, %v914, -inf
        %950 = vmax.xlane.f32.xlu0 %v949
        %v951 = vpop.xlane.xlu0 %950
        %v952 = vsel %vm933, %v915, -inf
        %953 = vmax.xlane.f32.xlu0 %v952
        %v954 = vpop.xlane.xlu0 %953
        %v955 = vsel %vm933, %v916, -inf
        %956 = vmax.xlane.f32.xlu0 %v955
        %v957 = vpop.xlane.xlu0 %956
        %v958 = vsel %vm933, %v917, -inf
        %959 = vmax.xlane.f32.xlu0 %v958
        %v960 = vpop.xlane.xlu0 %959
        %v961 = vsel %vm933, %v918, -inf
        %962 = vmax.xlane.f32.xlu0 %v961
        %v963 = vpop.xlane.xlu0 %962
        %v964 = vsel %vm933, %v919, -inf
        %965 = vmax.xlane.f32.xlu0 %v964
        %v966 = vpop.xlane.xlu0 %965
        %v967 = vsel %vm933, %v920, -inf
        %968 = vmax.xlane.f32.xlu0 %v967
        %v969 = vpop.xlane.xlu0 %968
        %v970 = vsel %vm933, %v921, -inf
        %971 = vmax.xlane.f32.xlu0 %v970
        %v972 = vpop.xlane.xlu0 %971
        %v973 = vsel %vm933, %v922, -inf
        %974 = vmax.xlane.f32.xlu0 %v973
        %v975 = vpop.xlane.xlu0 %974
        %v976 = vsel %vm933, %v923, -inf
        %977 = vmax.xlane.f32.xlu0 %v976
        %v978 = vpop.xlane.xlu0 %977
        %v979 = vsel %vm933, %v924, -inf
        %980 = vmax.xlane.f32.xlu0 %v979
        %v981 = vpop.xlane.xlu0 %980
        %v982 = vsel %vm933, %v925, -inf
        %983 = vmax.xlane.f32.xlu0 %v982
        %v984 = vpop.xlane.xlu0 %983
        %v985 = vsel %vm933, %v926, -inf
        %986 = vmax.xlane.f32.xlu0 %v985
        %v987 = vpop.xlane.xlu0 %986
        %v988 = vsel %vm933, %v927, -inf
        %989 = vmax.xlane.f32.xlu0 %v988
        %v990 = vpop.xlane.xlu0 %989
        %v991 = vsel %vm933, %v928, -inf
        %992 = vmax.xlane.f32.xlu0 %v991
        %v993 = vpop.xlane.xlu0 %992
        %v994 = vsel %vm933, %v929, -inf
        %995 = vmax.xlane.f32.xlu0 %v994
        %v996 = vpop.xlane.xlu0 %995
        %v997 = vsel %vm933, %v930, -inf
        %998 = vmax.xlane.f32.xlu0 %v997
        %v999 = vpop.xlane.xlu0 %998
        %v1000 = vsel %vm933, %v931, -inf
        %1001 = vmax.xlane.f32.xlu0 %v1000
        %v1002 = vpop.xlane.xlu0 %1001
        %v1003 = vsel %vm933, %v932, -inf
        %1004 = vmax.xlane.f32.xlu0 %v1003
        %v1005 = vpop.xlane.xlu0 %1004
        %v1006 = vsel %vm908, -inf, %v600
        %v1007 = vsel %vm908, -inf, %v603
        %v1008 = vsel %vm908, -inf, %v608
        %v1009 = vsel %vm908, -inf, %v611
        %v1010 = vsel %vm908, -inf, %v658
        %v1011 = vsel %vm908, -inf, %v661
        %v1012 = vsel %vm908, -inf, %v666
        %v1013 = vsel %vm908, -inf, %v669
        %v1014 = vsel %vm908, -inf, %v716
        %v1015 = vsel %vm908, -inf, %v719
        %v1016 = vsel %vm908, -inf, %v724
        %v1017 = vsel %vm908, -inf, %v727
        %v1018 = vsel %vm908, -inf, %v774
        %v1019 = vsel %vm908, -inf, %v777
        %v1020 = vsel %vm908, -inf, %v782
        %v1021 = vsel %vm908, -inf, %v785
        %v1022 = vsel %vm908, -inf, %v832
        %v1023 = vsel %vm908, -inf, %v835
        %v1024 = vsel %vm908, -inf, %v840
        %v1025 = vsel %vm908, -inf, %v843
        %v1026 = vsel %vm908, -inf, %v890
        %v1027 = vsel %vm908, -inf, %v893
        %v1028 = vsel %vm908, -inf, %v898
        %v1029 = vsel %vm908, -inf, %v901
        %v1030 = vsel %vm933, %v1006, -inf
        %1031 = vmax.xlane.f32.xlu0 %v1030
        %v1032 = vpop.xlane.xlu0 %1031
        %v1033 = vsel %vm933, %v1007, -inf
        %1034 = vmax.xlane.f32.xlu0 %v1033
        %v1035 = vpop.xlane.xlu0 %1034
        %v1036 = vsel %vm933, %v1008, -inf
        %1037 = vmax.xlane.f32.xlu0 %v1036
        %v1038 = vpop.xlane.xlu0 %1037
        %v1039 = vsel %vm933, %v1009, -inf
        %1040 = vmax.xlane.f32.xlu0 %v1039
        %v1041 = vpop.xlane.xlu0 %1040
        %v1042 = vsel %vm933, %v1010, -inf
        %1043 = vmax.xlane.f32.xlu0 %v1042
        %v1044 = vpop.xlane.xlu0 %1043
        %v1045 = vsel %vm933, %v1011, -inf
        %1046 = vmax.xlane.f32.xlu0 %v1045
        %v1047 = vpop.xlane.xlu0 %1046
        %v1048 = vsel %vm933, %v1012, -inf
        %1049 = vmax.xlane.f32.xlu0 %v1048
        %v1050 = vpop.xlane.xlu0 %1049
        %v1051 = vsel %vm933, %v1013, -inf
        %1052 = vmax.xlane.f32.xlu0 %v1051
        %v1053 = vpop.xlane.xlu0 %1052
        %v1054 = vsel %vm933, %v1014, -inf
        %1055 = vmax.xlane.f32.xlu0 %v1054
        %v1056 = vpop.xlane.xlu0 %1055
        %v1057 = vsel %vm933, %v1015, -inf
        %1058 = vmax.xlane.f32.xlu0 %v1057
        %v1059 = vpop.xlane.xlu0 %1058
        %v1060 = vsel %vm933, %v1016, -inf
        %1061 = vmax.xlane.f32.xlu0 %v1060
        %v1062 = vpop.xlane.xlu0 %1061
        %v1063 = vsel %vm933, %v1017, -inf
        %1064 = vmax.xlane.f32.xlu0 %v1063
        %v1065 = vpop.xlane.xlu0 %1064
        %v1066 = vsel %vm933, %v1018, -inf
        %1067 = vmax.xlane.f32.xlu0 %v1066
        %v1068 = vpop.xlane.xlu0 %1067
        %v1069 = vsel %vm933, %v1019, -inf
        %1070 = vmax.xlane.f32.xlu0 %v1069
        %v1071 = vpop.xlane.xlu0 %1070
        %v1072 = vsel %vm933, %v1020, -inf
        %1073 = vmax.xlane.f32.xlu0 %v1072
        %v1074 = vpop.xlane.xlu0 %1073
        %v1075 = vsel %vm933, %v1021, -inf
        %1076 = vmax.xlane.f32.xlu0 %v1075
        %v1077 = vpop.xlane.xlu0 %1076
        %v1078 = vsel %vm933, %v1022, -inf
        %1079 = vmax.xlane.f32.xlu0 %v1078
        %v1080 = vpop.xlane.xlu0 %1079
        %v1081 = vsel %vm933, %v1023, -inf
        %1082 = vmax.xlane.f32.xlu0 %v1081
        %v1083 = vpop.xlane.xlu0 %1082
        %v1084 = vsel %vm933, %v1024, -inf
        %1085 = vmax.xlane.f32.xlu0 %v1084
        %v1086 = vpop.xlane.xlu0 %1085
        %v1087 = vsel %vm933, %v1025, -inf
        %1088 = vmax.xlane.f32.xlu0 %v1087
        %v1089 = vpop.xlane.xlu0 %1088
        %v1090 = vsel %vm933, %v1026, -inf
        %1091 = vmax.xlane.f32.xlu0 %v1090
        %v1092 = vpop.xlane.xlu0 %1091
        %v1093 = vsel %vm933, %v1027, -inf
        %1094 = vmax.xlane.f32.xlu0 %v1093
        %v1095 = vpop.xlane.xlu0 %1094
        %v1096 = vsel %vm933, %v1028, -inf
        %1097 = vmax.xlane.f32.xlu0 %v1096
        %v1098 = vpop.xlane.xlu0 %1097
        %v1099 = vsel %vm933, %v1029, -inf
        %1100 = vmax.xlane.f32.xlu0 %v1099
        %v1101 = vpop.xlane.xlu0 %1100
        %v1102 = vsel %vm908, %v936, %v1032
        %v1103 = vsel %vm908, %v939, %v1035
        %v1104 = vsel %vm908, %v942, %v1038
        %v1105 = vsel %vm908, %v945, %v1041
        %v1106 = vsel %vm908, %v948, %v1044
        %v1107 = vsel %vm908, %v951, %v1047
        %v1108 = vsel %vm908, %v954, %v1050
        %v1109 = vsel %vm908, %v957, %v1053
        %v1110 = vsel %vm908, %v960, %v1056
        %v1111 = vsel %vm908, %v963, %v1059
        %v1112 = vsel %vm908, %v966, %v1062
        %v1113 = vsel %vm908, %v969, %v1065
        %v1114 = vsel %vm908, %v972, %v1068
        %v1115 = vsel %vm908, %v975, %v1071
        %v1116 = vsel %vm908, %v978, %v1074
        %v1117 = vsel %vm908, %v981, %v1077
        %v1118 = vsel %vm908, %v984, %v1080
        %v1119 = vsel %vm908, %v987, %v1083
        %v1120 = vsel %vm908, %v990, %v1086
        %v1121 = vsel %vm908, %v993, %v1089
        %v1122 = vsel %vm908, %v996, %v1092
        %v1123 = vsel %vm908, %v999, %v1095
        %v1124 = vsel %vm908, %v1002, %v1098
        %v1125 = vsel %vm908, %v1005, %v1101
        %v1126 = vsub.f32 %v600, %v1102
        %v1127 = vsub.f32 %v603, %v1103
        %v1128 = vsub.f32 %v608, %v1104
        %v1129 = vsub.f32 %v611, %v1105
        %v1130 = vsub.f32 %v658, %v1106
        %v1131 = vsub.f32 %v661, %v1107
        %v1132 = vsub.f32 %v666, %v1108
        %v1133 = vsub.f32 %v669, %v1109
        %v1134 = vsub.f32 %v716, %v1110
        %v1135 = vsub.f32 %v719, %v1111
        %v1136 = vsub.f32 %v724, %v1112
        %v1137 = vsub.f32 %v727, %v1113
        %v1138 = vsub.f32 %v774, %v1114
        %v1139 = vsub.f32 %v777, %v1115
        %v1140 = vsub.f32 %v782, %v1116
        %v1141 = vsub.f32 %v785, %v1117
        %v1142 = vsub.f32 %v832, %v1118
        %v1143 = vsub.f32 %v835, %v1119
        %v1144 = vsub.f32 %v840, %v1120
        %v1145 = vsub.f32 %v843, %v1121
        %v1146 = vsub.f32 %v890, %v1122
        %v1147 = vsub.f32 %v893, %v1123
        %v1148 = vsub.f32 %v898, %v1124
        %v1149 = vsub.f32 %v901, %v1125
        %v1150 = vmul.f32 %v1126, 1.442695
        %v1151 = vpow.pop %v1150
        %v1152 = vmul.f32 %v1127, 1.442695
        %v1153 = vpow.pop %v1152
        %v1154 = vmul.f32 %v1128, 1.442695
        %v1155 = vpow.pop %v1154
        %v1156 = vmul.f32 %v1129, 1.442695
        %v1157 = vpow.pop %v1156
        %v1158 = vmul.f32 %v1130, 1.442695
        %v1159 = vpow.pop %v1158
        %v1160 = vmul.f32 %v1131, 1.442695
        %v1161 = vpow.pop %v1160
        %v1162 = vmul.f32 %v1132, 1.442695
        %v1163 = vpow.pop %v1162
        %v1164 = vmul.f32 %v1133, 1.442695
        %v1165 = vpow.pop %v1164
        %v1166 = vmul.f32 %v1134, 1.442695
        %v1167 = vpow.pop %v1166
        %v1168 = vmul.f32 %v1135, 1.442695
        %v1169 = vpow.pop %v1168
        %v1170 = vmul.f32 %v1136, 1.442695
        %v1171 = vpow.pop %v1170
        %v1172 = vmul.f32 %v1137, 1.442695
        %v1173 = vpow.pop %v1172
        %v1174 = vmul.f32 %v1138, 1.442695
        %v1175 = vpow.pop %v1174
        %v1176 = vmul.f32 %v1139, 1.442695
        %v1177 = vpow.pop %v1176
        %v1178 = vmul.f32 %v1140, 1.442695
        %v1179 = vpow.pop %v1178
        %v1180 = vmul.f32 %v1141, 1.442695
        %v1181 = vpow.pop %v1180
        %v1182 = vmul.f32 %v1142, 1.442695
        %v1183 = vpow.pop %v1182
        %v1184 = vmul.f32 %v1143, 1.442695
        %v1185 = vpow.pop %v1184
        %v1186 = vmul.f32 %v1144, 1.442695
        %v1187 = vpow.pop %v1186
        %v1188 = vmul.f32 %v1145, 1.442695
        %v1189 = vpow.pop %v1188
        %v1190 = vmul.f32 %v1146, 1.442695
        %v1191 = vpow.pop %v1190
        %v1192 = vmul.f32 %v1147, 1.442695
        %v1193 = vpow.pop %v1192
        %v1194 = vmul.f32 %v1148, 1.442695
        %v1195 = vpow.pop %v1194
        %v1196 = vmul.f32 %v1149, 1.442695
        %v1197 = vpow.pop %v1196
        %v1198 = vsel %vm908, %v1151, 0.0
        %v1199 = vsel %vm908, %v1153, 0.0
        %v1200 = vsel %vm908, %v1155, 0.0
        %v1201 = vsel %vm908, %v1157, 0.0
        %v1202 = vsel %vm908, %v1159, 0.0
        %v1203 = vsel %vm908, %v1161, 0.0
        %v1204 = vsel %vm908, %v1163, 0.0
        %v1205 = vsel %vm908, %v1165, 0.0
        %v1206 = vsel %vm908, %v1167, 0.0
        %v1207 = vsel %vm908, %v1169, 0.0
        %v1208 = vsel %vm908, %v1171, 0.0
        %v1209 = vsel %vm908, %v1173, 0.0
        %v1210 = vsel %vm908, %v1175, 0.0
        %v1211 = vsel %vm908, %v1177, 0.0
        %v1212 = vsel %vm908, %v1179, 0.0
        %v1213 = vsel %vm908, %v1181, 0.0
        %v1214 = vsel %vm908, %v1183, 0.0
        %v1215 = vsel %vm908, %v1185, 0.0
        %v1216 = vsel %vm908, %v1187, 0.0
        %v1217 = vsel %vm908, %v1189, 0.0
        %v1218 = vsel %vm908, %v1191, 0.0
        %v1219 = vsel %vm908, %v1193, 0.0
        %v1220 = vsel %vm908, %v1195, 0.0
        %v1221 = vsel %vm908, %v1197, 0.0
        %v1222 = vsel %vm933, %v1198, 0.0
        %1223 = vadd.xlane.f32.xlu0 %v1222
        %v1224 = vpop.xlane.xlu0 %1223
        %v1225 = vsel %vm933, %v1199, 0.0
        %1226 = vadd.xlane.f32.xlu0 %v1225
        %v1227 = vpop.xlane.xlu0 %1226
        %v1228 = vsel %vm933, %v1200, 0.0
        %1229 = vadd.xlane.f32.xlu0 %v1228
        %v1230 = vpop.xlane.xlu0 %1229
        %v1231 = vsel %vm933, %v1201, 0.0
        %1232 = vadd.xlane.f32.xlu0 %v1231
        %v1233 = vpop.xlane.xlu0 %1232
        %v1234 = vsel %vm933, %v1202, 0.0
        %1235 = vadd.xlane.f32.xlu0 %v1234
        %v1236 = vpop.xlane.xlu0 %1235
        %v1237 = vsel %vm933, %v1203, 0.0
        %1238 = vadd.xlane.f32.xlu0 %v1237
        %v1239 = vpop.xlane.xlu0 %1238
        %v1240 = vsel %vm933, %v1204, 0.0
        %1241 = vadd.xlane.f32.xlu0 %v1240
        %v1242 = vpop.xlane.xlu0 %1241
        %v1243 = vsel %vm933, %v1205, 0.0
        %1244 = vadd.xlane.f32.xlu0 %v1243
        %v1245 = vpop.xlane.xlu0 %1244
        %v1246 = vsel %vm933, %v1206, 0.0
        %1247 = vadd.xlane.f32.xlu0 %v1246
        %v1248 = vpop.xlane.xlu0 %1247
        %v1249 = vsel %vm933, %v1207, 0.0
        %1250 = vadd.xlane.f32.xlu0 %v1249
        %v1251 = vpop.xlane.xlu0 %1250
        %v1252 = vsel %vm933, %v1208, 0.0
        %1253 = vadd.xlane.f32.xlu0 %v1252
        %v1254 = vpop.xlane.xlu0 %1253
        %v1255 = vsel %vm933, %v1209, 0.0
        %1256 = vadd.xlane.f32.xlu0 %v1255
        %v1257 = vpop.xlane.xlu0 %1256
        %v1258 = vsel %vm933, %v1210, 0.0
        %1259 = vadd.xlane.f32.xlu0 %v1258
        %v1260 = vpop.xlane.xlu0 %1259
        %v1261 = vsel %vm933, %v1211, 0.0
        %1262 = vadd.xlane.f32.xlu0 %v1261
        %v1263 = vpop.xlane.xlu0 %1262
        %v1264 = vsel %vm933, %v1212, 0.0
        %1265 = vadd.xlane.f32.xlu0 %v1264
        %v1266 = vpop.xlane.xlu0 %1265
        %v1267 = vsel %vm933, %v1213, 0.0
        %1268 = vadd.xlane.f32.xlu0 %v1267
        %v1269 = vpop.xlane.xlu0 %1268
        %v1270 = vsel %vm933, %v1214, 0.0
        %1271 = vadd.xlane.f32.xlu0 %v1270
        %v1272 = vpop.xlane.xlu0 %1271
        %v1273 = vsel %vm933, %v1215, 0.0
        %1274 = vadd.xlane.f32.xlu0 %v1273
        %v1275 = vpop.xlane.xlu0 %1274
        %v1276 = vsel %vm933, %v1216, 0.0
        %1277 = vadd.xlane.f32.xlu0 %v1276
        %v1278 = vpop.xlane.xlu0 %1277
        %v1279 = vsel %vm933, %v1217, 0.0
        %1280 = vadd.xlane.f32.xlu0 %v1279
        %v1281 = vpop.xlane.xlu0 %1280
        %v1282 = vsel %vm933, %v1218, 0.0
        %1283 = vadd.xlane.f32.xlu0 %v1282
        %v1284 = vpop.xlane.xlu0 %1283
        %v1285 = vsel %vm933, %v1219, 0.0
        %1286 = vadd.xlane.f32.xlu0 %v1285
        %v1287 = vpop.xlane.xlu0 %1286
        %v1288 = vsel %vm933, %v1220, 0.0
        %1289 = vadd.xlane.f32.xlu0 %v1288
        %v1290 = vpop.xlane.xlu0 %1289
        %v1291 = vsel %vm933, %v1221, 0.0
        %1292 = vadd.xlane.f32.xlu0 %v1291
        %v1293 = vpop.xlane.xlu0 %1292
        %v1294 = vsel %vm908, 0.0, %v1151
        %v1295 = vsel %vm908, 0.0, %v1153
        %v1296 = vsel %vm908, 0.0, %v1155
        %v1297 = vsel %vm908, 0.0, %v1157
        %v1298 = vsel %vm908, 0.0, %v1159
        %v1299 = vsel %vm908, 0.0, %v1161
        %v1300 = vsel %vm908, 0.0, %v1163
        %v1301 = vsel %vm908, 0.0, %v1165
        %v1302 = vsel %vm908, 0.0, %v1167
        %v1303 = vsel %vm908, 0.0, %v1169
        %v1304 = vsel %vm908, 0.0, %v1171
        %v1305 = vsel %vm908, 0.0, %v1173
        %v1306 = vsel %vm908, 0.0, %v1175
        %v1307 = vsel %vm908, 0.0, %v1177
        %v1308 = vsel %vm908, 0.0, %v1179
        %v1309 = vsel %vm908, 0.0, %v1181
        %v1310 = vsel %vm908, 0.0, %v1183
        %v1311 = vsel %vm908, 0.0, %v1185
        %v1312 = vsel %vm908, 0.0, %v1187
        %v1313 = vsel %vm908, 0.0, %v1189
        %v1314 = vsel %vm908, 0.0, %v1191
        %v1315 = vsel %vm908, 0.0, %v1193
        %v1316 = vsel %vm908, 0.0, %v1195
        %v1317 = vsel %vm908, 0.0, %v1197
        %v1318 = vsel %vm933, %v1294, 0.0
        %1319 = vadd.xlane.f32.xlu0 %v1318
        %v1320 = vpop.xlane.xlu0 %1319
        %v1321 = vsel %vm933, %v1295, 0.0
        %1322 = vadd.xlane.f32.xlu0 %v1321
        %v1323 = vpop.xlane.xlu0 %1322
        %v1324 = vsel %vm933, %v1296, 0.0
        %1325 = vadd.xlane.f32.xlu0 %v1324
        %v1326 = vpop.xlane.xlu0 %1325
        %v1327 = vsel %vm933, %v1297, 0.0
        %1328 = vadd.xlane.f32.xlu0 %v1327
        %v1329 = vpop.xlane.xlu0 %1328
        %v1330 = vsel %vm933, %v1298, 0.0
        %1331 = vadd.xlane.f32.xlu0 %v1330
        %v1332 = vpop.xlane.xlu0 %1331
        %v1333 = vsel %vm933, %v1299, 0.0
        %1334 = vadd.xlane.f32.xlu0 %v1333
        %v1335 = vpop.xlane.xlu0 %1334
        %v1336 = vsel %vm933, %v1300, 0.0
        %1337 = vadd.xlane.f32.xlu0 %v1336
        %v1338 = vpop.xlane.xlu0 %1337
        %v1339 = vsel %vm933, %v1301, 0.0
        %1340 = vadd.xlane.f32.xlu0 %v1339
        %v1341 = vpop.xlane.xlu0 %1340
        %v1342 = vsel %vm933, %v1302, 0.0
        %1343 = vadd.xlane.f32.xlu0 %v1342
        %v1344 = vpop.xlane.xlu0 %1343
        %v1345 = vsel %vm933, %v1303, 0.0
        %1346 = vadd.xlane.f32.xlu0 %v1345
        %v1347 = vpop.xlane.xlu0 %1346
        %v1348 = vsel %vm933, %v1304, 0.0
        %1349 = vadd.xlane.f32.xlu0 %v1348
        %v1350 = vpop.xlane.xlu0 %1349
        %v1351 = vsel %vm933, %v1305, 0.0
        %1352 = vadd.xlane.f32.xlu0 %v1351
        %v1353 = vpop.xlane.xlu0 %1352
        %v1354 = vsel %vm933, %v1306, 0.0
        %1355 = vadd.xlane.f32.xlu0 %v1354
        %v1356 = vpop.xlane.xlu0 %1355
        %v1357 = vsel %vm933, %v1307, 0.0
        %1358 = vadd.xlane.f32.xlu0 %v1357
        %v1359 = vpop.xlane.xlu0 %1358
        %v1360 = vsel %vm933, %v1308, 0.0
        %1361 = vadd.xlane.f32.xlu0 %v1360
        %v1362 = vpop.xlane.xlu0 %1361
        %v1363 = vsel %vm933, %v1309, 0.0
        %1364 = vadd.xlane.f32.xlu0 %v1363
        %v1365 = vpop.xlane.xlu0 %1364
        %v1366 = vsel %vm933, %v1310, 0.0
        %1367 = vadd.xlane.f32.xlu0 %v1366
        %v1368 = vpop.xlane.xlu0 %1367
        %v1369 = vsel %vm933, %v1311, 0.0
        %1370 = vadd.xlane.f32.xlu0 %v1369
        %v1371 = vpop.xlane.xlu0 %1370
        %v1372 = vsel %vm933, %v1312, 0.0
        %1373 = vadd.xlane.f32.xlu0 %v1372
        %v1374 = vpop.xlane.xlu0 %1373
        %v1375 = vsel %vm933, %v1313, 0.0
        %1376 = vadd.xlane.f32.xlu0 %v1375
        %v1377 = vpop.xlane.xlu0 %1376
        %v1378 = vsel %vm933, %v1314, 0.0
        %1379 = vadd.xlane.f32.xlu0 %v1378
        %v1380 = vpop.xlane.xlu0 %1379
        %v1381 = vsel %vm933, %v1315, 0.0
        %1382 = vadd.xlane.f32.xlu0 %v1381
        %v1383 = vpop.xlane.xlu0 %1382
        %v1384 = vsel %vm933, %v1316, 0.0
        %1385 = vadd.xlane.f32.xlu0 %v1384
        %v1386 = vpop.xlane.xlu0 %1385
        %v1387 = vsel %vm933, %v1317, 0.0
        %1388 = vadd.xlane.f32.xlu0 %v1387
        %v1389 = vpop.xlane.xlu0 %1388
        %v1390 = vsel %vm908, %v1224, %v1320
        %v1391 = vsel %vm908, %v1227, %v1323
        %v1392 = vsel %vm908, %v1230, %v1326
        %v1393 = vsel %vm908, %v1233, %v1329
        %v1394 = vsel %vm908, %v1236, %v1332
        %v1395 = vsel %vm908, %v1239, %v1335
        %v1396 = vsel %vm908, %v1242, %v1338
        %v1397 = vsel %vm908, %v1245, %v1341
        %v1398 = vsel %vm908, %v1248, %v1344
        %v1399 = vsel %vm908, %v1251, %v1347
        %v1400 = vsel %vm908, %v1254, %v1350
        %v1401 = vsel %vm908, %v1257, %v1353
        %v1402 = vsel %vm908, %v1260, %v1356
        %v1403 = vsel %vm908, %v1263, %v1359
        %v1404 = vsel %vm908, %v1266, %v1362
        %v1405 = vsel %vm908, %v1269, %v1365
        %v1406 = vsel %vm908, %v1272, %v1368
        %v1407 = vsel %vm908, %v1275, %v1371
        %v1408 = vsel %vm908, %v1278, %v1374
        %v1409 = vsel %vm908, %v1281, %v1377
        %v1410 = vsel %vm908, %v1284, %v1380
        %v1411 = vsel %vm908, %v1287, %v1383
        %v1412 = vsel %vm908, %v1290, %v1386
        %v1413 = vsel %vm908, %v1293, %v1389
        %v1414 = vrcp.pop %v1390
        %v1415 = vmul.f32 %v1151, %v1414
        %v1416 = vrcp.pop %v1391
        %v1417 = vmul.f32 %v1153, %v1416
        %v1418 = vrcp.pop %v1392
        %v1419 = vmul.f32 %v1155, %v1418
        %v1420 = vrcp.pop %v1393
        %v1421 = vmul.f32 %v1157, %v1420
        %v1422 = vrcp.pop %v1394
        %v1423 = vmul.f32 %v1159, %v1422
        %v1424 = vrcp.pop %v1395
        %v1425 = vmul.f32 %v1161, %v1424
        %v1426 = vrcp.pop %v1396
        %v1427 = vmul.f32 %v1163, %v1426
        %v1428 = vrcp.pop %v1397
        %v1429 = vmul.f32 %v1165, %v1428
        %v1430 = vrcp.pop %v1398
        %v1431 = vmul.f32 %v1167, %v1430
        %v1432 = vrcp.pop %v1399
        %v1433 = vmul.f32 %v1169, %v1432
        %v1434 = vrcp.pop %v1400
        %v1435 = vmul.f32 %v1171, %v1434
        %v1436 = vrcp.pop %v1401
        %v1437 = vmul.f32 %v1173, %v1436
        %v1438 = vrcp.pop %v1402
        %v1439 = vmul.f32 %v1175, %v1438
        %v1440 = vrcp.pop %v1403
        %v1441 = vmul.f32 %v1177, %v1440
        %v1442 = vrcp.pop %v1404
        %v1443 = vmul.f32 %v1179, %v1442
        %v1444 = vrcp.pop %v1405
        %v1445 = vmul.f32 %v1181, %v1444
        %v1446 = vrcp.pop %v1406
        %v1447 = vmul.f32 %v1183, %v1446
        %v1448 = vrcp.pop %v1407
        %v1449 = vmul.f32 %v1185, %v1448
        %v1450 = vrcp.pop %v1408
        %v1451 = vmul.f32 %v1187, %v1450
        %v1452 = vrcp.pop %v1409
        %v1453 = vmul.f32 %v1189, %v1452
        %v1454 = vrcp.pop %v1410
        %v1455 = vmul.f32 %v1191, %v1454
        %v1456 = vrcp.pop %v1411
        %v1457 = vmul.f32 %v1193, %v1456
        %v1458 = vrcp.pop %v1412
        %v1459 = vmul.f32 %v1195, %v1458
        %v1460 = vrcp.pop %v1413
        %v1461 = vmul.f32 %v1197, %v1460
        %1462 = vst.msk [vmem:[%s282] sm:$0xff] %vm933, %v1415
        %1463 = vst.msk [vmem:[%s282 + $0x8] sm:$0xff] %vm933, %v1417
        %1464 = vst.msk [vmem:[%s282 + $0x10] sm:$0xff] %vm933, %v1419
        %1465 = vst.msk [vmem:[%s282 + $0x18] sm:$0xff] %vm933, %v1421
        %1466 = vst.msk [vmem:[%s282 + $0x20] sm:$0xff] %vm933, %v1423
        %1467 = vst.msk [vmem:[%s282 + $0x28] sm:$0xff] %vm933, %v1425
        %1468 = vst.msk [vmem:[%s282 + $0x30] sm:$0xff] %vm933, %v1427
        %1469 = vst.msk [vmem:[%s282 + $0x38] sm:$0xff] %vm933, %v1429
        %1470 = vst.msk [vmem:[%s282 + $0x40] sm:$0xff] %vm933, %v1431
        %1471 = vst.msk [vmem:[%s282 + $0x48] sm:$0xff] %vm933, %v1433
        %1472 = vst.msk [vmem:[%s282 + $0x50] sm:$0xff] %vm933, %v1435
        %1473 = vst.msk [vmem:[%s282 + $0x58] sm:$0xff] %vm933, %v1437
        %1474 = vst.msk [vmem:[%s282 + $0x60] sm:$0xff] %vm933, %v1439
        %1475 = vst.msk [vmem:[%s282 + $0x68] sm:$0xff] %vm933, %v1441
        %1476 = vst.msk [vmem:[%s282 + $0x70] sm:$0xff] %vm933, %v1443
        %1477 = vst.msk [vmem:[%s282 + $0x78] sm:$0xff] %vm933, %v1445
        %1478 = vst.msk [vmem:[%s282 + $0x80] sm:$0xff] %vm933, %v1447
        %1479 = vst.msk [vmem:[%s282 + $0x88] sm:$0xff] %vm933, %v1449
        %1480 = vst.msk [vmem:[%s282 + $0x90] sm:$0xff] %vm933, %v1451
        %1481 = vst.msk [vmem:[%s282 + $0x98] sm:$0xff] %vm933, %v1453
        %1482 = vst.msk [vmem:[%s282 + $0xa0] sm:$0xff] %vm933, %v1455
        %1483 = vst.msk [vmem:[%s282 + $0xa8] sm:$0xff] %vm933, %v1457
        %1484 = vst.msk [vmem:[%s282 + $0xb0] sm:$0xff] %vm933, %v1459
        %1485 = vst.msk [vmem:[%s282 + $0xb8] sm:$0xff] %vm933, %v1461
        %v1486 = vpack.c.bf16 %v1417, %v1415
        %v1487 = vpack.c.bf16 %v1421, %v1419
        %v1488 = vpack.c.bf16 %v1425, %v1423
        %v1489 = vpack.c.bf16 %v1429, %v1427
        %v1490 = vpack.c.bf16 %v1433, %v1431
        %v1491 = vpack.c.bf16 %v1437, %v1435
        %v1492 = vpack.c.bf16 %v1441, %v1439
        %v1493 = vpack.c.bf16 %v1445, %v1443
        %v1494 = vpack.c.bf16 %v1449, %v1447
        %v1495 = vpack.c.bf16 %v1453, %v1451
        %v1496 = vpack.c.bf16 %v1457, %v1455
        %v1497 = vpack.c.bf16 %v1461, %v1459
        %1498 = vrot.lane.b32.xlu0 %v386, 32
        %v1499 = vpop.permute.xlu0 %1498
        %1500 = vrot.lane.b32.xlu0 %v388, 32
        %v1501 = vpop.permute.xlu0 %1500
        %1502 = vrot.lane.b32.xlu0 %v393, 32
        %v1503 = vpop.permute.xlu0 %1502
        %1504 = vrot.lane.b32.xlu0 %v395, 32
        %v1505 = vpop.permute.xlu0 %1504
        %1506 = vrot.lane.b32.xlu0 %v397, 32
        %v1507 = vpop.permute.xlu0 %1506
        %1508 = vrot.lane.b32.xlu0 %v399, 32
        %v1509 = vpop.permute.xlu0 %1508
        %1510 = vrot.lane.b32.xlu0 %v401, 32
        %v1511 = vpop.permute.xlu0 %1510
        %1512 = vrot.lane.b32.xlu0 %v403, 32
        %v1513 = vpop.permute.xlu0 %1512
        %1514 = vrot.lane.b32.xlu0 %v415, 32
        %v1515 = vpop.permute.xlu0 %1514
        %1516 = vrot.lane.b32.xlu0 %v417, 32
        %v1517 = vpop.permute.xlu0 %1516
        %1518 = vrot.lane.b32.xlu0 %v419, 32
        %v1519 = vpop.permute.xlu0 %1518
        %1520 = vrot.lane.b32.xlu0 %v421, 32
        %v1521 = vpop.permute.xlu0 %1520
        %1534 = vxpose.xlu0.c.b16.start [1/8] %v1499, 128
        %1535 = vxpose.xlu0.c.b16.cont [2/8] %v1501, 128
        %1536 = vxpose.xlu0.c.b16.cont [3/8] 0, 128
        %1537 = vxpose.xlu0.c.b16.cont [4/8] 0, 128
        %1538 = vxpose.xlu0.c.b16.cont [5/8] 0, 128
        %1539 = vxpose.xlu0.c.b16.cont [6/8] 0, 128
        %1540 = vxpose.xlu0.c.b16.cont [7/8] 0, 128
        %1541 = vxpose.xlu0.c.b16.end [8/8] 0, 128
        %v1542 = vpop.trf.xlu0
        %v1543 = vpop.trf.xlu0
        %v1544 = vpop.trf.xlu0
        %v1545 = vpop.trf.xlu0
        %v1546 = vpop.trf.xlu0
        %v1547 = vpop.trf.xlu0
        %v1548 = vpop.trf.xlu0
        %v1549 = vpop.trf.xlu0
        %1550 = vxpose.xlu0.c.b16.start [1/8] %v1503, 128
        %1551 = vxpose.xlu0.c.b16.cont [2/8] %v1505, 128
        %1552 = vxpose.xlu0.c.b16.cont [3/8] 0, 128
        %1553 = vxpose.xlu0.c.b16.cont [4/8] 0, 128
        %1554 = vxpose.xlu0.c.b16.cont [5/8] 0, 128
        %1555 = vxpose.xlu0.c.b16.cont [6/8] 0, 128
        %1556 = vxpose.xlu0.c.b16.cont [7/8] 0, 128
        %1557 = vxpose.xlu0.c.b16.end [8/8] 0, 128
        %v1558 = vpop.trf.xlu0
        %v1559 = vpop.trf.xlu0
        %v1560 = vpop.trf.xlu0
        %v1561 = vpop.trf.xlu0
        %v1562 = vpop.trf.xlu0
        %v1563 = vpop.trf.xlu0
        %v1564 = vpop.trf.xlu0
        %v1565 = vpop.trf.xlu0
        %1566 = vxpose.xlu0.c.b16.start [1/8] %v1507, 128
        %1567 = vxpose.xlu0.c.b16.cont [2/8] %v1509, 128
        %1568 = vxpose.xlu0.c.b16.cont [3/8] 0, 128
        %1569 = vxpose.xlu0.c.b16.cont [4/8] 0, 128
        %1570 = vxpose.xlu0.c.b16.cont [5/8] 0, 128
        %1571 = vxpose.xlu0.c.b16.cont [6/8] 0, 128
        %1572 = vxpose.xlu0.c.b16.cont [7/8] 0, 128
        %1573 = vxpose.xlu0.c.b16.end [8/8] 0, 128
        %v1574 = vpop.trf.xlu0
        %v1575 = vpop.trf.xlu0
        %v1576 = vpop.trf.xlu0
        %v1577 = vpop.trf.xlu0
        %v1578 = vpop.trf.xlu0
        %v1579 = vpop.trf.xlu0
        %v1580 = vpop.trf.xlu0
        %v1581 = vpop.trf.xlu0
        %1582 = vxpose.xlu0.c.b16.start [1/8] %v1511, 128
        %1583 = vxpose.xlu0.c.b16.cont [2/8] %v1513, 128
        %1584 = vxpose.xlu0.c.b16.cont [3/8] 0, 128
        %1585 = vxpose.xlu0.c.b16.cont [4/8] 0, 128
        %1586 = vxpose.xlu0.c.b16.cont [5/8] 0, 128
        %1587 = vxpose.xlu0.c.b16.cont [6/8] 0, 128
        %1588 = vxpose.xlu0.c.b16.cont [7/8] 0, 128
        %1589 = vxpose.xlu0.c.b16.end [8/8] 0, 128
        %v1590 = vpop.trf.xlu0
        %v1591 = vpop.trf.xlu0
        %v1592 = vpop.trf.xlu0
        %v1593 = vpop.trf.xlu0
        %v1594 = vpop.trf.xlu0
        %v1595 = vpop.trf.xlu0
        %v1596 = vpop.trf.xlu0
        %v1597 = vpop.trf.xlu0
        %1598 = vxpose.xlu0.c.b16.start [1/8] %v1515, 128
        %1599 = vxpose.xlu0.c.b16.cont [2/8] %v1517, 128
        %1600 = vxpose.xlu0.c.b16.cont [3/8] 0, 128
        %1601 = vxpose.xlu0.c.b16.cont [4/8] 0, 128
        %1602 = vxpose.xlu0.c.b16.cont [5/8] 0, 128
        %1603 = vxpose.xlu0.c.b16.cont [6/8] 0, 128
        %1604 = vxpose.xlu0.c.b16.cont [7/8] 0, 128
        %1605 = vxpose.xlu0.c.b16.end [8/8] 0, 128
        %v1606 = vpop.trf.xlu0
        %v1607 = vpop.trf.xlu0
        %v1608 = vpop.trf.xlu0
        %v1609 = vpop.trf.xlu0
        %v1610 = vpop.trf.xlu0
        %v1611 = vpop.trf.xlu0
        %v1612 = vpop.trf.xlu0
        %v1613 = vpop.trf.xlu0
        %1614 = vxpose.xlu0.c.b16.start [1/8] %v1519, 128
        %1615 = vxpose.xlu0.c.b16.cont [2/8] %v1521, 128
        %1616 = vxpose.xlu0.c.b16.cont [3/8] 0, 128
        %1617 = vxpose.xlu0.c.b16.cont [4/8] 0, 128
        %1618 = vxpose.xlu0.c.b16.cont [5/8] 0, 128
        %1619 = vxpose.xlu0.c.b16.cont [6/8] 0, 128
        %1620 = vxpose.xlu0.c.b16.cont [7/8] 0, 128
        %1621 = vxpose.xlu0.c.b16.end [8/8] 0, 128
        %v1622 = vpop.trf.xlu0
        %v1623 = vpop.trf.xlu0
        %v1624 = vpop.trf.xlu0
        %v1625 = vpop.trf.xlu0
        %v1626 = vpop.trf.xlu0
        %v1627 = vpop.trf.xlu0
        %v1628 = vpop.trf.xlu0
        %v1629 = vpop.trf.xlu0
        %v1631 = vsel %vm933, %v1542, 0
        %v1634 = vsel %vm933, %v1486, 0
        %v1637 = vsel %vm933, %v1487, 0
        %1639 = vmatprep.subr.bf16.mxu0 0
        %1640 = vmatpush1.bf16.xpose.msra.mxu0 %v1634
        %1641 = vmatprep.subr.bf16.mxu0 0
        %1642 = vmatpush1.bf16.xpose.msra.mxu0 %v1637
        %1643 = vmatprep.subr.bf16.mxu0 0
        %1644 = vmatpush1.bf16.xpose.msra.mxu0 0
        %1645 = vmatprep.subr.bf16.mxu0 0
        %1646 = vmatpush1.bf16.xpose.msra.mxu0 0
        %1647 = vmatprep.subr.bf16.mxu0 0
        %1648 = vmatpush1.bf16.xpose.msra.mxu0 0
        %1649 = vmatprep.subr.bf16.mxu0 0
        %1650 = vmatpush1.bf16.xpose.msra.mxu0 0
        %1651 = vmatprep.subr.bf16.mxu0 0
        %1652 = vmatpush1.bf16.xpose.msra.mxu0 0
        %1653 = vmatprep.subr.bf16.mxu0 0
        %1654 = vmatpush1.bf16.xpose.msra.mxu0 0
        %1655 = vmatprep.subr.bf16.mxu0 0
        %1656 = vmatpush1.bf16.xpose.msra.mxu0 0
        %1657 = vmatprep.subr.bf16.mxu0 0
        %1658 = vmatpush1.bf16.xpose.msra.mxu0 0
        %1659 = vmatprep.subr.bf16.mxu0 0
        %1660 = vmatpush1.bf16.xpose.msra.mxu0 0
        %1661 = vmatprep.subr.bf16.mxu0 0
        %1662 = vmatpush1.bf16.xpose.msra.mxu0 0
        %1663 = vmatprep.subr.bf16.mxu0 0
        %1664 = vmatpush1.bf16.xpose.msra.mxu0 0
        %1665 = vmatprep.subr.bf16.mxu0 0
        %1666 = vmatpush1.bf16.xpose.msra.mxu0 0
        %1667 = vmatprep.subr.bf16.mxu0 0
        %1668 = vmatpush1.bf16.xpose.msra.mxu0 0
        %1669 = vmatprep.subr.bf16.mxu0 0
        %1670 = vmatpush1.bf16.xpose.msra.mxu0 0
        %1671 = vmatprep.mubr.bf16.mxu0 0
        %1672 = vmatmul.mubr.bf16.gmra.mrb[0].mxu0 %v1631
        %v1673 = vpop.f32.mrb[0].mxu0
        %v1674 = vadd.f32 0.0, %v1673
        %v1675 = vpop.f32.mrb[0].mxu0
        %v1676 = vpop.f32.mrb[0].mxu0
        %v1677 = vpop.f32.mrb[0].mxu0
        %1678 = vdwg.mxu0
        %v1680 = vsel %vm933, %v1558, 0
        %v1683 = vsel %vm933, %v1488, 0
        %v1686 = vsel %vm933, %v1489, 0
        %1688 = vmatprep.subr.bf16.mxu0 0
        %1689 = vmatpush1.bf16.xpose.msra.mxu0 %v1683
        %1690 = vmatprep.subr.bf16.mxu0 0
        %1691 = vmatpush1.bf16.xpose.msra.mxu0 %v1686
        %1692 = vmatprep.subr.bf16.mxu0 0
        %1693 = vmatpush1.bf16.xpose.msra.mxu0 0
        %1694 = vmatprep.subr.bf16.mxu0 0
        %1695 = vmatpush1.bf16.xpose.msra.mxu0 0
        %1696 = vmatprep.subr.bf16.mxu0 0
        %1697 = vmatpush1.bf16.xpose.msra.mxu0 0
        %1698 = vmatprep.subr.bf16.mxu0 0
        %1699 = vmatpush1.bf16.xpose.msra.mxu0 0
        %1700 = vmatprep.subr.bf16.mxu0 0
        %1701 = vmatpush1.bf16.xpose.msra.mxu0 0
        %1702 = vmatprep.subr.bf16.mxu0 0
        %1703 = vmatpush1.bf16.xpose.msra.mxu0 0
        %1704 = vmatprep.subr.bf16.mxu0 0
        %1705 = vmatpush1.bf16.xpose.msra.mxu0 0
        %1706 = vmatprep.subr.bf16.mxu0 0
        %1707 = vmatpush1.bf16.xpose.msra.mxu0 0
        %1708 = vmatprep.subr.bf16.mxu0 0
        %1709 = vmatpush1.bf16.xpose.msra.mxu0 0
        %1710 = vmatprep.subr.bf16.mxu0 0
        %1711 = vmatpush1.bf16.xpose.msra.mxu0 0
        %1712 = vmatprep.subr.bf16.mxu0 0
        %1713 = vmatpush1.bf16.xpose.msra.mxu0 0
        %1714 = vmatprep.subr.bf16.mxu0 0
        %1715 = vmatpush1.bf16.xpose.msra.mxu0 0
        %1716 = vmatprep.subr.bf16.mxu0 0
        %1717 = vmatpush1.bf16.xpose.msra.mxu0 0
        %1718 = vmatprep.subr.bf16.mxu0 0
        %1719 = vmatpush1.bf16.xpose.msra.mxu0 0
        %1720 = vmatprep.mubr.bf16.mxu0 0
        %1721 = vmatmul.mubr.bf16.gmra.mrb[0].mxu0 %v1680
        %v1722 = vpop.f32.mrb[0].mxu0
        %v1723 = vadd.f32 0.0, %v1722
        %v1724 = vpop.f32.mrb[0].mxu0
        %v1725 = vpop.f32.mrb[0].mxu0
        %v1726 = vpop.f32.mrb[0].mxu0
        %1727 = vdwg.mxu0
        %v1729 = vsel %vm933, %v1574, 0
        %v1732 = vsel %vm933, %v1490, 0
        %v1735 = vsel %vm933, %v1491, 0
        %1737 = vmatprep.subr.bf16.mxu0 0
        %1738 = vmatpush1.bf16.xpose.msra.mxu0 %v1732
        %1739 = vmatprep.subr.bf16.mxu0 0
        %1740 = vmatpush1.bf16.xpose.msra.mxu0 %v1735
        %1741 = vmatprep.subr.bf16.mxu0 0
        %1742 = vmatpush1.bf16.xpose.msra.mxu0 0
        %1743 = vmatprep.subr.bf16.mxu0 0
        %1744 = vmatpush1.bf16.xpose.msra.mxu0 0
        %1745 = vmatprep.subr.bf16.mxu0 0
        %1746 = vmatpush1.bf16.xpose.msra.mxu0 0
        %1747 = vmatprep.subr.bf16.mxu0 0
        %1748 = vmatpush1.bf16.xpose.msra.mxu0 0
        %1749 = vmatprep.subr.bf16.mxu0 0
        %1750 = vmatpush1.bf16.xpose.msra.mxu0 0
        %1751 = vmatprep.subr.bf16.mxu0 0
        %1752 = vmatpush1.bf16.xpose.msra.mxu0 0
        %1753 = vmatprep.subr.bf16.mxu0 0
        %1754 = vmatpush1.bf16.xpose.msra.mxu0 0
        %1755 = vmatprep.subr.bf16.mxu0 0
        %1756 = vmatpush1.bf16.xpose.msra.mxu0 0
        %1757 = vmatprep.subr.bf16.mxu0 0
        %1758 = vmatpush1.bf16.xpose.msra.mxu0 0
        %1759 = vmatprep.subr.bf16.mxu0 0
        %1760 = vmatpush1.bf16.xpose.msra.mxu0 0
        %1761 = vmatprep.subr.bf16.mxu0 0
        %1762 = vmatpush1.bf16.xpose.msra.mxu0 0
        %1763 = vmatprep.subr.bf16.mxu0 0
        %1764 = vmatpush1.bf16.xpose.msra.mxu0 0
        %1765 = vmatprep.subr.bf16.mxu0 0
        %1766 = vmatpush1.bf16.xpose.msra.mxu0 0
        %1767 = vmatprep.subr.bf16.mxu0 0
        %1768 = vmatpush1.bf16.xpose.msra.mxu0 0
        %1769 = vmatprep.mubr.bf16.mxu0 0
        %1770 = vmatmul.mubr.bf16.gmra.mrb[0].mxu0 %v1729
        %v1771 = vpop.f32.mrb[0].mxu0
        %v1772 = vadd.f32 0.0, %v1771
        %v1773 = vpop.f32.mrb[0].mxu0
        %v1774 = vpop.f32.mrb[0].mxu0
        %v1775 = vpop.f32.mrb[0].mxu0
        %1776 = vdwg.mxu0
        %v1778 = vsel %vm933, %v1590, 0
        %v1781 = vsel %vm933, %v1492, 0
        %v1784 = vsel %vm933, %v1493, 0
        %1786 = vmatprep.subr.bf16.mxu0 0
        %1787 = vmatpush1.bf16.xpose.msra.mxu0 %v1781
        %1788 = vmatprep.subr.bf16.mxu0 0
        %1789 = vmatpush1.bf16.xpose.msra.mxu0 %v1784
        %1790 = vmatprep.subr.bf16.mxu0 0
        %1791 = vmatpush1.bf16.xpose.msra.mxu0 0
        %1792 = vmatprep.subr.bf16.mxu0 0
        %1793 = vmatpush1.bf16.xpose.msra.mxu0 0
        %1794 = vmatprep.subr.bf16.mxu0 0
        %1795 = vmatpush1.bf16.xpose.msra.mxu0 0
        %1796 = vmatprep.subr.bf16.mxu0 0
        %1797 = vmatpush1.bf16.xpose.msra.mxu0 0
        %1798 = vmatprep.subr.bf16.mxu0 0
        %1799 = vmatpush1.bf16.xpose.msra.mxu0 0
        %1800 = vmatprep.subr.bf16.mxu0 0
        %1801 = vmatpush1.bf16.xpose.msra.mxu0 0
        %1802 = vmatprep.subr.bf16.mxu0 0
        %1803 = vmatpush1.bf16.xpose.msra.mxu0 0
        %1804 = vmatprep.subr.bf16.mxu0 0
        %1805 = vmatpush1.bf16.xpose.msra.mxu0 0
        %1806 = vmatprep.subr.bf16.mxu0 0
        %1807 = vmatpush1.bf16.xpose.msra.mxu0 0
        %1808 = vmatprep.subr.bf16.mxu0 0
        %1809 = vmatpush1.bf16.xpose.msra.mxu0 0
        %1810 = vmatprep.subr.bf16.mxu0 0
        %1811 = vmatpush1.bf16.xpose.msra.mxu0 0
        %1812 = vmatprep.subr.bf16.mxu0 0
        %1813 = vmatpush1.bf16.xpose.msra.mxu0 0
        %1814 = vmatprep.subr.bf16.mxu0 0
        %1815 = vmatpush1.bf16.xpose.msra.mxu0 0
        %1816 = vmatprep.subr.bf16.mxu0 0
        %1817 = vmatpush1.bf16.xpose.msra.mxu0 0
        %1818 = vmatprep.mubr.bf16.mxu0 0
        %1819 = vmatmul.mubr.bf16.gmra.mrb[0].mxu0 %v1778
        %v1820 = vpop.f32.mrb[0].mxu0
        %v1821 = vadd.f32 0.0, %v1820
        %v1822 = vpop.f32.mrb[0].mxu0
        %v1823 = vpop.f32.mrb[0].mxu0
        %v1824 = vpop.f32.mrb[0].mxu0
        %1825 = vdwg.mxu0
        %v1827 = vsel %vm933, %v1606, 0
        %v1830 = vsel %vm933, %v1494, 0
        %v1833 = vsel %vm933, %v1495, 0
        %1835 = vmatprep.subr.bf16.mxu0 0
        %1836 = vmatpush1.bf16.xpose.msra.mxu0 %v1830
        %1837 = vmatprep.subr.bf16.mxu0 0
        %1838 = vmatpush1.bf16.xpose.msra.mxu0 %v1833
        %1839 = vmatprep.subr.bf16.mxu0 0
        %1840 = vmatpush1.bf16.xpose.msra.mxu0 0
        %1841 = vmatprep.subr.bf16.mxu0 0
        %1842 = vmatpush1.bf16.xpose.msra.mxu0 0
        %1843 = vmatprep.subr.bf16.mxu0 0
        %1844 = vmatpush1.bf16.xpose.msra.mxu0 0
        %1845 = vmatprep.subr.bf16.mxu0 0
        %1846 = vmatpush1.bf16.xpose.msra.mxu0 0
        %1847 = vmatprep.subr.bf16.mxu0 0
        %1848 = vmatpush1.bf16.xpose.msra.mxu0 0
        %1849 = vmatprep.subr.bf16.mxu0 0
        %1850 = vmatpush1.bf16.xpose.msra.mxu0 0
        %1851 = vmatprep.subr.bf16.mxu0 0
        %1852 = vmatpush1.bf16.xpose.msra.mxu0 0
        %1853 = vmatprep.subr.bf16.mxu0 0
        %1854 = vmatpush1.bf16.xpose.msra.mxu0 0
        %1855 = vmatprep.subr.bf16.mxu0 0
        %1856 = vmatpush1.bf16.xpose.msra.mxu0 0
        %1857 = vmatprep.subr.bf16.mxu0 0
        %1858 = vmatpush1.bf16.xpose.msra.mxu0 0
        %1859 = vmatprep.subr.bf16.mxu0 0
        %1860 = vmatpush1.bf16.xpose.msra.mxu0 0
        %1861 = vmatprep.subr.bf16.mxu0 0
        %1862 = vmatpush1.bf16.xpose.msra.mxu0 0
        %1863 = vmatprep.subr.bf16.mxu0 0
        %1864 = vmatpush1.bf16.xpose.msra.mxu0 0
        %1865 = vmatprep.subr.bf16.mxu0 0
        %1866 = vmatpush1.bf16.xpose.msra.mxu0 0
        %1867 = vmatprep.mubr.bf16.mxu0 0
        %1868 = vmatmul.mubr.bf16.gmra.mrb[0].mxu0 %v1827
        %v1869 = vpop.f32.mrb[0].mxu0
        %v1870 = vadd.f32 0.0, %v1869
        %v1871 = vpop.f32.mrb[0].mxu0
        %v1872 = vpop.f32.mrb[0].mxu0
        %v1873 = vpop.f32.mrb[0].mxu0
        %1874 = vdwg.mxu0
        %v1876 = vsel %vm933, %v1622, 0
        %v1879 = vsel %vm933, %v1496, 0
        %v1882 = vsel %vm933, %v1497, 0
        %1884 = vmatprep.subr.bf16.mxu0 0
        %1885 = vmatpush1.bf16.xpose.msra.mxu0 %v1879
        %1886 = vmatprep.subr.bf16.mxu0 0
        %1887 = vmatpush1.bf16.xpose.msra.mxu0 %v1882
        %1888 = vmatprep.subr.bf16.mxu0 0
        %1889 = vmatpush1.bf16.xpose.msra.mxu0 0
        %1890 = vmatprep.subr.bf16.mxu0 0
        %1891 = vmatpush1.bf16.xpose.msra.mxu0 0
        %1892 = vmatprep.subr.bf16.mxu0 0
        %1893 = vmatpush1.bf16.xpose.msra.mxu0 0
        %1894 = vmatprep.subr.bf16.mxu0 0
        %1895 = vmatpush1.bf16.xpose.msra.mxu0 0
        %1896 = vmatprep.subr.bf16.mxu0 0
        %1897 = vmatpush1.bf16.xpose.msra.mxu0 0
        %1898 = vmatprep.subr.bf16.mxu0 0
        %1899 = vmatpush1.bf16.xpose.msra.mxu0 0
        %1900 = vmatprep.subr.bf16.mxu0 0
        %1901 = vmatpush1.bf16.xpose.msra.mxu0 0
        %1902 = vmatprep.subr.bf16.mxu0 0
        %1903 = vmatpush1.bf16.xpose.msra.mxu0 0
        %1904 = vmatprep.subr.bf16.mxu0 0
        %1905 = vmatpush1.bf16.xpose.msra.mxu0 0
        %1906 = vmatprep.subr.bf16.mxu0 0
        %1907 = vmatpush1.bf16.xpose.msra.mxu0 0
        %1908 = vmatprep.subr.bf16.mxu0 0
        %1909 = vmatpush1.bf16.xpose.msra.mxu0 0
        %1910 = vmatprep.subr.bf16.mxu0 0
        %1911 = vmatpush1.bf16.xpose.msra.mxu0 0
        %1912 = vmatprep.subr.bf16.mxu0 0
        %1913 = vmatpush1.bf16.xpose.msra.mxu0 0
        %1914 = vmatprep.subr.bf16.mxu0 0
        %1915 = vmatpush1.bf16.xpose.msra.mxu0 0
        %1916 = vmatprep.mubr.bf16.mxu0 0
        %1917 = vmatmul.mubr.bf16.gmra.mrb[0].mxu0 %v1876
        %v1918 = vpop.f32.mrb[0].mxu0
        %v1919 = vadd.f32 0.0, %v1918
        %v1920 = vpop.f32.mrb[0].mxu0
        %v1921 = vpop.f32.mrb[0].mxu0
        %v1922 = vpop.f32.mrb[0].mxu0
        %1923 = vdwg.mxu0
        %1924 = vxpose.xlu0.b32.start [1/16] %v1674, 128
        %1925 = vxpose.xlu0.b32.cont [2/16] 0.0, 128
        %1926 = vxpose.xlu0.b32.cont [3/16] 0.0, 128
        %1927 = vxpose.xlu0.b32.cont [4/16] 0.0, 128
        %1928 = vxpose.xlu0.b32.cont [5/16] 0.0, 128
        %1929 = vxpose.xlu0.b32.cont [6/16] 0.0, 128
        %1930 = vxpose.xlu0.b32.cont [7/16] 0.0, 128
        %1931 = vxpose.xlu0.b32.cont [8/16] 0.0, 128
        %1932 = vxpose.xlu0.b32.cont [9/16] 0.0, 128
        %1933 = vxpose.xlu0.b32.cont [10/16] 0.0, 128
        %1934 = vxpose.xlu0.b32.cont [11/16] 0.0, 128
        %1935 = vxpose.xlu0.b32.cont [12/16] 0.0, 128
        %1936 = vxpose.xlu0.b32.cont [13/16] 0.0, 128
        %1937 = vxpose.xlu0.b32.cont [14/16] 0.0, 128
        %1938 = vxpose.xlu0.b32.cont [15/16] 0.0, 128
        %1939 = vxpose.xlu0.b32.end [16/16] 0.0, 128
        %v1940 = vpop.trf.xlu0
        %v1941 = vpop.trf.xlu0
        %v1942 = vpop.trf.xlu0
        %v1943 = vpop.trf.xlu0
        %v1944 = vpop.trf.xlu0
        %v1945 = vpop.trf.xlu0
        %v1946 = vpop.trf.xlu0
        %v1947 = vpop.trf.xlu0
        %v1948 = vpop.trf.xlu0
        %v1949 = vpop.trf.xlu0
        %v1950 = vpop.trf.xlu0
        %v1951 = vpop.trf.xlu0
        %v1952 = vpop.trf.xlu0
        %v1953 = vpop.trf.xlu0
        %v1954 = vpop.trf.xlu0
        %v1955 = vpop.trf.xlu0
        %1956 = vxpose.xlu0.b32.start [1/16] %v1723, 128
        %1957 = vxpose.xlu0.b32.cont [2/16] 0.0, 128
        %1958 = vxpose.xlu0.b32.cont [3/16] 0.0, 128
        %1959 = vxpose.xlu0.b32.cont [4/16] 0.0, 128
        %1960 = vxpose.xlu0.b32.cont [5/16] 0.0, 128
        %1961 = vxpose.xlu0.b32.cont [6/16] 0.0, 128
        %1962 = vxpose.xlu0.b32.cont [7/16] 0.0, 128
        %1963 = vxpose.xlu0.b32.cont [8/16] 0.0, 128
        %1964 = vxpose.xlu0.b32.cont [9/16] 0.0, 128
        %1965 = vxpose.xlu0.b32.cont [10/16] 0.0, 128
        %1966 = vxpose.xlu0.b32.cont [11/16] 0.0, 128
        %1967 = vxpose.xlu0.b32.cont [12/16] 0.0, 128
        %1968 = vxpose.xlu0.b32.cont [13/16] 0.0, 128
        %1969 = vxpose.xlu0.b32.cont [14/16] 0.0, 128
        %1970 = vxpose.xlu0.b32.cont [15/16] 0.0, 128
        %1971 = vxpose.xlu0.b32.end [16/16] 0.0, 128
        %v1972 = vpop.trf.xlu0
        %v1973 = vpop.trf.xlu0
        %v1974 = vpop.trf.xlu0
        %v1975 = vpop.trf.xlu0
        %v1976 = vpop.trf.xlu0
        %v1977 = vpop.trf.xlu0
        %v1978 = vpop.trf.xlu0
        %v1979 = vpop.trf.xlu0
        %v1980 = vpop.trf.xlu0
        %v1981 = vpop.trf.xlu0
        %v1982 = vpop.trf.xlu0
        %v1983 = vpop.trf.xlu0
        %v1984 = vpop.trf.xlu0
        %v1985 = vpop.trf.xlu0
        %v1986 = vpop.trf.xlu0
        %v1987 = vpop.trf.xlu0
        %1988 = vxpose.xlu0.b32.start [1/16] %v1772, 128
        %1989 = vxpose.xlu0.b32.cont [2/16] 0.0, 128
        %1990 = vxpose.xlu0.b32.cont [3/16] 0.0, 128
        %1991 = vxpose.xlu0.b32.cont [4/16] 0.0, 128
        %1992 = vxpose.xlu0.b32.cont [5/16] 0.0, 128
        %1993 = vxpose.xlu0.b32.cont [6/16] 0.0, 128
        %1994 = vxpose.xlu0.b32.cont [7/16] 0.0, 128
        %1995 = vxpose.xlu0.b32.cont [8/16] 0.0, 128
        %1996 = vxpose.xlu0.b32.cont [9/16] 0.0, 128
        %1997 = vxpose.xlu0.b32.cont [10/16] 0.0, 128
        %1998 = vxpose.xlu0.b32.cont [11/16] 0.0, 128
        %1999 = vxpose.xlu0.b32.cont [12/16] 0.0, 128
        %2000 = vxpose.xlu0.b32.cont [13/16] 0.0, 128
        %2001 = vxpose.xlu0.b32.cont [14/16] 0.0, 128
        %2002 = vxpose.xlu0.b32.cont [15/16] 0.0, 128
        %2003 = vxpose.xlu0.b32.end [16/16] 0.0, 128
        %v2004 = vpop.trf.xlu0
        %v2005 = vpop.trf.xlu0
        %v2006 = vpop.trf.xlu0
        %v2007 = vpop.trf.xlu0
        %v2008 = vpop.trf.xlu0
        %v2009 = vpop.trf.xlu0
        %v2010 = vpop.trf.xlu0
        %v2011 = vpop.trf.xlu0
        %v2012 = vpop.trf.xlu0
        %v2013 = vpop.trf.xlu0
        %v2014 = vpop.trf.xlu0
        %v2015 = vpop.trf.xlu0
        %v2016 = vpop.trf.xlu0
        %v2017 = vpop.trf.xlu0
        %v2018 = vpop.trf.xlu0
        %v2019 = vpop.trf.xlu0
        %2020 = vxpose.xlu0.b32.start [1/16] %v1821, 128
        %2021 = vxpose.xlu0.b32.cont [2/16] 0.0, 128
        %2022 = vxpose.xlu0.b32.cont [3/16] 0.0, 128
        %2023 = vxpose.xlu0.b32.cont [4/16] 0.0, 128
        %2024 = vxpose.xlu0.b32.cont [5/16] 0.0, 128
        %2025 = vxpose.xlu0.b32.cont [6/16] 0.0, 128
        %2026 = vxpose.xlu0.b32.cont [7/16] 0.0, 128
        %2027 = vxpose.xlu0.b32.cont [8/16] 0.0, 128
        %2028 = vxpose.xlu0.b32.cont [9/16] 0.0, 128
        %2029 = vxpose.xlu0.b32.cont [10/16] 0.0, 128
        %2030 = vxpose.xlu0.b32.cont [11/16] 0.0, 128
        %2031 = vxpose.xlu0.b32.cont [12/16] 0.0, 128
        %2032 = vxpose.xlu0.b32.cont [13/16] 0.0, 128
        %2033 = vxpose.xlu0.b32.cont [14/16] 0.0, 128
        %2034 = vxpose.xlu0.b32.cont [15/16] 0.0, 128
        %2035 = vxpose.xlu0.b32.end [16/16] 0.0, 128
        %v2036 = vpop.trf.xlu0
        %v2037 = vpop.trf.xlu0
        %v2038 = vpop.trf.xlu0
        %v2039 = vpop.trf.xlu0
        %v2040 = vpop.trf.xlu0
        %v2041 = vpop.trf.xlu0
        %v2042 = vpop.trf.xlu0
        %v2043 = vpop.trf.xlu0
        %v2044 = vpop.trf.xlu0
        %v2045 = vpop.trf.xlu0
        %v2046 = vpop.trf.xlu0
        %v2047 = vpop.trf.xlu0
        %v2048 = vpop.trf.xlu0
        %v2049 = vpop.trf.xlu0
        %v2050 = vpop.trf.xlu0
        %v2051 = vpop.trf.xlu0
        %2052 = vxpose.xlu0.b32.start [1/16] %v1870, 128
        %2053 = vxpose.xlu0.b32.cont [2/16] 0.0, 128
        %2054 = vxpose.xlu0.b32.cont [3/16] 0.0, 128
        %2055 = vxpose.xlu0.b32.cont [4/16] 0.0, 128
        %2056 = vxpose.xlu0.b32.cont [5/16] 0.0, 128
        %2057 = vxpose.xlu0.b32.cont [6/16] 0.0, 128
        %2058 = vxpose.xlu0.b32.cont [7/16] 0.0, 128
        %2059 = vxpose.xlu0.b32.cont [8/16] 0.0, 128
        %2060 = vxpose.xlu0.b32.cont [9/16] 0.0, 128
        %2061 = vxpose.xlu0.b32.cont [10/16] 0.0, 128
        %2062 = vxpose.xlu0.b32.cont [11/16] 0.0, 128
        %2063 = vxpose.xlu0.b32.cont [12/16] 0.0, 128
        %2064 = vxpose.xlu0.b32.cont [13/16] 0.0, 128
        %2065 = vxpose.xlu0.b32.cont [14/16] 0.0, 128
        %2066 = vxpose.xlu0.b32.cont [15/16] 0.0, 128
        %2067 = vxpose.xlu0.b32.end [16/16] 0.0, 128
        %v2068 = vpop.trf.xlu0
        %v2069 = vpop.trf.xlu0
        %v2070 = vpop.trf.xlu0
        %v2071 = vpop.trf.xlu0
        %v2072 = vpop.trf.xlu0
        %v2073 = vpop.trf.xlu0
        %v2074 = vpop.trf.xlu0
        %v2075 = vpop.trf.xlu0
        %v2076 = vpop.trf.xlu0
        %v2077 = vpop.trf.xlu0
        %v2078 = vpop.trf.xlu0
        %v2079 = vpop.trf.xlu0
        %v2080 = vpop.trf.xlu0
        %v2081 = vpop.trf.xlu0
        %v2082 = vpop.trf.xlu0
        %v2083 = vpop.trf.xlu0
        %2084 = vxpose.xlu0.b32.start [1/16] %v1919, 128
        %2085 = vxpose.xlu0.b32.cont [2/16] 0.0, 128
        %2086 = vxpose.xlu0.b32.cont [3/16] 0.0, 128
        %2087 = vxpose.xlu0.b32.cont [4/16] 0.0, 128
        %2088 = vxpose.xlu0.b32.cont [5/16] 0.0, 128
        %2089 = vxpose.xlu0.b32.cont [6/16] 0.0, 128
        %2090 = vxpose.xlu0.b32.cont [7/16] 0.0, 128
        %2091 = vxpose.xlu0.b32.cont [8/16] 0.0, 128
        %2092 = vxpose.xlu0.b32.cont [9/16] 0.0, 128
        %2093 = vxpose.xlu0.b32.cont [10/16] 0.0, 128
        %2094 = vxpose.xlu0.b32.cont [11/16] 0.0, 128
        %2095 = vxpose.xlu0.b32.cont [12/16] 0.0, 128
        %2096 = vxpose.xlu0.b32.cont [13/16] 0.0, 128
        %2097 = vxpose.xlu0.b32.cont [14/16] 0.0, 128
        %2098 = vxpose.xlu0.b32.cont [15/16] 0.0, 128
        %2099 = vxpose.xlu0.b32.end [16/16] 0.0, 128
        %v2100 = vpop.trf.xlu0
        %v2101 = vpop.trf.xlu0
        %v2102 = vpop.trf.xlu0
        %v2103 = vpop.trf.xlu0
        %v2104 = vpop.trf.xlu0
        %v2105 = vpop.trf.xlu0
        %v2106 = vpop.trf.xlu0
        %v2107 = vpop.trf.xlu0
        %v2108 = vpop.trf.xlu0
        %v2109 = vpop.trf.xlu0
        %v2110 = vpop.trf.xlu0
        %v2111 = vpop.trf.xlu0
        %v2112 = vpop.trf.xlu0
        %v2113 = vpop.trf.xlu0
        %v2114 = vpop.trf.xlu0
        %v2115 = vpop.trf.xlu0
        %v2116 = vcombine.low %v1940, %v2004
        %v2117 = vcombine.high %v1940, %v2004
        %v2119 = vunpack.c.l.s4 1983009808
        %v2120 = vunpack.c.0.s8 %v2119
        %v2121 = vlaneseq
        %v2122 = vshrl.u32 %v2121, 7
        %v2123 = vsub.s32 %v2120, %v2122
        %v2124 = vrot.slane %v2116, %v2123
        %v2126 = vunpack.c.l.s4 1983009808
        %v2127 = vunpack.c.0.s8 %v2126
        %v2128 = vlaneseq
        %v2129 = vshrl.u32 %v2128, 7
        %v2130 = vsub.s32 %v2127, %v2129
        %v2131 = vrot.slane %v2117, %v2130
        %v2132 = vcombine.low %v1972, %v2036
        %v2133 = vcombine.high %v1972, %v2036
        %v2135 = vunpack.c.l.s4 1983009808
        %v2136 = vunpack.c.0.s8 %v2135
        %v2137 = vlaneseq
        %v2138 = vshrl.u32 %v2137, 7
        %v2139 = vsub.s32 %v2136, %v2138
        %v2140 = vrot.slane %v2132, %v2139
        %v2142 = vunpack.c.l.s4 1983009808
        %v2143 = vunpack.c.0.s8 %v2142
        %v2144 = vlaneseq
        %v2145 = vshrl.u32 %v2144, 7
        %v2146 = vsub.s32 %v2143, %v2145
        %v2147 = vrot.slane %v2133, %v2146
        %v2148 = vcombine.high %v2068, 0.0
        %v2150 = vunpack.c.l.s4 1983009808
        %v2151 = vunpack.c.0.s8 %v2150
        %v2152 = vlaneseq
        %v2153 = vshrl.u32 %v2152, 7
        %v2154 = vsub.s32 %v2151, %v2153
        %v2155 = vrot.slane %v2068, %v2154
        %v2157 = vunpack.c.l.s4 1983009808
        %v2158 = vunpack.c.0.s8 %v2157
        %v2159 = vlaneseq
        %v2160 = vshrl.u32 %v2159, 7
        %v2161 = vsub.s32 %v2158, %v2160
        %v2162 = vrot.slane %v2148, %v2161
        %v2163 = vcombine.high %v2100, 0.0
        %v2165 = vunpack.c.l.s4 1983009808
        %v2166 = vunpack.c.0.s8 %v2165
        %v2167 = vlaneseq
        %v2168 = vshrl.u32 %v2167, 7
        %v2169 = vsub.s32 %v2166, %v2168
        %v2170 = vrot.slane %v2100, %v2169
        %v2172 = vunpack.c.l.s4 1983009808
        %v2173 = vunpack.c.0.s8 %v2172
        %v2174 = vlaneseq
        %v2175 = vshrl.u32 %v2174, 7
        %v2176 = vsub.s32 %v2173, %v2175
        %v2177 = vrot.slane %v2163, %v2176
        %v2178 = vcombine.low %v2124, %v2140
        %v2179 = vcombine.high %v2124, %v2140
        %v2181 = vunpack.c.l.s4 1934713408
        %v2182 = vunpack.c.0.s8 %v2181
        %v2183 = vlaneseq
        %v2184 = vshrl.u32 %v2183, 7
        %v2185 = vsub.s32 %v2182, %v2184
        %v2186 = vrot.slane %v2178, %v2185
        %v2188 = vunpack.c.l.s4 1934713408
        %v2189 = vunpack.c.0.s8 %v2188
        %v2190 = vlaneseq
        %v2191 = vshrl.u32 %v2190, 7
        %v2192 = vsub.s32 %v2189, %v2191
        %v2193 = vrot.slane %v2179, %v2192
        %v2194 = vcombine.low %v2131, %v2147
        %v2195 = vcombine.high %v2131, %v2147
        %v2197 = vunpack.c.l.s4 1934713408
        %v2198 = vunpack.c.0.s8 %v2197
        %v2199 = vlaneseq
        %v2200 = vshrl.u32 %v2199, 7
        %v2201 = vsub.s32 %v2198, %v2200
        %v2202 = vrot.slane %v2194, %v2201
        %v2204 = vunpack.c.l.s4 1934713408
        %v2205 = vunpack.c.0.s8 %v2204
        %v2206 = vlaneseq
        %v2207 = vshrl.u32 %v2206, 7
        %v2208 = vsub.s32 %v2205, %v2207
        %v2209 = vrot.slane %v2195, %v2208
        %v2210 = vcombine.low %v2155, %v2170
        %v2211 = vcombine.high %v2155, %v2170
        %v2213 = vunpack.c.l.s4 1934713408
        %v2214 = vunpack.c.0.s8 %v2213
        %v2215 = vlaneseq
        %v2216 = vshrl.u32 %v2215, 7
        %v2217 = vsub.s32 %v2214, %v2216
        %v2218 = vrot.slane %v2210, %v2217
        %v2220 = vunpack.c.l.s4 1934713408
        %v2221 = vunpack.c.0.s8 %v2220
        %v2222 = vlaneseq
        %v2223 = vshrl.u32 %v2222, 7
        %v2224 = vsub.s32 %v2221, %v2223
        %v2225 = vrot.slane %v2211, %v2224
        %v2226 = vcombine.low %v2162, %v2177
        %v2227 = vcombine.high %v2162, %v2177
        %v2229 = vunpack.c.l.s4 1934713408
        %v2230 = vunpack.c.0.s8 %v2229
        %v2231 = vlaneseq
        %v2232 = vshrl.u32 %v2231, 7
        %v2233 = vsub.s32 %v2230, %v2232
        %v2234 = vrot.slane %v2226, %v2233
        %v2236 = vunpack.c.l.s4 1934713408
        %v2237 = vunpack.c.0.s8 %v2236
        %v2238 = vlaneseq
        %v2239 = vshrl.u32 %v2238, 7
        %v2240 = vsub.s32 %v2237, %v2239
        %v2241 = vrot.slane %v2227, %v2240
        %v2242 = vcombine.low %v2186, %v2218
        %v2243 = vcombine.high %v2186, %v2218
        %v2244 = vcombine.low %v2193, %v2225
        %v2245 = vcombine.high %v2193, %v2225
        %v2246 = vcombine.low %v2202, %v2234
        %v2247 = vcombine.high %v2202, %v2234
        %v2248 = vcombine.low %v2209, %v2241
        %v2249 = vcombine.high %v2209, %v2241
        %v2250 = vcombine.low %v1941, %v2005
        %v2251 = vcombine.high %v1941, %v2005
        %v2253 = vunpack.c.l.s4 1983009808
        %v2254 = vunpack.c.0.s8 %v2253
        %v2255 = vlaneseq
        %v2256 = vshrl.u32 %v2255, 7
        %v2257 = vsub.s32 %v2254, %v2256
        %v2258 = vrot.slane %v2250, %v2257
        %v2260 = vunpack.c.l.s4 1983009808
        %v2261 = vunpack.c.0.s8 %v2260
        %v2262 = vlaneseq
        %v2263 = vshrl.u32 %v2262, 7
        %v2264 = vsub.s32 %v2261, %v2263
        %v2265 = vrot.slane %v2251, %v2264
        %v2266 = vcombine.low %v1973, %v2037
        %v2267 = vcombine.high %v1973, %v2037
        %v2269 = vunpack.c.l.s4 1983009808
        %v2270 = vunpack.c.0.s8 %v2269
        %v2271 = vlaneseq
        %v2272 = vshrl.u32 %v2271, 7
        %v2273 = vsub.s32 %v2270, %v2272
        %v2274 = vrot.slane %v2266, %v2273
        %v2276 = vunpack.c.l.s4 1983009808
        %v2277 = vunpack.c.0.s8 %v2276
        %v2278 = vlaneseq
        %v2279 = vshrl.u32 %v2278, 7
        %v2280 = vsub.s32 %v2277, %v2279
        %v2281 = vrot.slane %v2267, %v2280
        %v2282 = vcombine.high %v2069, 0.0
        %v2284 = vunpack.c.l.s4 1983009808
        %v2285 = vunpack.c.0.s8 %v2284
        %v2286 = vlaneseq
        %v2287 = vshrl.u32 %v2286, 7
        %v2288 = vsub.s32 %v2285, %v2287
        %v2289 = vrot.slane %v2069, %v2288
        %v2291 = vunpack.c.l.s4 1983009808
        %v2292 = vunpack.c.0.s8 %v2291
        %v2293 = vlaneseq
        %v2294 = vshrl.u32 %v2293, 7
        %v2295 = vsub.s32 %v2292, %v2294
        %v2296 = vrot.slane %v2282, %v2295
        %v2297 = vcombine.high %v2101, 0.0
        %v2299 = vunpack.c.l.s4 1983009808
        %v2300 = vunpack.c.0.s8 %v2299
        %v2301 = vlaneseq
        %v2302 = vshrl.u32 %v2301, 7
        %v2303 = vsub.s32 %v2300, %v2302
        %v2304 = vrot.slane %v2101, %v2303
        %v2306 = vunpack.c.l.s4 1983009808
        %v2307 = vunpack.c.0.s8 %v2306
        %v2308 = vlaneseq
        %v2309 = vshrl.u32 %v2308, 7
        %v2310 = vsub.s32 %v2307, %v2309
        %v2311 = vrot.slane %v2297, %v2310
        %v2312 = vcombine.low %v2258, %v2274
        %v2313 = vcombine.high %v2258, %v2274
        %v2315 = vunpack.c.l.s4 1934713408
        %v2316 = vunpack.c.0.s8 %v2315
        %v2317 = vlaneseq
        %v2318 = vshrl.u32 %v2317, 7
        %v2319 = vsub.s32 %v2316, %v2318
        %v2320 = vrot.slane %v2312, %v2319
        %v2322 = vunpack.c.l.s4 1934713408
        %v2323 = vunpack.c.0.s8 %v2322
        %v2324 = vlaneseq
        %v2325 = vshrl.u32 %v2324, 7
        %v2326 = vsub.s32 %v2323, %v2325
        %v2327 = vrot.slane %v2313, %v2326
        %v2328 = vcombine.low %v2265, %v2281
        %v2329 = vcombine.high %v2265, %v2281
        %v2331 = vunpack.c.l.s4 1934713408
        %v2332 = vunpack.c.0.s8 %v2331
        %v2333 = vlaneseq
        %v2334 = vshrl.u32 %v2333, 7
        %v2335 = vsub.s32 %v2332, %v2334
        %v2336 = vrot.slane %v2328, %v2335
        %v2338 = vunpack.c.l.s4 1934713408
        %v2339 = vunpack.c.0.s8 %v2338
        %v2340 = vlaneseq
        %v2341 = vshrl.u32 %v2340, 7
        %v2342 = vsub.s32 %v2339, %v2341
        %v2343 = vrot.slane %v2329, %v2342
        %v2344 = vcombine.low %v2289, %v2304
        %v2345 = vcombine.high %v2289, %v2304
        %v2347 = vunpack.c.l.s4 1934713408
        %v2348 = vunpack.c.0.s8 %v2347
        %v2349 = vlaneseq
        %v2350 = vshrl.u32 %v2349, 7
        %v2351 = vsub.s32 %v2348, %v2350
        %v2352 = vrot.slane %v2344, %v2351
        %v2354 = vunpack.c.l.s4 1934713408
        %v2355 = vunpack.c.0.s8 %v2354
        %v2356 = vlaneseq
        %v2357 = vshrl.u32 %v2356, 7
        %v2358 = vsub.s32 %v2355, %v2357
        %v2359 = vrot.slane %v2345, %v2358
        %v2360 = vcombine.low %v2296, %v2311
        %v2361 = vcombine.high %v2296, %v2311
        %v2363 = vunpack.c.l.s4 1934713408
        %v2364 = vunpack.c.0.s8 %v2363
        %v2365 = vlaneseq
        %v2366 = vshrl.u32 %v2365, 7
        %v2367 = vsub.s32 %v2364, %v2366
        %v2368 = vrot.slane %v2360, %v2367
        %v2370 = vunpack.c.l.s4 1934713408
        %v2371 = vunpack.c.0.s8 %v2370
        %v2372 = vlaneseq
        %v2373 = vshrl.u32 %v2372, 7
        %v2374 = vsub.s32 %v2371, %v2373
        %v2375 = vrot.slane %v2361, %v2374
        %v2376 = vcombine.low %v2320, %v2352
        %v2377 = vcombine.high %v2320, %v2352
        %v2378 = vcombine.low %v2327, %v2359
        %v2379 = vcombine.high %v2327, %v2359
        %v2380 = vcombine.low %v2336, %v2368
        %v2381 = vcombine.high %v2336, %v2368
        %v2382 = vcombine.low %v2343, %v2375
        %v2383 = vcombine.high %v2343, %v2375
        %v2384 = vcombine.low %v1942, %v2006
        %v2385 = vcombine.high %v1942, %v2006
        %v2387 = vunpack.c.l.s4 1983009808
        %v2388 = vunpack.c.0.s8 %v2387
        %v2389 = vlaneseq
        %v2390 = vshrl.u32 %v2389, 7
        %v2391 = vsub.s32 %v2388, %v2390
        %v2392 = vrot.slane %v2384, %v2391
        %v2394 = vunpack.c.l.s4 1983009808
        %v2395 = vunpack.c.0.s8 %v2394
        %v2396 = vlaneseq
        %v2397 = vshrl.u32 %v2396, 7
        %v2398 = vsub.s32 %v2395, %v2397
        %v2399 = vrot.slane %v2385, %v2398
        %v2400 = vcombine.low %v1974, %v2038
        %v2401 = vcombine.high %v1974, %v2038
        %v2403 = vunpack.c.l.s4 1983009808
        %v2404 = vunpack.c.0.s8 %v2403
        %v2405 = vlaneseq
        %v2406 = vshrl.u32 %v2405, 7
        %v2407 = vsub.s32 %v2404, %v2406
        %v2408 = vrot.slane %v2400, %v2407
        %v2410 = vunpack.c.l.s4 1983009808
        %v2411 = vunpack.c.0.s8 %v2410
        %v2412 = vlaneseq
        %v2413 = vshrl.u32 %v2412, 7
        %v2414 = vsub.s32 %v2411, %v2413
        %v2415 = vrot.slane %v2401, %v2414
        %v2416 = vcombine.high %v2070, 0.0
        %v2418 = vunpack.c.l.s4 1983009808
        %v2419 = vunpack.c.0.s8 %v2418
        %v2420 = vlaneseq
        %v2421 = vshrl.u32 %v2420, 7
        %v2422 = vsub.s32 %v2419, %v2421
        %v2423 = vrot.slane %v2070, %v2422
        %v2425 = vunpack.c.l.s4 1983009808
        %v2426 = vunpack.c.0.s8 %v2425
        %v2427 = vlaneseq
        %v2428 = vshrl.u32 %v2427, 7
        %v2429 = vsub.s32 %v2426, %v2428
        %v2430 = vrot.slane %v2416, %v2429
        %v2431 = vcombine.high %v2102, 0.0
        %v2433 = vunpack.c.l.s4 1983009808
        %v2434 = vunpack.c.0.s8 %v2433
        %v2435 = vlaneseq
        %v2436 = vshrl.u32 %v2435, 7
        %v2437 = vsub.s32 %v2434, %v2436
        %v2438 = vrot.slane %v2102, %v2437
        %v2440 = vunpack.c.l.s4 1983009808
        %v2441 = vunpack.c.0.s8 %v2440
        %v2442 = vlaneseq
        %v2443 = vshrl.u32 %v2442, 7
        %v2444 = vsub.s32 %v2441, %v2443
        %v2445 = vrot.slane %v2431, %v2444
        %v2446 = vcombine.low %v2392, %v2408
        %v2447 = vcombine.high %v2392, %v2408
        %v2449 = vunpack.c.l.s4 1934713408
        %v2450 = vunpack.c.0.s8 %v2449
        %v2451 = vlaneseq
        %v2452 = vshrl.u32 %v2451, 7
        %v2453 = vsub.s32 %v2450, %v2452
        %v2454 = vrot.slane %v2446, %v2453
        %v2456 = vunpack.c.l.s4 1934713408
        %v2457 = vunpack.c.0.s8 %v2456
        %v2458 = vlaneseq
        %v2459 = vshrl.u32 %v2458, 7
        %v2460 = vsub.s32 %v2457, %v2459
        %v2461 = vrot.slane %v2447, %v2460
        %v2462 = vcombine.low %v2399, %v2415
        %v2463 = vcombine.high %v2399, %v2415
        %v2465 = vunpack.c.l.s4 1934713408
        %v2466 = vunpack.c.0.s8 %v2465
        %v2467 = vlaneseq
        %v2468 = vshrl.u32 %v2467, 7
        %v2469 = vsub.s32 %v2466, %v2468
        %v2470 = vrot.slane %v2462, %v2469
        %v2472 = vunpack.c.l.s4 1934713408
        %v2473 = vunpack.c.0.s8 %v2472
        %v2474 = vlaneseq
        %v2475 = vshrl.u32 %v2474, 7
        %v2476 = vsub.s32 %v2473, %v2475
        %v2477 = vrot.slane %v2463, %v2476
        %v2478 = vcombine.low %v2423, %v2438
        %v2479 = vcombine.high %v2423, %v2438
        %v2481 = vunpack.c.l.s4 1934713408
        %v2482 = vunpack.c.0.s8 %v2481
        %v2483 = vlaneseq
        %v2484 = vshrl.u32 %v2483, 7
        %v2485 = vsub.s32 %v2482, %v2484
        %v2486 = vrot.slane %v2478, %v2485
        %v2488 = vunpack.c.l.s4 1934713408
        %v2489 = vunpack.c.0.s8 %v2488
        %v2490 = vlaneseq
        %v2491 = vshrl.u32 %v2490, 7
        %v2492 = vsub.s32 %v2489, %v2491
        %v2493 = vrot.slane %v2479, %v2492
        %v2494 = vcombine.low %v2430, %v2445
        %v2495 = vcombine.high %v2430, %v2445
        %v2497 = vunpack.c.l.s4 1934713408
        %v2498 = vunpack.c.0.s8 %v2497
        %v2499 = vlaneseq
        %v2500 = vshrl.u32 %v2499, 7
        %v2501 = vsub.s32 %v2498, %v2500
        %v2502 = vrot.slane %v2494, %v2501
        %v2504 = vunpack.c.l.s4 1934713408
        %v2505 = vunpack.c.0.s8 %v2504
        %v2506 = vlaneseq
        %v2507 = vshrl.u32 %v2506, 7
        %v2508 = vsub.s32 %v2505, %v2507
        %v2509 = vrot.slane %v2495, %v2508
        %v2510 = vcombine.low %v2454, %v2486
        %v2511 = vcombine.high %v2454, %v2486
        %v2512 = vcombine.low %v2461, %v2493
        %v2513 = vcombine.high %v2461, %v2493
        %v2514 = vcombine.low %v2470, %v2502
        %v2515 = vcombine.high %v2470, %v2502
        %v2516 = vcombine.low %v2477, %v2509
        %v2517 = vcombine.high %v2477, %v2509
        %v2518 = vcombine.low %v1943, %v2007
        %v2519 = vcombine.high %v1943, %v2007
        %v2521 = vunpack.c.l.s4 1983009808
        %v2522 = vunpack.c.0.s8 %v2521
        %v2523 = vlaneseq
        %v2524 = vshrl.u32 %v2523, 7
        %v2525 = vsub.s32 %v2522, %v2524
        %v2526 = vrot.slane %v2518, %v2525
        %v2528 = vunpack.c.l.s4 1983009808
        %v2529 = vunpack.c.0.s8 %v2528
        %v2530 = vlaneseq
        %v2531 = vshrl.u32 %v2530, 7
        %v2532 = vsub.s32 %v2529, %v2531
        %v2533 = vrot.slane %v2519, %v2532
        %v2534 = vcombine.low %v1975, %v2039
        %v2535 = vcombine.high %v1975, %v2039
        %v2537 = vunpack.c.l.s4 1983009808
        %v2538 = vunpack.c.0.s8 %v2537
        %v2539 = vlaneseq
        %v2540 = vshrl.u32 %v2539, 7
        %v2541 = vsub.s32 %v2538, %v2540
        %v2542 = vrot.slane %v2534, %v2541
        %v2544 = vunpack.c.l.s4 1983009808
        %v2545 = vunpack.c.0.s8 %v2544
        %v2546 = vlaneseq
        %v2547 = vshrl.u32 %v2546, 7
        %v2548 = vsub.s32 %v2545, %v2547
        %v2549 = vrot.slane %v2535, %v2548
        %v2550 = vcombine.high %v2071, 0.0
        %v2552 = vunpack.c.l.s4 1983009808
        %v2553 = vunpack.c.0.s8 %v2552
        %v2554 = vlaneseq
        %v2555 = vshrl.u32 %v2554, 7
        %v2556 = vsub.s32 %v2553, %v2555
        %v2557 = vrot.slane %v2071, %v2556
        %v2559 = vunpack.c.l.s4 1983009808
        %v2560 = vunpack.c.0.s8 %v2559
        %v2561 = vlaneseq
        %v2562 = vshrl.u32 %v2561, 7
        %v2563 = vsub.s32 %v2560, %v2562
        %v2564 = vrot.slane %v2550, %v2563
        %v2565 = vcombine.high %v2103, 0.0
        %v2567 = vunpack.c.l.s4 1983009808
        %v2568 = vunpack.c.0.s8 %v2567
        %v2569 = vlaneseq
        %v2570 = vshrl.u32 %v2569, 7
        %v2571 = vsub.s32 %v2568, %v2570
        %v2572 = vrot.slane %v2103, %v2571
        %v2574 = vunpack.c.l.s4 1983009808
        %v2575 = vunpack.c.0.s8 %v2574
        %v2576 = vlaneseq
        %v2577 = vshrl.u32 %v2576, 7
        %v2578 = vsub.s32 %v2575, %v2577
        %v2579 = vrot.slane %v2565, %v2578
        %v2580 = vcombine.low %v2526, %v2542
        %v2581 = vcombine.high %v2526, %v2542
        %v2583 = vunpack.c.l.s4 1934713408
        %v2584 = vunpack.c.0.s8 %v2583
        %v2585 = vlaneseq
        %v2586 = vshrl.u32 %v2585, 7
        %v2587 = vsub.s32 %v2584, %v2586
        %v2588 = vrot.slane %v2580, %v2587
        %v2590 = vunpack.c.l.s4 1934713408
        %v2591 = vunpack.c.0.s8 %v2590
        %v2592 = vlaneseq
        %v2593 = vshrl.u32 %v2592, 7
        %v2594 = vsub.s32 %v2591, %v2593
        %v2595 = vrot.slane %v2581, %v2594
        %v2596 = vcombine.low %v2533, %v2549
        %v2597 = vcombine.high %v2533, %v2549
        %v2599 = vunpack.c.l.s4 1934713408
        %v2600 = vunpack.c.0.s8 %v2599
        %v2601 = vlaneseq
        %v2602 = vshrl.u32 %v2601, 7
        %v2603 = vsub.s32 %v2600, %v2602
        %v2604 = vrot.slane %v2596, %v2603
        %v2606 = vunpack.c.l.s4 1934713408
        %v2607 = vunpack.c.0.s8 %v2606
        %v2608 = vlaneseq
        %v2609 = vshrl.u32 %v2608, 7
        %v2610 = vsub.s32 %v2607, %v2609
        %v2611 = vrot.slane %v2597, %v2610
        %v2612 = vcombine.low %v2557, %v2572
        %v2613 = vcombine.high %v2557, %v2572
        %v2615 = vunpack.c.l.s4 1934713408
        %v2616 = vunpack.c.0.s8 %v2615
        %v2617 = vlaneseq
        %v2618 = vshrl.u32 %v2617, 7
        %v2619 = vsub.s32 %v2616, %v2618
        %v2620 = vrot.slane %v2612, %v2619
        %v2622 = vunpack.c.l.s4 1934713408
        %v2623 = vunpack.c.0.s8 %v2622
        %v2624 = vlaneseq
        %v2625 = vshrl.u32 %v2624, 7
        %v2626 = vsub.s32 %v2623, %v2625
        %v2627 = vrot.slane %v2613, %v2626
        %v2628 = vcombine.low %v2564, %v2579
        %v2629 = vcombine.high %v2564, %v2579
        %v2631 = vunpack.c.l.s4 1934713408
        %v2632 = vunpack.c.0.s8 %v2631
        %v2633 = vlaneseq
        %v2634 = vshrl.u32 %v2633, 7
        %v2635 = vsub.s32 %v2632, %v2634
        %v2636 = vrot.slane %v2628, %v2635
        %v2638 = vunpack.c.l.s4 1934713408
        %v2639 = vunpack.c.0.s8 %v2638
        %v2640 = vlaneseq
        %v2641 = vshrl.u32 %v2640, 7
        %v2642 = vsub.s32 %v2639, %v2641
        %v2643 = vrot.slane %v2629, %v2642
        %v2644 = vcombine.low %v2588, %v2620
        %v2645 = vcombine.high %v2588, %v2620
        %v2646 = vcombine.low %v2595, %v2627
        %v2647 = vcombine.high %v2595, %v2627
        %v2648 = vcombine.low %v2604, %v2636
        %v2649 = vcombine.high %v2604, %v2636
        %v2650 = vcombine.low %v2611, %v2643
        %v2651 = vcombine.high %v2611, %v2643
        %v2652 = vcombine.low %v2242, %v2244
        %v2653 = vcombine.high %v2242, %v2244
        %v2655 = vunpack.c.l.s4 1983009808
        %v2656 = vunpack.c.0.s8 %v2655
        %v2657 = vlaneseq
        %v2658 = vshrl.u32 %v2657, 7
        %v2659 = vsub.s32 %v2656, %v2658
        %v2660 = vrot.slane %v2652, %v2659
        %v2662 = vunpack.c.l.s4 1983009808
        %v2663 = vunpack.c.0.s8 %v2662
        %v2664 = vlaneseq
        %v2665 = vshrl.u32 %v2664, 7
        %v2666 = vsub.s32 %v2663, %v2665
        %v2667 = vrot.slane %v2653, %v2666
        %v2668 = vcombine.low %v2243, %v2245
        %v2669 = vcombine.high %v2243, %v2245
        %v2671 = vunpack.c.l.s4 1983009808
        %v2672 = vunpack.c.0.s8 %v2671
        %v2673 = vlaneseq
        %v2674 = vshrl.u32 %v2673, 7
        %v2675 = vsub.s32 %v2672, %v2674
        %v2676 = vrot.slane %v2668, %v2675
        %v2678 = vunpack.c.l.s4 1983009808
        %v2679 = vunpack.c.0.s8 %v2678
        %v2680 = vlaneseq
        %v2681 = vshrl.u32 %v2680, 7
        %v2682 = vsub.s32 %v2679, %v2681
        %v2683 = vrot.slane %v2669, %v2682
        %v2684 = vcombine.low %v2246, %v2248
        %v2685 = vcombine.high %v2246, %v2248
        %v2687 = vunpack.c.l.s4 1983009808
        %v2688 = vunpack.c.0.s8 %v2687
        %v2689 = vlaneseq
        %v2690 = vshrl.u32 %v2689, 7
        %v2691 = vsub.s32 %v2688, %v2690
        %v2692 = vrot.slane %v2684, %v2691
        %v2694 = vunpack.c.l.s4 1983009808
        %v2695 = vunpack.c.0.s8 %v2694
        %v2696 = vlaneseq
        %v2697 = vshrl.u32 %v2696, 7
        %v2698 = vsub.s32 %v2695, %v2697
        %v2699 = vrot.slane %v2685, %v2698
        %v2700 = vcombine.low %v2247, %v2249
        %v2701 = vcombine.high %v2247, %v2249
        %v2703 = vunpack.c.l.s4 1983009808
        %v2704 = vunpack.c.0.s8 %v2703
        %v2705 = vlaneseq
        %v2706 = vshrl.u32 %v2705, 7
        %v2707 = vsub.s32 %v2704, %v2706
        %v2708 = vrot.slane %v2700, %v2707
        %v2710 = vunpack.c.l.s4 1983009808
        %v2711 = vunpack.c.0.s8 %v2710
        %v2712 = vlaneseq
        %v2713 = vshrl.u32 %v2712, 7
        %v2714 = vsub.s32 %v2711, %v2713
        %v2715 = vrot.slane %v2701, %v2714
        %v2716 = vcombine.low %v2660, %v2676
        %v2717 = vcombine.high %v2660, %v2676
        %v2719 = vunpack.c.l.s4 1934713408
        %v2720 = vunpack.c.0.s8 %v2719
        %v2721 = vlaneseq
        %v2722 = vshrl.u32 %v2721, 7
        %v2723 = vsub.s32 %v2720, %v2722
        %v2724 = vrot.slane %v2716, %v2723
        %v2726 = vunpack.c.l.s4 1934713408
        %v2727 = vunpack.c.0.s8 %v2726
        %v2728 = vlaneseq
        %v2729 = vshrl.u32 %v2728, 7
        %v2730 = vsub.s32 %v2727, %v2729
        %v2731 = vrot.slane %v2717, %v2730
        %v2732 = vcombine.low %v2667, %v2683
        %v2734 = vunpack.c.l.s4 1934713408
        %v2735 = vunpack.c.0.s8 %v2734
        %v2736 = vlaneseq
        %v2737 = vshrl.u32 %v2736, 7
        %v2738 = vsub.s32 %v2735, %v2737
        %v2739 = vrot.slane %v2732, %v2738
        %v2740 = vcombine.low %v2692, %v2708
        %v2741 = vcombine.high %v2692, %v2708
        %v2743 = vunpack.c.l.s4 1934713408
        %v2744 = vunpack.c.0.s8 %v2743
        %v2745 = vlaneseq
        %v2746 = vshrl.u32 %v2745, 7
        %v2747 = vsub.s32 %v2744, %v2746
        %v2748 = vrot.slane %v2740, %v2747
        %v2750 = vunpack.c.l.s4 1934713408
        %v2751 = vunpack.c.0.s8 %v2750
        %v2752 = vlaneseq
        %v2753 = vshrl.u32 %v2752, 7
        %v2754 = vsub.s32 %v2751, %v2753
        %v2755 = vrot.slane %v2741, %v2754
        %v2756 = vcombine.low %v2699, %v2715
        %v2758 = vunpack.c.l.s4 1934713408
        %v2759 = vunpack.c.0.s8 %v2758
        %v2760 = vlaneseq
        %v2761 = vshrl.u32 %v2760, 7
        %v2762 = vsub.s32 %v2759, %v2761
        %v2763 = vrot.slane %v2756, %v2762
        %v2764 = vcombine.low %v2724, %v2748
        %v2765 = vcombine.high %v2724, %v2748
        %v2766 = vcombine.low %v2731, %v2755
        %v2767 = vcombine.high %v2731, %v2755
        %v2768 = vcombine.low %v2739, %v2763
        %v2769 = vcombine.high %v2739, %v2763
        %v2770 = vcombine.low %v2376, %v2378
        %v2771 = vcombine.high %v2376, %v2378
        %v2773 = vunpack.c.l.s4 1983009808
        %v2774 = vunpack.c.0.s8 %v2773
        %v2775 = vlaneseq
        %v2776 = vshrl.u32 %v2775, 7
        %v2777 = vsub.s32 %v2774, %v2776
        %v2778 = vrot.slane %v2770, %v2777
        %v2780 = vunpack.c.l.s4 1983009808
        %v2781 = vunpack.c.0.s8 %v2780
        %v2782 = vlaneseq
        %v2783 = vshrl.u32 %v2782, 7
        %v2784 = vsub.s32 %v2781, %v2783
        %v2785 = vrot.slane %v2771, %v2784
        %v2786 = vcombine.low %v2377, %v2379
        %v2787 = vcombine.high %v2377, %v2379
        %v2789 = vunpack.c.l.s4 1983009808
        %v2790 = vunpack.c.0.s8 %v2789
        %v2791 = vlaneseq
        %v2792 = vshrl.u32 %v2791, 7
        %v2793 = vsub.s32 %v2790, %v2792
        %v2794 = vrot.slane %v2786, %v2793
        %v2796 = vunpack.c.l.s4 1983009808
        %v2797 = vunpack.c.0.s8 %v2796
        %v2798 = vlaneseq
        %v2799 = vshrl.u32 %v2798, 7
        %v2800 = vsub.s32 %v2797, %v2799
        %v2801 = vrot.slane %v2787, %v2800
        %v2802 = vcombine.low %v2380, %v2382
        %v2803 = vcombine.high %v2380, %v2382
        %v2805 = vunpack.c.l.s4 1983009808
        %v2806 = vunpack.c.0.s8 %v2805
        %v2807 = vlaneseq
        %v2808 = vshrl.u32 %v2807, 7
        %v2809 = vsub.s32 %v2806, %v2808
        %v2810 = vrot.slane %v2802, %v2809
        %v2812 = vunpack.c.l.s4 1983009808
        %v2813 = vunpack.c.0.s8 %v2812
        %v2814 = vlaneseq
        %v2815 = vshrl.u32 %v2814, 7
        %v2816 = vsub.s32 %v2813, %v2815
        %v2817 = vrot.slane %v2803, %v2816
        %v2818 = vcombine.low %v2381, %v2383
        %v2819 = vcombine.high %v2381, %v2383
        %v2821 = vunpack.c.l.s4 1983009808
        %v2822 = vunpack.c.0.s8 %v2821
        %v2823 = vlaneseq
        %v2824 = vshrl.u32 %v2823, 7
        %v2825 = vsub.s32 %v2822, %v2824
        %v2826 = vrot.slane %v2818, %v2825
        %v2828 = vunpack.c.l.s4 1983009808
        %v2829 = vunpack.c.0.s8 %v2828
        %v2830 = vlaneseq
        %v2831 = vshrl.u32 %v2830, 7
        %v2832 = vsub.s32 %v2829, %v2831
        %v2833 = vrot.slane %v2819, %v2832
        %v2834 = vcombine.low %v2778, %v2794
        %v2835 = vcombine.high %v2778, %v2794
        %v2837 = vunpack.c.l.s4 1934713408
        %v2838 = vunpack.c.0.s8 %v2837
        %v2839 = vlaneseq
        %v2840 = vshrl.u32 %v2839, 7
        %v2841 = vsub.s32 %v2838, %v2840
        %v2842 = vrot.slane %v2834, %v2841
        %v2844 = vunpack.c.l.s4 1934713408
        %v2845 = vunpack.c.0.s8 %v2844
        %v2846 = vlaneseq
        %v2847 = vshrl.u32 %v2846, 7
        %v2848 = vsub.s32 %v2845, %v2847
        %v2849 = vrot.slane %v2835, %v2848
        %v2850 = vcombine.low %v2785, %v2801
        %v2852 = vunpack.c.l.s4 1934713408
        %v2853 = vunpack.c.0.s8 %v2852
        %v2854 = vlaneseq
        %v2855 = vshrl.u32 %v2854, 7
        %v2856 = vsub.s32 %v2853, %v2855
        %v2857 = vrot.slane %v2850, %v2856
        %v2858 = vcombine.low %v2810, %v2826
        %v2859 = vcombine.high %v2810, %v2826
        %v2861 = vunpack.c.l.s4 1934713408
        %v2862 = vunpack.c.0.s8 %v2861
        %v2863 = vlaneseq
        %v2864 = vshrl.u32 %v2863, 7
        %v2865 = vsub.s32 %v2862, %v2864
        %v2866 = vrot.slane %v2858, %v2865
        %v2868 = vunpack.c.l.s4 1934713408
        %v2869 = vunpack.c.0.s8 %v2868
        %v2870 = vlaneseq
        %v2871 = vshrl.u32 %v2870, 7
        %v2872 = vsub.s32 %v2869, %v2871
        %v2873 = vrot.slane %v2859, %v2872
        %v2874 = vcombine.low %v2817, %v2833
        %v2876 = vunpack.c.l.s4 1934713408
        %v2877 = vunpack.c.0.s8 %v2876
        %v2878 = vlaneseq
        %v2879 = vshrl.u32 %v2878, 7
        %v2880 = vsub.s32 %v2877, %v2879
        %v2881 = vrot.slane %v2874, %v2880
        %v2882 = vcombine.low %v2842, %v2866
        %v2883 = vcombine.high %v2842, %v2866
        %v2884 = vcombine.low %v2849, %v2873
        %v2885 = vcombine.high %v2849, %v2873
        %v2886 = vcombine.low %v2857, %v2881
        %v2887 = vcombine.high %v2857, %v2881
        %v2888 = vcombine.low %v2510, %v2512
        %v2889 = vcombine.high %v2510, %v2512
        %v2891 = vunpack.c.l.s4 1983009808
        %v2892 = vunpack.c.0.s8 %v2891
        %v2893 = vlaneseq
        %v2894 = vshrl.u32 %v2893, 7
        %v2895 = vsub.s32 %v2892, %v2894
        %v2896 = vrot.slane %v2888, %v2895
        %v2898 = vunpack.c.l.s4 1983009808
        %v2899 = vunpack.c.0.s8 %v2898
        %v2900 = vlaneseq
        %v2901 = vshrl.u32 %v2900, 7
        %v2902 = vsub.s32 %v2899, %v2901
        %v2903 = vrot.slane %v2889, %v2902
        %v2904 = vcombine.low %v2511, %v2513
        %v2905 = vcombine.high %v2511, %v2513
        %v2907 = vunpack.c.l.s4 1983009808
        %v2908 = vunpack.c.0.s8 %v2907
        %v2909 = vlaneseq
        %v2910 = vshrl.u32 %v2909, 7
        %v2911 = vsub.s32 %v2908, %v2910
        %v2912 = vrot.slane %v2904, %v2911
        %v2914 = vunpack.c.l.s4 1983009808
        %v2915 = vunpack.c.0.s8 %v2914
        %v2916 = vlaneseq
        %v2917 = vshrl.u32 %v2916, 7
        %v2918 = vsub.s32 %v2915, %v2917
        %v2919 = vrot.slane %v2905, %v2918
        %v2920 = vcombine.low %v2514, %v2516
        %v2921 = vcombine.high %v2514, %v2516
        %v2923 = vunpack.c.l.s4 1983009808
        %v2924 = vunpack.c.0.s8 %v2923
        %v2925 = vlaneseq
        %v2926 = vshrl.u32 %v2925, 7
        %v2927 = vsub.s32 %v2924, %v2926
        %v2928 = vrot.slane %v2920, %v2927
        %v2930 = vunpack.c.l.s4 1983009808
        %v2931 = vunpack.c.0.s8 %v2930
        %v2932 = vlaneseq
        %v2933 = vshrl.u32 %v2932, 7
        %v2934 = vsub.s32 %v2931, %v2933
        %v2935 = vrot.slane %v2921, %v2934
        %v2936 = vcombine.low %v2515, %v2517
        %v2937 = vcombine.high %v2515, %v2517
        %v2939 = vunpack.c.l.s4 1983009808
        %v2940 = vunpack.c.0.s8 %v2939
        %v2941 = vlaneseq
        %v2942 = vshrl.u32 %v2941, 7
        %v2943 = vsub.s32 %v2940, %v2942
        %v2944 = vrot.slane %v2936, %v2943
        %v2946 = vunpack.c.l.s4 1983009808
        %v2947 = vunpack.c.0.s8 %v2946
        %v2948 = vlaneseq
        %v2949 = vshrl.u32 %v2948, 7
        %v2950 = vsub.s32 %v2947, %v2949
        %v2951 = vrot.slane %v2937, %v2950
        %v2952 = vcombine.low %v2896, %v2912
        %v2953 = vcombine.high %v2896, %v2912
        %v2955 = vunpack.c.l.s4 1934713408
        %v2956 = vunpack.c.0.s8 %v2955
        %v2957 = vlaneseq
        %v2958 = vshrl.u32 %v2957, 7
        %v2959 = vsub.s32 %v2956, %v2958
        %v2960 = vrot.slane %v2952, %v2959
        %v2962 = vunpack.c.l.s4 1934713408
        %v2963 = vunpack.c.0.s8 %v2962
        %v2964 = vlaneseq
        %v2965 = vshrl.u32 %v2964, 7
        %v2966 = vsub.s32 %v2963, %v2965
        %v2967 = vrot.slane %v2953, %v2966
        %v2968 = vcombine.low %v2903, %v2919
        %v2970 = vunpack.c.l.s4 1934713408
        %v2971 = vunpack.c.0.s8 %v2970
        %v2972 = vlaneseq
        %v2973 = vshrl.u32 %v2972, 7
        %v2974 = vsub.s32 %v2971, %v2973
        %v2975 = vrot.slane %v2968, %v2974
        %v2976 = vcombine.low %v2928, %v2944
        %v2977 = vcombine.high %v2928, %v2944
        %v2979 = vunpack.c.l.s4 1934713408
        %v2980 = vunpack.c.0.s8 %v2979
        %v2981 = vlaneseq
        %v2982 = vshrl.u32 %v2981, 7
        %v2983 = vsub.s32 %v2980, %v2982
        %v2984 = vrot.slane %v2976, %v2983
        %v2986 = vunpack.c.l.s4 1934713408
        %v2987 = vunpack.c.0.s8 %v2986
        %v2988 = vlaneseq
        %v2989 = vshrl.u32 %v2988, 7
        %v2990 = vsub.s32 %v2987, %v2989
        %v2991 = vrot.slane %v2977, %v2990
        %v2992 = vcombine.low %v2935, %v2951
        %v2994 = vunpack.c.l.s4 1934713408
        %v2995 = vunpack.c.0.s8 %v2994
        %v2996 = vlaneseq
        %v2997 = vshrl.u32 %v2996, 7
        %v2998 = vsub.s32 %v2995, %v2997
        %v2999 = vrot.slane %v2992, %v2998
        %v3000 = vcombine.low %v2960, %v2984
        %v3001 = vcombine.high %v2960, %v2984
        %v3002 = vcombine.low %v2967, %v2991
        %v3003 = vcombine.high %v2967, %v2991
        %v3004 = vcombine.low %v2975, %v2999
        %v3005 = vcombine.high %v2975, %v2999
        %v3006 = vcombine.low %v2644, %v2646
        %v3007 = vcombine.high %v2644, %v2646
        %v3009 = vunpack.c.l.s4 1983009808
        %v3010 = vunpack.c.0.s8 %v3009
        %v3011 = vlaneseq
        %v3012 = vshrl.u32 %v3011, 7
        %v3013 = vsub.s32 %v3010, %v3012
        %v3014 = vrot.slane %v3006, %v3013
        %v3016 = vunpack.c.l.s4 1983009808
        %v3017 = vunpack.c.0.s8 %v3016
        %v3018 = vlaneseq
        %v3019 = vshrl.u32 %v3018, 7
        %v3020 = vsub.s32 %v3017, %v3019
        %v3021 = vrot.slane %v3007, %v3020
        %v3022 = vcombine.low %v2645, %v2647
        %v3023 = vcombine.high %v2645, %v2647
        %v3025 = vunpack.c.l.s4 1983009808
        %v3026 = vunpack.c.0.s8 %v3025
        %v3027 = vlaneseq
        %v3028 = vshrl.u32 %v3027, 7
        %v3029 = vsub.s32 %v3026, %v3028
        %v3030 = vrot.slane %v3022, %v3029
        %v3032 = vunpack.c.l.s4 1983009808
        %v3033 = vunpack.c.0.s8 %v3032
        %v3034 = vlaneseq
        %v3035 = vshrl.u32 %v3034, 7
        %v3036 = vsub.s32 %v3033, %v3035
        %v3037 = vrot.slane %v3023, %v3036
        %v3038 = vcombine.low %v2648, %v2650
        %v3039 = vcombine.high %v2648, %v2650
        %v3041 = vunpack.c.l.s4 1983009808
        %v3042 = vunpack.c.0.s8 %v3041
        %v3043 = vlaneseq
        %v3044 = vshrl.u32 %v3043, 7
        %v3045 = vsub.s32 %v3042, %v3044
        %v3046 = vrot.slane %v3038, %v3045
        %v3048 = vunpack.c.l.s4 1983009808
        %v3049 = vunpack.c.0.s8 %v3048
        %v3050 = vlaneseq
        %v3051 = vshrl.u32 %v3050, 7
        %v3052 = vsub.s32 %v3049, %v3051
        %v3053 = vrot.slane %v3039, %v3052
        %v3054 = vcombine.low %v2649, %v2651
        %v3055 = vcombine.high %v2649, %v2651
        %v3057 = vunpack.c.l.s4 1983009808
        %v3058 = vunpack.c.0.s8 %v3057
        %v3059 = vlaneseq
        %v3060 = vshrl.u32 %v3059, 7
        %v3061 = vsub.s32 %v3058, %v3060
        %v3062 = vrot.slane %v3054, %v3061
        %v3064 = vunpack.c.l.s4 1983009808
        %v3065 = vunpack.c.0.s8 %v3064
        %v3066 = vlaneseq
        %v3067 = vshrl.u32 %v3066, 7
        %v3068 = vsub.s32 %v3065, %v3067
        %v3069 = vrot.slane %v3055, %v3068
        %v3070 = vcombine.low %v3014, %v3030
        %v3071 = vcombine.high %v3014, %v3030
        %v3073 = vunpack.c.l.s4 1934713408
        %v3074 = vunpack.c.0.s8 %v3073
        %v3075 = vlaneseq
        %v3076 = vshrl.u32 %v3075, 7
        %v3077 = vsub.s32 %v3074, %v3076
        %v3078 = vrot.slane %v3070, %v3077
        %v3080 = vunpack.c.l.s4 1934713408
        %v3081 = vunpack.c.0.s8 %v3080
        %v3082 = vlaneseq
        %v3083 = vshrl.u32 %v3082, 7
        %v3084 = vsub.s32 %v3081, %v3083
        %v3085 = vrot.slane %v3071, %v3084
        %v3086 = vcombine.low %v3021, %v3037
        %v3088 = vunpack.c.l.s4 1934713408
        %v3089 = vunpack.c.0.s8 %v3088
        %v3090 = vlaneseq
        %v3091 = vshrl.u32 %v3090, 7
        %v3092 = vsub.s32 %v3089, %v3091
        %v3093 = vrot.slane %v3086, %v3092
        %v3094 = vcombine.low %v3046, %v3062
        %v3095 = vcombine.high %v3046, %v3062
        %v3097 = vunpack.c.l.s4 1934713408
        %v3098 = vunpack.c.0.s8 %v3097
        %v3099 = vlaneseq
        %v3100 = vshrl.u32 %v3099, 7
        %v3101 = vsub.s32 %v3098, %v3100
        %v3102 = vrot.slane %v3094, %v3101
        %v3104 = vunpack.c.l.s4 1934713408
        %v3105 = vunpack.c.0.s8 %v3104
        %v3106 = vlaneseq
        %v3107 = vshrl.u32 %v3106, 7
        %v3108 = vsub.s32 %v3105, %v3107
        %v3109 = vrot.slane %v3095, %v3108
        %v3110 = vcombine.low %v3053, %v3069
        %v3112 = vunpack.c.l.s4 1934713408
        %v3113 = vunpack.c.0.s8 %v3112
        %v3114 = vlaneseq
        %v3115 = vshrl.u32 %v3114, 7
        %v3116 = vsub.s32 %v3113, %v3115
        %v3117 = vrot.slane %v3110, %v3116
        %v3118 = vcombine.low %v3078, %v3102
        %v3119 = vcombine.high %v3078, %v3102
        %v3120 = vcombine.low %v3085, %v3109
        %v3121 = vcombine.high %v3085, %v3109
        %v3122 = vcombine.low %v3093, %v3117
        %v3123 = vcombine.high %v3093, %v3117
        %3128 = vrot.lane.b32.xlu0 %v2765, 8
        %v3129 = vpop.permute.xlu0 %3128
        %3130 = vrot.lane.b32.xlu0 %v2883, 8
        %v3131 = vpop.permute.xlu0 %3130
        %3132 = vrot.lane.b32.xlu0 %v3001, 8
        %v3133 = vpop.permute.xlu0 %3132
        %3134 = vrot.lane.b32.xlu0 %v3119, 8
        %v3135 = vpop.permute.xlu0 %3134
        %3144 = vrot.lane.b32.xlu0 %v2766, 16
        %v3145 = vpop.permute.xlu0 %3144
        %3146 = vrot.lane.b32.xlu0 %v2884, 16
        %v3147 = vpop.permute.xlu0 %3146
        %3148 = vrot.lane.b32.xlu0 %v3002, 16
        %v3149 = vpop.permute.xlu0 %3148
        %3150 = vrot.lane.b32.xlu0 %v3120, 16
        %v3151 = vpop.permute.xlu0 %3150
        %3160 = vrot.lane.b32.xlu0 %v2767, 24
        %v3161 = vpop.permute.xlu0 %3160
        %3162 = vrot.lane.b32.xlu0 %v2885, 24
        %v3163 = vpop.permute.xlu0 %3162
        %3164 = vrot.lane.b32.xlu0 %v3003, 24
        %v3165 = vpop.permute.xlu0 %3164
        %3166 = vrot.lane.b32.xlu0 %v3121, 24
        %v3167 = vpop.permute.xlu0 %3166
        %3176 = vrot.lane.b32.xlu0 %v2768, 32
        %v3177 = vpop.permute.xlu0 %3176
        %3178 = vrot.lane.b32.xlu0 %v2886, 32
        %v3179 = vpop.permute.xlu0 %3178
        %3180 = vrot.lane.b32.xlu0 %v3004, 32
        %v3181 = vpop.permute.xlu0 %3180
        %3182 = vrot.lane.b32.xlu0 %v3122, 32
        %v3183 = vpop.permute.xlu0 %3182
        %3192 = vrot.lane.b32.xlu0 %v2769, 40
        %v3193 = vpop.permute.xlu0 %3192
        %3194 = vrot.lane.b32.xlu0 %v2887, 40
        %v3195 = vpop.permute.xlu0 %3194
        %3196 = vrot.lane.b32.xlu0 %v3005, 40
        %v3197 = vpop.permute.xlu0 %3196
        %3198 = vrot.lane.b32.xlu0 %v3123, 40
        %v3199 = vpop.permute.xlu0 %3198
        %v3204 = vsel %vm554, %v2764, %v3129
        %v3205 = vsel %vm554, %v2882, %v3131
        %v3206 = vsel %vm554, %v3000, %v3133
        %v3207 = vsel %vm554, %v3118, %v3135
        %vm3208 = vcmask 130048
        %v3209 = vsel %vm3208, %v3204, %v3145
        %v3210 = vsel %vm3208, %v3205, %v3147
        %v3211 = vsel %vm3208, %v3206, %v3149
        %v3212 = vsel %vm3208, %v3207, %v3151
        %vm3213 = vcmask 195584
        %v3214 = vsel %vm3213, %v3209, %v3161
        %v3215 = vsel %vm3213, %v3210, %v3163
        %v3216 = vsel %vm3213, %v3211, %v3165
        %v3217 = vsel %vm3213, %v3212, %v3167
        %v3218 = vsel %vm933, %v3214, %v3177
        %v3219 = vsel %vm933, %v3215, %v3179
        %v3220 = vsel %vm933, %v3216, %v3181
        %v3221 = vsel %vm933, %v3217, %v3183
        %vm3222 = vcmask 326656
        %v3223 = vsel %vm3222, %v3218, %v3193
        %v3224 = vsel %vm3222, %v3219, %v3195
        %v3225 = vsel %vm3222, %v3220, %v3197
        %v3226 = vsel %vm3222, %v3221, %v3199
        %v3227 = vpack.c.bf16 %v3224, %v3223
        %v3228 = vpack.c.bf16 %v3226, %v3225
        %v3229 = vld [vmem:[#allocation7] sm:$0xf]
        %v3230 = vld [vmem:[#allocation7 + $0x4] sm:$0xf]
        %v3231 = vld [vmem:[#allocation7 + $0x8] sm:$0xf]
        %v3232 = vld [vmem:[#allocation7 + $0xc] sm:$0xf]
        %v3233 = vld [vmem:[#allocation7 + $0x10] sm:$0xf]
        %v3234 = vld [vmem:[#allocation7 + $0x14] sm:$0xf]
        %v3235 = vld [vmem:[%s3] sm:$0x1]
        %v3237 = vlaneseq
        %v3238 = vshrl.u32 %v3237, 7
        %v3239 = vsub.s32 0, %v3238
        %v3240 = vrot.slane %v3235, %v3239
        %v3248 = vunpack.c.l.b16 %v3229
        %v3249 = vunpack.c.l.b16 %v3230
        %v3250 = vunpack.c.l.b16 %v3231
        %v3251 = vunpack.c.l.b16 %v3232
        %v3252 = vunpack.c.l.b16 %v3233
        %v3253 = vunpack.c.l.b16 %v3234
        %v3254 = vpack.c.b16 %v3249, %v3248
        %v3255 = vpack.c.b16 %v3251, %v3250
        %v3256 = vpack.c.b16 %v3253, %v3252
        %v3261 = vsel %vm326, %v3227, 0
        %v3264 = vsel %vm326, %v3228, 0
        %3266 = vmatprep.subr.bf16.mxu0 0
        %3267 = vmatpush1.bf16.msra.mxu0 %v3254
        %3268 = vmatprep.subr.bf16.mxu0 0
        %3269 = vmatpush1.bf16.msra.mxu0 %v3255
        %3270 = vmatprep.subr.bf16.mxu0 0
        %3271 = vmatpush1.bf16.msra.mxu0 %v3256
        %3272 = vmatprep.subr.bf16.mxu0 0
        %3273 = vmatpush1.bf16.msra.mxu0 0
        %3274 = vmatprep.subr.bf16.mxu0 0
        %3275 = vmatpush1.bf16.msra.mxu0 0
        %3276 = vmatprep.subr.bf16.mxu0 0
        %3277 = vmatpush1.bf16.msra.mxu0 0
        %3278 = vmatprep.subr.bf16.mxu0 0
        %3279 = vmatpush1.bf16.msra.mxu0 0
        %3280 = vmatprep.subr.bf16.mxu0 0
        %3281 = vmatpush1.bf16.msra.mxu0 0
        %3282 = vmatprep.subr.bf16.mxu0 0
        %3283 = vmatpush1.bf16.msra.mxu0 0
        %3284 = vmatprep.subr.bf16.mxu0 0
        %3285 = vmatpush1.bf16.msra.mxu0 0
        %3286 = vmatprep.subr.bf16.mxu0 0
        %3287 = vmatpush1.bf16.msra.mxu0 0
        %3288 = vmatprep.subr.bf16.mxu0 0
        %3289 = vmatpush1.bf16.msra.mxu0 0
        %3290 = vmatprep.subr.bf16.mxu0 0
        %3291 = vmatpush1.bf16.msra.mxu0 0
        %3292 = vmatprep.subr.bf16.mxu0 0
        %3293 = vmatpush1.bf16.msra.mxu0 0
        %3294 = vmatprep.subr.bf16.mxu0 0
        %3295 = vmatpush1.bf16.msra.mxu0 0
        %3296 = vmatprep.subr.bf16.mxu0 0
        %3297 = vmatpush1.bf16.msra.mxu0 0
        %3298 = vmatprep.mubr.bf16.mxu0 0
        %3299 = vmatmul.mubr.bf16.gmra.mrb[0].mxu0 %v3261
        %v3300 = vpop.f32.mrb[0].mxu0
        %v3301 = vadd.f32 %v3240, %v3300
        %v3302 = vpop.f32.mrb[0].mxu0
        %v3303 = vpop.f32.mrb[0].mxu0
        %v3304 = vadd.f32 %v3240, %v3303
        %v3305 = vpop.f32.mrb[0].mxu0
        %3306 = vmatprep.mubr.bf16.mxu0 0
        %3307 = vmatmul.mubr.bf16.gmra.mrb[0].mxu0 %v3264
        %v3308 = vpop.f32.mrb[0].mxu0
        %v3309 = vadd.f32 %v3240, %v3308
        %v3310 = vpop.f32.mrb[0].mxu0
        %v3311 = vpop.f32.mrb[0].mxu0
        %v3312 = vadd.f32 %v3240, %v3311
        %v3313 = vpop.f32.mrb[0].mxu0
        %3314 = vdwg.mxu0
        %3315 = vst.msk [vmem:[%s275] sm:$0xff] %vm326, %v3301
        %3316 = vst.msk [vmem:[%s275 + $0x8] sm:$0xff] %vm326, %v3304
        %3317 = vst.msk [vmem:[%s275 + $0x10] sm:$0xff] %vm326, %v3309
        %3318 = vst.msk [vmem:[%s275 + $0x18] sm:$0xff] %vm326, %v3312
        %s3319 = sand.u32 %s124, 1
        %s3320 = scalar_lea.sflag [#allocation4], %s3319
        %s3321 = sand.u32 %s124, 1
        %s3322 = smul.addr %s3321, 32
        %s3323 = scalar_lea.vmem [#allocation8], %s3322
        %s3324 = sand.u32 %s150, 1
        %s3325 = scalar_lea.sflag [#allocation10], %s3324
        %s3326 = sand.u32 %s150, 1
        %s3327 = smul.addr %s3326, 192
        %s3328 = scalar_lea.vmem [#allocation9], %s3327
        // Predicated region
        $region49: #{tpu_custom_call.1} parent=35 // pred_check
          %p3329 = pneg %p134
        $region50: #{tpu_custom_call.1} parent=35 // pred_check_branch
          %3331 = sbr.rel (%p3329) target = $region52
        $region51: #{tpu_custom_call.1} parent=35 // pred_region
          %s3333 = ssub.s32 512, 512
          %3334 = vsyncadd %s3320, %s3333
          %s3335 = smul.addr %s27, 4
          %s3336 = smul.addr %s3335, 128
          %s3337 = scalar_lea.hbm %s4, %s3336
          %s3338 = sshll.u32 %s3323, 4
          %s3339 = int_to_ptr.vmem [resolvable:$true] %s3338
          %3344 = dma.vmem_to_hbm [thread:$0]  %s3339, 512, %s3337, %s3320, 128, 128, 8
        $region52: #{tpu_custom_call.1} parent=35 // pred_fallthru
          _
        // Predicated region
        $region53: #{tpu_custom_call.1} parent=35 // pred_check
          %p3345 = pneg %p160
        $region54: #{tpu_custom_call.1} parent=35 // pred_check_branch
          %3347 = sbr.rel (%p3345) target = $region56
        $region55: #{tpu_custom_call.1} parent=35 // pred_region
          %s3349 = ssub.s32 3072, 3072
          %3350 = vsyncadd %s3325, %s3349
          %s3351 = smul.addr %s27, 24
          %s3352 = smul.addr %s3351, 128
          %s3353 = scalar_lea.hbm %s5, %s3352
          %s3354 = sshll.u32 %s3328, 4
          %s3355 = int_to_ptr.vmem [resolvable:$true] %s3354
          %3360 = dma.vmem_to_hbm [thread:$0]  %s3355, 3072, %s3353, %s3325, 128, 128, 8
        $region56: #{tpu_custom_call.1} parent=35 // pred_fallthru
          _
      $region36: #{tpu_custom_call.1} parent=5 // pred_fallthru
        _
      %p3361 = scmp.le.s32.totalorder 2, %s22
      // Predicated region
      $region57: #{tpu_custom_call.1} parent=5 // pred_check
        %p3362 = pneg %p3361
      $region58: #{tpu_custom_call.1} parent=5 // pred_check_branch
        %3364 = sbr.rel (%p3362) target = $region60
      $region59: #{tpu_custom_call.1} parent=5 // pred_region
        %s3365 = ssub.s32 %s22, 2
        // Predicated region
        $region61: #{tpu_custom_call.1} parent=59 // pred_check
          %p3366 = pneg %p140
        $region62: #{tpu_custom_call.1} parent=59 // pred_check_branch
          %3368 = sbr.rel (%p3366) target = $region64
        $region63: #{tpu_custom_call.1} parent=59 // pred_region
          %s3369 = sand.u32 %s125, 1
          %s3370 = scalar_lea.sflag [#allocation4], %s3369
          %s3371 = sand.u32 %s125, 1
          %s3372 = smul.addr %s3371, 32
          %s3373 = scalar_lea.vmem [#allocation8], %s3372
          %3374 = dma.done %s3370, 512
        $region64: #{tpu_custom_call.1} parent=59 // pred_fallthru
          _
        // Predicated region
        $region65: #{tpu_custom_call.1} parent=59 // pred_check
          %p3375 = pneg %p166
        $region66: #{tpu_custom_call.1} parent=59 // pred_check_branch
          %3377 = sbr.rel (%p3375) target = $region68
        $region67: #{tpu_custom_call.1} parent=59 // pred_region
          %s3378 = sand.u32 %s151, 1
          %s3379 = scalar_lea.sflag [#allocation10], %s3378
          %s3380 = sand.u32 %s151, 1
          %s3381 = smul.addr %s3380, 192
          %s3382 = scalar_lea.vmem [#allocation9], %s3381
          %3383 = dma.done %s3379, 3072
        $region68: #{tpu_custom_call.1} parent=59 // pred_fallthru
          _
      $region60: #{tpu_custom_call.1} parent=5 // pred_fallthru
        _
    $region6: #{tpu_custom_call.1} parent=1 // loop_footer
      %s26 = sadd.s32 1, %s22
    $region7: #{tpu_custom_call.1} parent=1 // loop_footer_branch
      %21 = sbr.rel target = $region3
    $region8: #{tpu_custom_call.1} parent=1 // loop_exit
      _
    %3384 = vsyncpa [#allocation3], 1
    %s3385 = scalar_lea.sflag [#allocation3], 1
    %3386 = vsyncpa %s3385, 1
    %3387 = vsyncpa [#allocation6], 1
    %3388 = vsyncpa [#allocation4], 1
    %s3389 = scalar_lea.sflag [#allocation4], 1
    %3390 = vsyncpa %s3389, 1
    %3391 = vsyncpa [#allocation10], 1
    %s3392 = scalar_lea.sflag [#allocation10], 1
    %3393 = vsyncpa %s3392, 1

</llo_original>
